<compile_context>
chip_gen: v6e
topology: v6e:2x2x1
jax: 0.10.0
libtpu: 0.0.40
codegen_flags: <defaults>
</compile_context>

<pallas_src>
import functools

import numpy as np
import jax
import jax.numpy as jnp
from jax.experimental import pallas as pl
from jax.experimental.pallas import tpu as pltpu


def _round_up(n, m):
    return (n + m - 1) // m * m


def _conv_toeplitz(wk, H, W):
    """Dense (S, S) matrix T such that  (conv_kxk_same(img, wk)).flatten()
    == img.flatten() @ T , with zero-padding boundary handling folded in."""
    wk = np.asarray(wk, dtype=np.float32)
    kh, kw = wk.shape
    ph, pw = kh // 2, kw // 2
    S = H * W
    T = np.zeros((S, S), dtype=np.float32)
    for ho in range(H):
        for wo in range(W):
            so = ho * W + wo
            for u in range(kh):
                for v in range(kw):
                    hi, wi = ho + u - ph, wo + v - pw
                    if 0 <= hi < H and 0 <= wi < W:
                        T[hi * W + wi, so] += float(wk[u, v])
    return jnp.asarray(T)


def _build_pool_addmasks(H, W):
    """f32[8, S] additive masks for the 8 non-center taps of a 3x3 max-pool:
    0.0 where the shifted position is in-bounds, -3e38 where it is not."""
    S = H * W
    hh = np.arange(S, dtype=np.int64) // W
    ww = np.arange(S, dtype=np.int64) % W
    rows = []
    for du in (-1, 0, 1):
        for dv in (-1, 0, 1):
            if du == 0 and dv == 0:
                continue
            ok = (hh + du >= 0) & (hh + du < H) & (ww + dv >= 0) & (ww + dv < W)
            rows.append(np.where(ok, 0.0, -3e38).astype(np.float32))
    return jnp.asarray(np.stack(rows))              # (8, S)


# ---------------------------------------------------------------------------
# Fused Pallas kernel: inception block + flatten + Linear + Sigmoid
# ---------------------------------------------------------------------------
def inception_head_kernel(p_ref, x_ref, t3_ref, t5_ref, am_ref, w_ref, b_ref,
                          out_ref, *, H, W):
    """One grid step == Bt images.

    p_ref  : SMEM f32[10]     folded conv+BN scalars (see make_params)
    x_ref  : VMEM f32[Bt, S]  flattened images (S = H*W on the lane axis)
    t3_ref : VMEM f32[S, S]   Toeplitz matrix of the (BN-folded) 3x3 conv
    t5_ref : VMEM f32[S, S]   Toeplitz matrix of the (BN-folded) 5x5 conv
    am_ref : VMEM f32[8, S]   additive boundary masks for the max-pool taps
    w_ref  : VMEM f32[4, S]   linear weight split per concatenated channel
    b_ref  : SMEM f32[1]      linear bias
    out_ref: VMEM f32[Bt, 1]  sigmoid(logit) per image
    """
    S = H * W
    x = x_ref[...]                                            # (Bt, S)

    # Hoist the SMEM scalars once.
    p = [p_ref[i] for i in range(10)]
    relu = lambda t: jnp.maximum(t, jnp.float32(0.0))

    # ---- branch1x1: conv1x1 -> BN -> ReLU (BN folded) -----------------------
    o1 = relu(p[0] * x + p[1])

    # ---- branch3x3: conv1x1+BN+ReLU -> conv3x3(pad=1)+BN+ReLU (MXU) ---------
    h3 = relu(p[2] * x + p[3])
    o3 = relu(jnp.dot(h3, t3_ref[...], preferred_element_type=jnp.float32)
              + p[4])

    # ---- branch5x5: conv1x1+BN+ReLU -> conv5x5(pad=2)+BN+ReLU (MXU) ---------
    h5 = relu(p[5] * x + p[6])
    o5 = relu(jnp.dot(h5, t5_ref[...], preferred_element_type=jnp.float32)
              + p[7])

    # ---- branch_pool: maxpool3x3(s=1,p=1) -> conv1x1+BN+ReLU ----------------
    # Rolls run on the XLU; additive masks make each tap add+max (2 VALU ops).
    mp = x                                                    # center tap, always valid
    k = 0
    for du in (-1, 0, 1):
        for dv in (-1, 0, 1):
            if du == 0 and dv == 0:
                continue
            off = du * W + dv
            shifted = pltpu.roll(x, (-off) % S, axis=1)       # x[b, p + off]
            mp = jnp.maximum(mp, shifted + am_ref[k, :])
            k += 1
    op = relu(p[8] * mp + p[9])

    # ---- fused head: cat(dim=1) + flatten + Linear(4*S, 1) + Sigmoid --------
    # torch flatten order is channel-major: feature index = c*S + (h*W + w).
    tot = (o1 * w_ref[0, :] + o3 * w_ref[1, :]
           + o5 * w_ref[2, :] + op * w_ref[3, :])             # (Bt, S)
    z = jnp.sum(tot, axis=1, keepdims=True) + b_ref[0]        # (Bt, 1)
    ez = jnp.exp(-jnp.abs(z))                                 # overflow-safe sigmoid
    out_ref[...] = jnp.where(z >= 0, 1.0 / (1.0 + ez), ez / (1.0 + ez))


# ---------------------------------------------------------------------------
# Wrapper
# ---------------------------------------------------------------------------
def inception_forward(x, scalars, W3, W5, lin_w, lin_b, *, block_b=128):
    """x: (B, 1, H, W) f32.  scalars: (10,) folded conv/BN scalars.
    W3/W5: (3,3)/(5,5) BN-folded conv weights.  lin_w: (4, H*W).  lin_b: (1,)."""
    B, C, H, W = x.shape
    assert C == 1, "module is defined with in_channels=1"
    S = H * W

    T3 = _conv_toeplitz(W3, H, W)                 # (S, S) masked conv as matmul
    T5 = _conv_toeplitz(W5, H, W)                 # (S, S)
    addm = _build_pool_addmasks(H, W)             # (8, S)

    # NCHW row-major -> per-image flatten is a free (bitcast) reshape.
    x2 = x.reshape(B, S)
    # Bt=128 keeps >=2 grid steps at B=256 (both v7x TCs busy); raise block_b
    # to 256 for very large B on v6e to fill the 256-wide MXU.
    Bt = min(block_b, _round_up(B, 8))
    Bpad = _round_up(B, Bt)
    if Bpad != B:
        x2 = jnp.pad(x2, ((0, Bpad - B), (0, 0)))

    out = pl.pallas_call(
        functools.partial(inception_head_kernel, H=H, W=W),
        out_shape=jax.ShapeDtypeStruct((Bpad, 1), jnp.float32),
        grid=(Bpad // Bt,),
        in_specs=[
            pl.BlockSpec(memory_space=pltpu.MemorySpace.SMEM),   # folded conv/BN scalars
            pl.BlockSpec((Bt, S), lambda b: (b, 0)),             # image batch tile
            pl.BlockSpec((S, S), lambda b: (0, 0)),              # Toeplitz 3x3 (resident)
            pl.BlockSpec((S, S), lambda b: (0, 0)),              # Toeplitz 5x5 (resident)
            pl.BlockSpec((8, S), lambda b: (0, 0)),              # pool additive masks
            pl.BlockSpec((4, S), lambda b: (0, 0)),              # linear weight (per channel)
            pl.BlockSpec(memory_space=pltpu.MemorySpace.SMEM),   # linear bias
        ],
        out_specs=pl.BlockSpec((Bt, 1), lambda b: (b, 0)),
        compiler_params=pltpu.CompilerParams(
            dimension_semantics=("parallel",)),
    )(scalars, x2, T3, T5, addm, lin_w, lin_b)
    return out[:B]


# ---------------------------------------------------------------------------
# Pure-JAX reference (independent code path: explicit padding + slicing)
# ---------------------------------------------------------------------------
def reference_forward(x, scalars, W3, W5, lin_w, lin_b):
    B, C, H, W = x.shape
    p = scalars
    relu = lambda t: jnp.maximum(t, 0.0)
    img = x[:, 0]                                             # (B, H, W)

    o1 = relu(p[0] * img + p[1])

    h3 = relu(p[2] * img + p[3])
    h3p = jnp.pad(h3, ((0, 0), (1, 1), (1, 1)))
    acc3 = jnp.zeros_like(img)
    for u in range(3):
        for v in range(3):
            acc3 = acc3 + W3[u, v] * h3p[:, u:u + H, v:v + W]
    o3 = relu(acc3 + p[4])

    h5 = relu(p[5] * img + p[6])
    h5p = jnp.pad(h5, ((0, 0), (2, 2), (2, 2)))
    acc5 = jnp.zeros_like(img)
    for u in range(5):
        for v in range(5):
            acc5 = acc5 + W5[u, v] * h5p[:, u:u + H, v:v + W]
    o5 = relu(acc5 + p[7])

    xneg = jnp.pad(img, ((0, 0), (1, 1), (1, 1)), constant_values=-jnp.inf)
    mp = jnp.full_like(img, -jnp.inf)
    for u in range(3):
        for v in range(3):
            mp = jnp.maximum(mp, xneg[:, u:u + H, v:v + W])
    op = relu(p[8] * mp + p[9])

    feat = jnp.concatenate([o1.reshape(B, -1), o3.reshape(B, -1),
                            o5.reshape(B, -1), op.reshape(B, -1)], axis=1)
    lin_w_flat = lin_w.reshape(1, -1)                        # channel-major order
    z = jnp.sum(feat * lin_w_flat, axis=1, keepdims=True) + lin_b[0]
    return jax.nn.sigmoid(z)


# ---------------------------------------------------------------------------
# Deterministic parameter construction (Conv + eval-mode BN folded together)
# ---------------------------------------------------------------------------
def _conv_bn_fold(key, kh, kw):
    """Conv2d(1, 1, (kh, kw)) followed by BatchNorm2d(1) in eval mode,
    folded into an effective (kh, kw) weight and a scalar bias."""
    kw_, kb, kg, kbe, km, kv = jax.random.split(key, 6)
    bound = 1.0 / float(kh * kw) ** 0.5
    w = jax.random.uniform(kw_, (kh, kw), jnp.float32, -bound, bound)
    b = jax.random.uniform(kb, (), jnp.float32, -bound, bound)
    gamma = jax.random.uniform(kg, (), jnp.float32, 0.5, 1.5)
    beta = 0.1 * jax.random.normal(kbe, (), jnp.float32)
    mean = 0.1 * jax.random.normal(km, (), jnp.float32)
    var = jax.random.uniform(kv, (), jnp.float32, 0.5, 1.5)
    scale = gamma / jnp.sqrt(var + 1e-5)
    return w * scale, (b - mean) * scale + beta


def make_params(key):
    k = jax.random.split(key, 6)
    w1, b1 = _conv_bn_fold(k[0], 1, 1)    # branch1x1
    w3a, b3a = _conv_bn_fold(k[1], 1, 1)  # branch3x3: 1x1 reduce
    W3, b3 = _conv_bn_fold(k[2], 3, 3)    # branch3x3: 3x3 conv
    w5a, b5a = _conv_bn_fold(k[3], 1, 1)  # branch5x5: 1x1 reduce
    W5, b5 = _conv_bn_fold(k[4], 5, 5)    # branch5x5: 5x5 conv
    wp, bp = _conv_bn_fold(k[5], 1, 1)    # branch_pool: 1x1 conv
    scalars = jnp.stack([w1[0, 0], b1, w3a[0, 0], b3a, b3,
                         w5a[0, 0], b5a, b5, wp[0, 0], bp]).astype(jnp.float32)
    return scalars, W3, W5


# ---------------------------------------------------------------------------
if __name__ == "__main__":
    B, C, H, W = 256, 1, 16, 16          # 2 batch tiles of 128 -> grid=(2,)
    key = jax.random.PRNGKey(0)
    kx, kp, klw, klb = jax.random.split(key, 4)

    x = jax.random.normal(kx, (B, C, H, W), jnp.float32)
    scalars, W3, W5 = make_params(kp)

    S = H * W
    F = 4 * S
    bound = 1.0 / float(F) ** 0.5
    lin_w = jax.random.uniform(klw, (4, S), jnp.float32, -bound, bound)
    lin_b = jax.random.uniform(klb, (1,), jnp.float32, -bound, bound)

    out = jax.block_until_ready(
        inception_forward(x, scalars, W3, W5, lin_w, lin_b))
    ref = jax.block_until_ready(
        reference_forward(x, scalars, W3, W5, lin_w, lin_b))

    assert out.shape == (B, 1) and out.dtype == jnp.float32
    assert bool(jnp.all(jnp.isfinite(out)))
    assert bool(jnp.all((out > 0.0) & (out < 1.0)))          # sigmoid range
    assert bool(jnp.allclose(out, ref, atol=1e-4, rtol=1e-4))
    print("KERNEL_OK")
</pallas_src>

<mosaic_0001>
module attributes {stable_mosaic.version = 11 : i64} {
  func.func @inception_head_kernel(%arg0: i32, %arg1: memref<10xf32, #tpu.memory_space<smem>>, %arg2: memref<128x256xf32, #tpu.memory_space<vmem>>, %arg3: memref<256x256xf32, #tpu.memory_space<vmem>>, %arg4: memref<256x256xf32, #tpu.memory_space<vmem>>, %arg5: memref<8x256xf32, #tpu.memory_space<vmem>>, %arg6: memref<4x256xf32, #tpu.memory_space<vmem>>, %arg7: memref<1xf32, #tpu.memory_space<smem>>, %arg8: memref<128x1xf32, #tpu.memory_space<vmem>>) attributes {dimension_semantics = [#tpu.dimension_semantics<parallel>], iteration_bounds = array<i64: 2>, scalar_prefetch = 0 : i64, scratch_operands = 0 : i64, tpu.core_type = #tpu.core_type<tc>, window_params = [{transform_indices = @transform_0, window_bounds = array<i64: 10>}, {transform_indices = @transform_1, window_bounds = array<i64: 128, 256>}, {pipeline_mode = #tpu.pipeline_mode<synchronous>, transform_indices = @transform_2, window_bounds = array<i64: 256, 256>}, {pipeline_mode = #tpu.pipeline_mode<synchronous>, transform_indices = @transform_3, window_bounds = array<i64: 256, 256>}, {pipeline_mode = #tpu.pipeline_mode<synchronous>, transform_indices = @transform_4, window_bounds = array<i64: 8, 256>}, {pipeline_mode = #tpu.pipeline_mode<synchronous>, transform_indices = @transform_5, window_bounds = array<i64: 4, 256>}, {transform_indices = @transform_6, window_bounds = array<i64: 1>}, {transform_indices = @transform_7, window_bounds = array<i64: 128, 1>}]} {
    %c0 = arith.constant 0 : index
    %c0_0 = arith.constant 0 : index
    %0 = vector.load %arg2[%c0, %c0_0] : memref<128x256xf32, #tpu.memory_space<vmem>>, vector<128x256xf32>
    %c0_1 = arith.constant 0 : index
    %1 = memref.load %arg1[%c0_1] : memref<10xf32, #tpu.memory_space<smem>>
    %c1 = arith.constant 1 : index
    %2 = memref.load %arg1[%c1] : memref<10xf32, #tpu.memory_space<smem>>
    %c2 = arith.constant 2 : index
    %3 = memref.load %arg1[%c2] : memref<10xf32, #tpu.memory_space<smem>>
    %c3 = arith.constant 3 : index
    %4 = memref.load %arg1[%c3] : memref<10xf32, #tpu.memory_space<smem>>
    %c4 = arith.constant 4 : index
    %5 = memref.load %arg1[%c4] : memref<10xf32, #tpu.memory_space<smem>>
    %c5 = arith.constant 5 : index
    %6 = memref.load %arg1[%c5] : memref<10xf32, #tpu.memory_space<smem>>
    %c6 = arith.constant 6 : index
    %7 = memref.load %arg1[%c6] : memref<10xf32, #tpu.memory_space<smem>>
    %c7 = arith.constant 7 : index
    %8 = memref.load %arg1[%c7] : memref<10xf32, #tpu.memory_space<smem>>
    %c8 = arith.constant 8 : index
    %9 = memref.load %arg1[%c8] : memref<10xf32, #tpu.memory_space<smem>>
    %c9 = arith.constant 9 : index
    %10 = memref.load %arg1[%c9] : memref<10xf32, #tpu.memory_space<smem>>
    %11 = vector.broadcast %1 : f32 to vector<128x256xf32>
    %12 = arith.mulf %11, %0 : vector<128x256xf32>
    %13 = vector.broadcast %2 : f32 to vector<128x256xf32>
    %14 = arith.addf %12, %13 : vector<128x256xf32>
    %cst = arith.constant 0.000000e+00 : f32
    %15 = vector.broadcast %cst : f32 to vector<128x256xf32>
    %16 = arith.maximumf %14, %15 : vector<128x256xf32>
    %17 = vector.broadcast %3 : f32 to vector<128x256xf32>
    %18 = arith.mulf %17, %0 : vector<128x256xf32>
    %19 = vector.broadcast %4 : f32 to vector<128x256xf32>
    %20 = arith.addf %18, %19 : vector<128x256xf32>
    %cst_2 = arith.constant 0.000000e+00 : f32
    %21 = vector.broadcast %cst_2 : f32 to vector<128x256xf32>
    %22 = arith.maximumf %20, %21 : vector<128x256xf32>
    %c0_3 = arith.constant 0 : index
    %c0_4 = arith.constant 0 : index
    %23 = vector.load %arg3[%c0_3, %c0_4] : memref<256x256xf32, #tpu.memory_space<vmem>>, vector<256x256xf32>
    %cst_5 = arith.constant dense<0.000000e+00> : vector<128x256xf32>
    %24 = tpu.matmul %22, %23, %cst_5 {dimension_numbers = #tpu.dot_dimension_numbers<[1], [0], [0], [1], [0, 0, 1, 1], [], []>} : vector<128x256xf32>, vector<256x256xf32>, vector<128x256xf32> -> vector<128x256xf32>
    %25 = vector.broadcast %5 : f32 to vector<128x256xf32>
    %26 = arith.addf %24, %25 : vector<128x256xf32>
    %cst_6 = arith.constant 0.000000e+00 : f32
    %27 = vector.broadcast %cst_6 : f32 to vector<128x256xf32>
    %28 = arith.maximumf %26, %27 : vector<128x256xf32>
    %29 = vector.broadcast %6 : f32 to vector<128x256xf32>
    %30 = arith.mulf %29, %0 : vector<128x256xf32>
    %31 = vector.broadcast %7 : f32 to vector<128x256xf32>
    %32 = arith.addf %30, %31 : vector<128x256xf32>
    %cst_7 = arith.constant 0.000000e+00 : f32
    %33 = vector.broadcast %cst_7 : f32 to vector<128x256xf32>
    %34 = arith.maximumf %32, %33 : vector<128x256xf32>
    %c0_8 = arith.constant 0 : index
    %c0_9 = arith.constant 0 : index
    %35 = vector.load %arg4[%c0_8, %c0_9] : memref<256x256xf32, #tpu.memory_space<vmem>>, vector<256x256xf32>
    %cst_10 = arith.constant dense<0.000000e+00> : vector<128x256xf32>
    %36 = tpu.matmul %34, %35, %cst_10 {dimension_numbers = #tpu.dot_dimension_numbers<[1], [0], [0], [1], [0, 0, 1, 1], [], []>} : vector<128x256xf32>, vector<256x256xf32>, vector<128x256xf32> -> vector<128x256xf32>
    %37 = vector.broadcast %8 : f32 to vector<128x256xf32>
    %38 = arith.addf %36, %37 : vector<128x256xf32>
    %cst_11 = arith.constant 0.000000e+00 : f32
    %39 = vector.broadcast %cst_11 : f32 to vector<128x256xf32>
    %40 = arith.maximumf %38, %39 : vector<128x256xf32>
    %c17_i32 = arith.constant 17 : i32
    %41 = tpu.dynamic_rotate %0 by %c17_i32 dim 1 : vector<128x256xf32>, i32 -> vector<128x256xf32>
    %c0_12 = arith.constant 0 : index
    %c0_13 = arith.constant 0 : index
    %42 = vector.load %arg5[%c0_12, %c0_13] : memref<8x256xf32, #tpu.memory_space<vmem>>, vector<1x256xf32>
    %43 = vector.shape_cast %42 : vector<1x256xf32> to vector<256xf32>
    %44 = vector.shape_cast %43 : vector<256xf32> to vector<1x256xf32>
    %45 = vector.broadcast %44 : vector<1x256xf32> to vector<128x256xf32>
    %46 = arith.addf %41, %45 : vector<128x256xf32>
    %47 = arith.maximumf %0, %46 : vector<128x256xf32>
    %c16_i32 = arith.constant 16 : i32
    %48 = tpu.dynamic_rotate %0 by %c16_i32 dim 1 : vector<128x256xf32>, i32 -> vector<128x256xf32>
    %c1_14 = arith.constant 1 : index
    %c0_15 = arith.constant 0 : index
    %49 = vector.load %arg5[%c1_14, %c0_15] : memref<8x256xf32, #tpu.memory_space<vmem>>, vector<1x256xf32>
    %50 = vector.shape_cast %49 : vector<1x256xf32> to vector<256xf32>
    %51 = vector.shape_cast %50 : vector<256xf32> to vector<1x256xf32>
    %52 = vector.broadcast %51 : vector<1x256xf32> to vector<128x256xf32>
    %53 = arith.addf %48, %52 : vector<128x256xf32>
    %54 = arith.maximumf %47, %53 : vector<128x256xf32>
    %c15_i32 = arith.constant 15 : i32
    %55 = tpu.dynamic_rotate %0 by %c15_i32 dim 1 : vector<128x256xf32>, i32 -> vector<128x256xf32>
    %c2_16 = arith.constant 2 : index
    %c0_17 = arith.constant 0 : index
    %56 = vector.load %arg5[%c2_16, %c0_17] : memref<8x256xf32, #tpu.memory_space<vmem>>, vector<1x256xf32>
    %57 = vector.shape_cast %56 : vector<1x256xf32> to vector<256xf32>
    %58 = vector.shape_cast %57 : vector<256xf32> to vector<1x256xf32>
    %59 = vector.broadcast %58 : vector<1x256xf32> to vector<128x256xf32>
    %60 = arith.addf %55, %59 : vector<128x256xf32>
    %61 = arith.maximumf %54, %60 : vector<128x256xf32>
    %c1_i32 = arith.constant 1 : i32
    %62 = tpu.dynamic_rotate %0 by %c1_i32 dim 1 : vector<128x256xf32>, i32 -> vector<128x256xf32>
    %c3_18 = arith.constant 3 : index
    %c0_19 = arith.constant 0 : index
    %63 = vector.load %arg5[%c3_18, %c0_19] : memref<8x256xf32, #tpu.memory_space<vmem>>, vector<1x256xf32>
    %64 = vector.shape_cast %63 : vector<1x256xf32> to vector<256xf32>
    %65 = vector.shape_cast %64 : vector<256xf32> to vector<1x256xf32>
    %66 = vector.broadcast %65 : vector<1x256xf32> to vector<128x256xf32>
    %67 = arith.addf %62, %66 : vector<128x256xf32>
    %68 = arith.maximumf %61, %67 : vector<128x256xf32>
    %c255_i32 = arith.constant 255 : i32
    %69 = tpu.dynamic_rotate %0 by %c255_i32 dim 1 : vector<128x256xf32>, i32 -> vector<128x256xf32>
    %c4_20 = arith.constant 4 : index
    %c0_21 = arith.constant 0 : index
    %70 = vector.load %arg5[%c4_20, %c0_21] : memref<8x256xf32, #tpu.memory_space<vmem>>, vector<1x256xf32>
    %71 = vector.shape_cast %70 : vector<1x256xf32> to vector<256xf32>
    %72 = vector.shape_cast %71 : vector<256xf32> to vector<1x256xf32>
    %73 = vector.broadcast %72 : vector<1x256xf32> to vector<128x256xf32>
    %74 = arith.addf %69, %73 : vector<128x256xf32>
    %75 = arith.maximumf %68, %74 : vector<128x256xf32>
    %c241_i32 = arith.constant 241 : i32
    %76 = tpu.dynamic_rotate %0 by %c241_i32 dim 1 : vector<128x256xf32>, i32 -> vector<128x256xf32>
    %c5_22 = arith.constant 5 : index
    %c0_23 = arith.constant 0 : index
    %77 = vector.load %arg5[%c5_22, %c0_23] : memref<8x256xf32, #tpu.memory_space<vmem>>, vector<1x256xf32>
    %78 = vector.shape_cast %77 : vector<1x256xf32> to vector<256xf32>
    %79 = vector.shape_cast %78 : vector<256xf32> to vector<1x256xf32>
    %80 = vector.broadcast %79 : vector<1x256xf32> to vector<128x256xf32>
    %81 = arith.addf %76, %80 : vector<128x256xf32>
    %82 = arith.maximumf %75, %81 : vector<128x256xf32>
    %c240_i32 = arith.constant 240 : i32
    %83 = tpu.dynamic_rotate %0 by %c240_i32 dim 1 : vector<128x256xf32>, i32 -> vector<128x256xf32>
    %c6_24 = arith.constant 6 : index
    %c0_25 = arith.constant 0 : index
    %84 = vector.load %arg5[%c6_24, %c0_25] : memref<8x256xf32, #tpu.memory_space<vmem>>, vector<1x256xf32>
    %85 = vector.shape_cast %84 : vector<1x256xf32> to vector<256xf32>
    %86 = vector.shape_cast %85 : vector<256xf32> to vector<1x256xf32>
    %87 = vector.broadcast %86 : vector<1x256xf32> to vector<128x256xf32>
    %88 = arith.addf %83, %87 : vector<128x256xf32>
    %89 = arith.maximumf %82, %88 : vector<128x256xf32>
    %c239_i32 = arith.constant 239 : i32
    %90 = tpu.dynamic_rotate %0 by %c239_i32 dim 1 : vector<128x256xf32>, i32 -> vector<128x256xf32>
    %c7_26 = arith.constant 7 : index
    %c0_27 = arith.constant 0 : index
    %91 = vector.load %arg5[%c7_26, %c0_27] : memref<8x256xf32, #tpu.memory_space<vmem>>, vector<1x256xf32>
    %92 = vector.shape_cast %91 : vector<1x256xf32> to vector<256xf32>
    %93 = vector.shape_cast %92 : vector<256xf32> to vector<1x256xf32>
    %94 = vector.broadcast %93 : vector<1x256xf32> to vector<128x256xf32>
    %95 = arith.addf %90, %94 : vector<128x256xf32>
    %96 = arith.maximumf %89, %95 : vector<128x256xf32>
    %97 = vector.broadcast %9 : f32 to vector<128x256xf32>
    %98 = arith.mulf %97, %96 : vector<128x256xf32>
    %99 = vector.broadcast %10 : f32 to vector<128x256xf32>
    %100 = arith.addf %98, %99 : vector<128x256xf32>
    %cst_28 = arith.constant 0.000000e+00 : f32
    %101 = vector.broadcast %cst_28 : f32 to vector<128x256xf32>
    %102 = arith.maximumf %100, %101 : vector<128x256xf32>
    %c0_29 = arith.constant 0 : index
    %c0_30 = arith.constant 0 : index
    %103 = vector.load %arg6[%c0_29, %c0_30] : memref<4x256xf32, #tpu.memory_space<vmem>>, vector<1x256xf32>
    %104 = vector.shape_cast %103 : vector<1x256xf32> to vector<256xf32>
    %105 = vector.shape_cast %104 : vector<256xf32> to vector<1x256xf32>
    %106 = vector.broadcast %105 : vector<1x256xf32> to vector<128x256xf32>
    %107 = arith.mulf %16, %106 : vector<128x256xf32>
    %c1_31 = arith.constant 1 : index
    %c0_32 = arith.constant 0 : index
    %108 = vector.load %arg6[%c1_31, %c0_32] : memref<4x256xf32, #tpu.memory_space<vmem>>, vector<1x256xf32>
    %109 = vector.shape_cast %108 : vector<1x256xf32> to vector<256xf32>
    %110 = vector.shape_cast %109 : vector<256xf32> to vector<1x256xf32>
    %111 = vector.broadcast %110 : vector<1x256xf32> to vector<128x256xf32>
    %112 = arith.mulf %28, %111 : vector<128x256xf32>
    %113 = arith.addf %107, %112 : vector<128x256xf32>
    %c2_33 = arith.constant 2 : index
    %c0_34 = arith.constant 0 : index
    %114 = vector.load %arg6[%c2_33, %c0_34] : memref<4x256xf32, #tpu.memory_space<vmem>>, vector<1x256xf32>
    %115 = vector.shape_cast %114 : vector<1x256xf32> to vector<256xf32>
    %116 = vector.shape_cast %115 : vector<256xf32> to vector<1x256xf32>
    %117 = vector.broadcast %116 : vector<1x256xf32> to vector<128x256xf32>
    %118 = arith.mulf %40, %117 : vector<128x256xf32>
    %119 = arith.addf %113, %118 : vector<128x256xf32>
    %c3_35 = arith.constant 3 : index
    %c0_36 = arith.constant 0 : index
    %120 = vector.load %arg6[%c3_35, %c0_36] : memref<4x256xf32, #tpu.memory_space<vmem>>, vector<1x256xf32>
    %121 = vector.shape_cast %120 : vector<1x256xf32> to vector<256xf32>
    %122 = vector.shape_cast %121 : vector<256xf32> to vector<1x256xf32>
    %123 = vector.broadcast %122 : vector<1x256xf32> to vector<128x256xf32>
    %124 = arith.mulf %102, %123 : vector<128x256xf32>
    %125 = arith.addf %119, %124 : vector<128x256xf32>
    %cst_37 = arith.constant dense<0.000000e+00> : vector<128xf32>
    %126 = vector.multi_reduction <add>, %125, %cst_37 [1] : vector<128x256xf32> to vector<128xf32>
    %127 = vector.shape_cast %126 : vector<128xf32> to vector<128x1xf32>
    %c0_38 = arith.constant 0 : index
    %128 = memref.load %arg7[%c0_38] : memref<1xf32, #tpu.memory_space<smem>>
    %129 = vector.broadcast %128 : f32 to vector<128x1xf32>
    %130 = arith.addf %127, %129 : vector<128x1xf32>
    %131 = math.absf %130 : vector<128x1xf32>
    %cst_39 = arith.constant 0.000000e+00 : f32
    %132 = vector.broadcast %cst_39 : f32 to vector<128x1xf32>
    %133 = arith.subf %132, %131 : vector<128x1xf32>
    %134 = math.exp %133 : vector<128x1xf32>
    %cst_40 = arith.constant 0.000000e+00 : f32
    %135 = vector.broadcast %cst_40 : f32 to vector<128x1xf32>
    %136 = arith.cmpf oge, %130, %135 : vector<128x1xf32>
    %cst_41 = arith.constant 1.000000e+00 : f32
    %137 = vector.broadcast %cst_41 : f32 to vector<128x1xf32>
    %138 = arith.addf %137, %134 : vector<128x1xf32>
    %cst_42 = arith.constant 1.000000e+00 : f32
    %139 = vector.broadcast %cst_42 : f32 to vector<128x1xf32>
    %140 = arith.divf %139, %138 : vector<128x1xf32>
    %cst_43 = arith.constant 1.000000e+00 : f32
    %141 = vector.broadcast %cst_43 : f32 to vector<128x1xf32>
    %142 = arith.addf %141, %134 : vector<128x1xf32>
    %143 = arith.divf %134, %142 : vector<128x1xf32>
    %144 = arith.select %136, %140, %143 : vector<128x1xi1>, vector<128x1xf32>
    %c0_44 = arith.constant 0 : index
    %c0_45 = arith.constant 0 : index
    %145 = vector.load %arg8[%c0_44, %c0_45] : memref<128x1xf32, #tpu.memory_space<vmem>>, vector<128x1xf32>
    tpu.vector_store %arg8[%c0_44, %c0_45], %144 {strides = array<i32>} : memref<128x1xf32, #tpu.memory_space<vmem>>, vector<128x1xf32>,
    return
  }
  func.func @transform_0(%arg0: i32) -> i32 {
    %c0_i32 = arith.constant 0 : i32
    %c0_i32_0 = arith.constant 0 : i32
    return %c0_i32 : i32
  }
  func.func @transform_1(%arg0: i32) -> (i32, i32) {
    %c0_i32 = arith.constant 0 : i32
    %c0_i32_0 = arith.constant 0 : i32
    return %arg0, %c0_i32 : i32, i32
  }
  func.func @transform_2(%arg0: i32) -> (i32, i32) {
    %c0_i32 = arith.constant 0 : i32
    %c0_i32_0 = arith.constant 0 : i32
    %c0_i32_1 = arith.constant 0 : i32
    return %c0_i32, %c0_i32_0 : i32, i32
  }
  func.func @transform_3(%arg0: i32) -> (i32, i32) {
    %c0_i32 = arith.constant 0 : i32
    %c0_i32_0 = arith.constant 0 : i32
    %c0_i32_1 = arith.constant 0 : i32
    return %c0_i32, %c0_i32_0 : i32, i32
  }
  func.func @transform_4(%arg0: i32) -> (i32, i32) {
    %c0_i32 = arith.constant 0 : i32
    %c0_i32_0 = arith.constant 0 : i32
    %c0_i32_1 = arith.constant 0 : i32
    return %c0_i32, %c0_i32_0 : i32, i32
  }
  func.func @transform_5(%arg0: i32) -> (i32, i32) {
    %c0_i32 = arith.constant 0 : i32
    %c0_i32_0 = arith.constant 0 : i32
    %c0_i32_1 = arith.constant 0 : i32
    return %c0_i32, %c0_i32_0 : i32, i32
  }
  func.func @transform_6(%arg0: i32) -> i32 {
    %c0_i32 = arith.constant 0 : i32
    %c0_i32_0 = arith.constant 0 : i32
    return %c0_i32 : i32
  }
  func.func @transform_7(%arg0: i32) -> (i32, i32) {
    %c0_i32 = arith.constant 0 : i32
    %c0_i32_0 = arith.constant 0 : i32
    return %arg0, %c0_i32 : i32, i32
  }
}

</mosaic_0001>

<llo_original>
// kernel: tpu_custom_call.1
$region0: #{tpu_custom_call.1}
  #allocation0 [shape = 'u32[]', space=smem, size = 0x4, offset = 0x4, fixed_abs, tag = 'smem constant byte address 0x4 - core index']
  #allocation1 [shape = 'u32[144,128]{1,0:T(1,128)}', space=vmem, size = 0x12000, scoped, tag = 'internal scratch']
  #allocation2 [shape = 'f32[1]{0:T(128)S(6)}', space=smem, size = 0x200, scoped, tag = 'scoped memory for tpu_custom_call.1']
  %s0 = inlined_call_operand.vmem [shape: f32[10], index: 0, kind: input, shape index: {}]
  %s1 = inlined_call_operand.hbm [shape: f32[256,256], index: 1, kind: input, shape index: {}]
  %s2 = inlined_call_operand.hbm [shape: f32[256,256], index: 2, kind: input, shape index: {}]
  %s3 = inlined_call_operand.hbm [shape: f32[256,256], index: 3, kind: input, shape index: {}]
  %s4 = inlined_call_operand.hbm [shape: f32[8,256], index: 4, kind: input, shape index: {}]
  %s5 = inlined_call_operand.vmem [shape: f32[4,256], index: 5, kind: input, shape index: {}]
  %s6 = inlined_call_operand.<no memory space> [shape: f32[1], index: 6, kind: input, shape index: {}]
  %s7 = inlined_call_operand.vmem [shape: f32[256,1], index: 7, kind: output, shape index: {}]
  %s8 = sld [smem:[#allocation0]]
  $region81: #{tpu_custom_call.1} parent=0
    _
  %s10 = ssub.s32 1, %s8
  %s11 = scalar_select 0, %s10, %s8
  %12 = sst [smem:[#allocation2]] %s6
  $region1: #{tpu_custom_call.1} parent=0
    #allocation3 [shape = 'u8[512]{0}', space=smem, size = 0x200, scoped, tag = 'input window, operand 0, single buffered']
    #allocation4 [shape = 's32[2]{0}', space=sflag, size = 0x8, scoped, tag = 'scoped memory for tpu_custom_call.1']
    #allocation5 [shape = 's32[2]{0}', space=sflag, size = 0x8, scoped, tag = 'scoped memory for tpu_custom_call.1']
    #allocation6 [shape = 'u8[262144]{0}', space=vmem, size = 0x40000, scoped, tag = 'input window, operand 1']
    #allocation7 [shape = 'u8[262144]{0}', space=vmem, size = 0x40000, scoped, tag = 'input window, operand 2, single buffered']
    #allocation8 [shape = 's32[1]{0}', space=sflag, size = 0x4, scoped, tag = 'scoped memory for tpu_custom_call.1']
    #allocation9 [shape = 'u8[262144]{0}', space=vmem, size = 0x40000, scoped, tag = 'input window, operand 3, single buffered']
    #allocation10 [shape = 'u8[8192]{0}', space=vmem, size = 0x2000, scoped, tag = 'input window, operand 4, single buffered']
    #allocation11 [shape = 's32[1]{0}', space=sflag, size = 0x4, scoped, tag = 'scoped memory for tpu_custom_call.1']
    %13 = vsyncpa [#allocation5], 0
    %14 = vsyncpa [#allocation4], 0
    %s15 = scalar_lea.sflag [#allocation4], 1
    %16 = vsyncpa %s15, 0
    %17 = vsyncpa [#allocation8], 0
    %18 = vsyncpa [#allocation11], 0
    loop: start=0, step=1, limit=4
    $region2: #{tpu_custom_call.1} parent=1 // loop_pre_header
      _
    $region3: #{tpu_custom_call.1} parent=1 // loop_header
      %s20 = sphi 0, %s24
      %p21 = scmp.ge.s32.totalorder %s20, 4
      %s28 = sphi 0, %s28
      %s30 = sphi 0, %s28
      %s31 = sphi 0, %s30
      %s45 = sphi 0, %s31
      %s51 = sphi 0, %s53
      %s54 = sphi 0, %s51
      %s55 = sphi 0, %s54
      %s71 = sphi 0, %s55
      %s75 = sphi 0, %s75
      %s77 = sphi 0, %s75
      %s78 = sphi 0, %s77
      %s92 = sphi 0, %s78
      %s96 = sphi 0, %s96
      %s98 = sphi 0, %s96
      %s99 = sphi 0, %s98
      %s113 = sphi 0, %s99
      %s117 = sphi 0, %s117
      %s119 = sphi 0, %s117
      %s120 = sphi 0, %s119
      %s134 = sphi 0, %s120
      %s138 = sphi 0, %s138
      %s140 = sphi 0, %s138
      %s141 = sphi 0, %s140
      %s155 = sphi 0, %s141
      %s159 = sphi 0, %s159
      %s161 = sphi 0, %s159
      %s162 = sphi 0, %s161
      %s176 = sphi 0, %s162
      %s182 = sphi 0, %s184
      %s185 = sphi 0, %s182
      %s186 = sphi 0, %s185
      %s202 = sphi 0, %s186
    $region4: #{tpu_custom_call.1} parent=1 // loop_header_branch
      %23 = sbr.rel (%p21) target = $region8
    $region5: #{tpu_custom_call.1} parent=1 // loop_body
      %s25 = ssub.s32 %s20, 1
      %s26 = ssub.s32 %s20, 2
      %s27 = sadd.s32 %s20, 1
      %s29 = sadd.s32 %s28, 1
      %p32 = scmp.eq.s32.totalorder %s20, 1
      %p33 = scmp.ne.s32.totalorder %s28, %s30
      %p34 = scmp.eq.s32.totalorder %s20, 0
      %p35 = por %p33, %p34
      %p36 = scmp.ne.s32.totalorder %s28, %s30
      %p37 = scmp.eq.s32.totalorder %s25, 1
      %p38 = por %p36, %p37
      %p39 = scmp.ne.s32.totalorder %s30, %s31
      %p40 = scmp.eq.s32.totalorder %s25, 0
      %p41 = por %p39, %p40
      %p42 = scmp.ne.s32.totalorder %s30, %s31
      %p43 = scmp.eq.s32.totalorder %s26, 1
      %p44 = por %p42, %p43
      %p46 = scmp.ne.s32.totalorder %s31, %s45
      %p47 = scmp.eq.s32.totalorder %s26, 0
      %p48 = por %p46, %p47
      %s49 = ssub.s32 %s20, %s27
      %p50 = scmp.eq.s32.totalorder %s49, 0
      %s52 = sadd.s32 %s51, 1
      %s53 = scalar_select %p50, %s51, %s52
      %p56 = pneg %p50
      %p57 = scmp.eq.s32.totalorder %s20, 1
      %p58 = por %p56, %p57
      %p59 = scmp.ne.s32.totalorder %s51, %s54
      %p60 = scmp.eq.s32.totalorder %s20, 0
      %p61 = por %p59, %p60
      %p62 = scmp.ne.s32.totalorder %s51, %s54
      %p63 = scmp.eq.s32.totalorder %s25, 1
      %p64 = por %p62, %p63
      %p65 = scmp.ne.s32.totalorder %s54, %s55
      %p66 = scmp.eq.s32.totalorder %s25, 0
      %p67 = por %p65, %p66
      %p68 = scmp.ne.s32.totalorder %s54, %s55
      %p69 = scmp.eq.s32.totalorder %s26, 1
      %p70 = por %p68, %p69
      %p72 = scmp.ne.s32.totalorder %s55, %s71
      %p73 = scmp.eq.s32.totalorder %s26, 0
      %p74 = por %p72, %p73
      %s76 = sadd.s32 %s75, 1
      %p79 = scmp.eq.s32.totalorder %s20, 1
      %p80 = scmp.ne.s32.totalorder %s75, %s77
      %p81 = scmp.eq.s32.totalorder %s20, 0
      %p82 = por %p80, %p81
      %p83 = scmp.ne.s32.totalorder %s75, %s77
      %p84 = scmp.eq.s32.totalorder %s25, 1
      %p85 = por %p83, %p84
      %p86 = scmp.ne.s32.totalorder %s77, %s78
      %p87 = scmp.eq.s32.totalorder %s25, 0
      %p88 = por %p86, %p87
      %p89 = scmp.ne.s32.totalorder %s77, %s78
      %p90 = scmp.eq.s32.totalorder %s26, 1
      %p91 = por %p89, %p90
      %p93 = scmp.ne.s32.totalorder %s78, %s92
      %p94 = scmp.eq.s32.totalorder %s26, 0
      %p95 = por %p93, %p94
      %s97 = sadd.s32 %s96, 1
      %p100 = scmp.eq.s32.totalorder %s20, 1
      %p101 = scmp.ne.s32.totalorder %s96, %s98
      %p102 = scmp.eq.s32.totalorder %s20, 0
      %p103 = por %p101, %p102
      %p104 = scmp.ne.s32.totalorder %s96, %s98
      %p105 = scmp.eq.s32.totalorder %s25, 1
      %p106 = por %p104, %p105
      %p107 = scmp.ne.s32.totalorder %s98, %s99
      %p108 = scmp.eq.s32.totalorder %s25, 0
      %p109 = por %p107, %p108
      %p110 = scmp.ne.s32.totalorder %s98, %s99
      %p111 = scmp.eq.s32.totalorder %s26, 1
      %p112 = por %p110, %p111
      %p114 = scmp.ne.s32.totalorder %s99, %s113
      %p115 = scmp.eq.s32.totalorder %s26, 0
      %p116 = por %p114, %p115
      %s118 = sadd.s32 %s117, 1
      %p121 = scmp.eq.s32.totalorder %s20, 1
      %p122 = scmp.ne.s32.totalorder %s117, %s119
      %p123 = scmp.eq.s32.totalorder %s20, 0
      %p124 = por %p122, %p123
      %p125 = scmp.ne.s32.totalorder %s117, %s119
      %p126 = scmp.eq.s32.totalorder %s25, 1
      %p127 = por %p125, %p126
      %p128 = scmp.ne.s32.totalorder %s119, %s120
      %p129 = scmp.eq.s32.totalorder %s25, 0
      %p130 = por %p128, %p129
      %p131 = scmp.ne.s32.totalorder %s119, %s120
      %p132 = scmp.eq.s32.totalorder %s26, 1
      %p133 = por %p131, %p132
      %p135 = scmp.ne.s32.totalorder %s120, %s134
      %p136 = scmp.eq.s32.totalorder %s26, 0
      %p137 = por %p135, %p136
      %s139 = sadd.s32 %s138, 1
      %p142 = scmp.eq.s32.totalorder %s20, 1
      %p143 = scmp.ne.s32.totalorder %s138, %s140
      %p144 = scmp.eq.s32.totalorder %s20, 0
      %p145 = por %p143, %p144
      %p146 = scmp.ne.s32.totalorder %s138, %s140
      %p147 = scmp.eq.s32.totalorder %s25, 1
      %p148 = por %p146, %p147
      %p149 = scmp.ne.s32.totalorder %s140, %s141
      %p150 = scmp.eq.s32.totalorder %s25, 0
      %p151 = por %p149, %p150
      %p152 = scmp.ne.s32.totalorder %s140, %s141
      %p153 = scmp.eq.s32.totalorder %s26, 1
      %p154 = por %p152, %p153
      %p156 = scmp.ne.s32.totalorder %s141, %s155
      %p157 = scmp.eq.s32.totalorder %s26, 0
      %p158 = por %p156, %p157
      %s160 = sadd.s32 %s159, 1
      %p163 = scmp.eq.s32.totalorder %s20, 1
      %p164 = scmp.ne.s32.totalorder %s159, %s161
      %p165 = scmp.eq.s32.totalorder %s20, 0
      %p166 = por %p164, %p165
      %p167 = scmp.ne.s32.totalorder %s159, %s161
      %p168 = scmp.eq.s32.totalorder %s25, 1
      %p169 = por %p167, %p168
      %p170 = scmp.ne.s32.totalorder %s161, %s162
      %p171 = scmp.eq.s32.totalorder %s25, 0
      %p172 = por %p170, %p171
      %p173 = scmp.ne.s32.totalorder %s161, %s162
      %p174 = scmp.eq.s32.totalorder %s26, 1
      %p175 = por %p173, %p174
      %p177 = scmp.ne.s32.totalorder %s162, %s176
      %p178 = scmp.eq.s32.totalorder %s26, 0
      %p179 = por %p177, %p178
      %s180 = ssub.s32 %s20, %s27
      %p181 = scmp.eq.s32.totalorder %s180, 0
      %s183 = sadd.s32 %s182, 1
      %s184 = scalar_select %p181, %s182, %s183
      %p187 = pneg %p181
      %p188 = scmp.eq.s32.totalorder %s20, 1
      %p189 = por %p187, %p188
      %p190 = scmp.ne.s32.totalorder %s182, %s185
      %p191 = scmp.eq.s32.totalorder %s20, 0
      %p192 = por %p190, %p191
      %p193 = scmp.ne.s32.totalorder %s182, %s185
      %p194 = scmp.eq.s32.totalorder %s25, 1
      %p195 = por %p193, %p194
      %p196 = scmp.ne.s32.totalorder %s185, %s186
      %p197 = scmp.eq.s32.totalorder %s25, 0
      %p198 = por %p196, %p197
      %p199 = scmp.ne.s32.totalorder %s185, %s186
      %p200 = scmp.eq.s32.totalorder %s26, 1
      %p201 = por %p199, %p200
      %p203 = scmp.ne.s32.totalorder %s186, %s202
      %p204 = scmp.eq.s32.totalorder %s26, 0
      %p205 = por %p203, %p204
      %p206 = scmp.le.s32.totalorder 1, %s20
      %p207 = scmp.lt.s32.totalorder %s20, 3
      %p208 = pnand %p206, %p207
      %p209 = pneg %p208
      // Predicated region
      $region9: #{tpu_custom_call.1} parent=5 // pred_check
        _
      $region10: #{tpu_custom_call.1} parent=5 // pred_check_branch
        %211 = sbr.rel (%p208) target = $region12
      $region11: #{tpu_custom_call.1} parent=5 // pred_region
        %s212 = ssub.s32 %s20, 1
        // Predicated region
        $region13: #{tpu_custom_call.1} parent=11 // pred_check
          %p213 = pneg %p41
        $region14: #{tpu_custom_call.1} parent=11 // pred_check_branch
          %215 = sbr.rel (%p213) target = $region16
        $region15: #{tpu_custom_call.1} parent=11 // pred_region
          %s217 = ssub.s32 16, 16
          %218 = vsyncadd [#allocation5], %s217
          %s220 = sshll.u32 %s0, 4
          %s221 = int_to_ptr.vmem [resolvable:$true] %s220
          %223 = dma.vmem_to_smem %s221, 16, [#allocation3], [#allocation5]
        $region16: #{tpu_custom_call.1} parent=11 // pred_fallthru
          _
        // Predicated region
        $region17: #{tpu_custom_call.1} parent=11 // pred_check
          %p224 = pneg %p88
        $region18: #{tpu_custom_call.1} parent=11 // pred_check_branch
          %226 = sbr.rel (%p224) target = $region20
        $region19: #{tpu_custom_call.1} parent=11 // pred_region
          %s228 = ssub.s32 8192, 8192
          %229 = vsyncadd [#allocation8], %s228
          %s230 = sshll.u32 [#allocation7], 4
          %s231 = int_to_ptr.vmem [resolvable:$true] %s230
          %236 = dma.hbm_to_vmem [thread:$0]  %s2, 8192, %s231, [#allocation8], 256, 256, 16
        $region20: #{tpu_custom_call.1} parent=11 // pred_fallthru
          _
        // Predicated region
        $region21: #{tpu_custom_call.1} parent=11 // pred_check
          %p237 = pneg %p109
        $region22: #{tpu_custom_call.1} parent=11 // pred_check_branch
          %239 = sbr.rel (%p237) target = $region24
        $region23: #{tpu_custom_call.1} parent=11 // pred_region
          %s241 = ssub.s32 8192, 8192
          %242 = vsyncadd [#allocation8], %s241
          %s243 = sshll.u32 [#allocation9], 4
          %s244 = int_to_ptr.vmem [resolvable:$true] %s243
          %249 = dma.hbm_to_vmem [thread:$0]  %s3, 8192, %s244, [#allocation8], 256, 256, 16
        $region24: #{tpu_custom_call.1} parent=11 // pred_fallthru
          _
        // Predicated region
        $region25: #{tpu_custom_call.1} parent=11 // pred_check
          %p250 = pneg %p130
        $region26: #{tpu_custom_call.1} parent=11 // pred_check_branch
          %252 = sbr.rel (%p250) target = $region28
        $region27: #{tpu_custom_call.1} parent=11 // pred_region
          %s254 = ssub.s32 256, 256
          %255 = vsyncadd [#allocation11], %s254
          %s257 = sshll.u32 [#allocation10], 4
          %s258 = int_to_ptr.vmem [resolvable:$true] %s257
          %260 = dma.hbm_to_vmem [thread:$0]  %s4, 256, %s258, [#allocation11]
        $region28: #{tpu_custom_call.1} parent=11 // pred_fallthru
          _
        // Predicated region
        $region29: #{tpu_custom_call.1} parent=11 // pred_check
          %p261 = pneg %p151
        $region30: #{tpu_custom_call.1} parent=11 // pred_check_branch
          %263 = sbr.rel (%p261) target = $region32
        $region31: #{tpu_custom_call.1} parent=11 // pred_region
          _
        $region32: #{tpu_custom_call.1} parent=11 // pred_fallthru
          _
        // Predicated region
        $region33: #{tpu_custom_call.1} parent=11 // pred_check
          %p264 = pneg %p172
        $region34: #{tpu_custom_call.1} parent=11 // pred_check_branch
          %266 = sbr.rel (%p264) target = $region36
        $region35: #{tpu_custom_call.1} parent=11 // pred_region
          _
        $region36: #{tpu_custom_call.1} parent=11 // pred_fallthru
          _
      $region12: #{tpu_custom_call.1} parent=5 // pred_fallthru
        _
      %p267 = scmp.lt.s32.totalorder %s20, 2
      // Predicated region
      $region37: #{tpu_custom_call.1} parent=5 // pred_check
        %p268 = pneg %p267
      $region38: #{tpu_custom_call.1} parent=5 // pred_check_branch
        %270 = sbr.rel (%p268) target = $region40
      $region39: #{tpu_custom_call.1} parent=5 // pred_region
        // Predicated region
        $region41: #{tpu_custom_call.1} parent=39 // pred_check
          %p271 = pneg %p61
        $region42: #{tpu_custom_call.1} parent=39 // pred_check_branch
          %273 = sbr.rel (%p271) target = $region44
        $region43: #{tpu_custom_call.1} parent=39 // pred_region
          %s274 = sand.u32 %s51, 1
          %s275 = scalar_lea.sflag [#allocation4], %s274
          %s276 = sand.u32 %s51, 1
          %s277 = smul.addr %s276, 256
          %s278 = scalar_lea.vmem [#allocation6], %s277
          %s279 = smul.u32 16, %s20
          %s281 = ssub.s32 4096, 4096
          %282 = vsyncadd %s275, %s281
          %s283 = smul.addr %s279, 2
          %s284 = smul.addr %s283, 128
          %s285 = scalar_lea.hbm %s1, %s284
          %s286 = sshll.u32 %s278, 4
          %s287 = int_to_ptr.vmem [resolvable:$true] %s286
          %292 = dma.hbm_to_vmem [thread:$0]  %s285, 4096, %s287, %s275, 256, 256, 16
        $region44: #{tpu_custom_call.1} parent=39 // pred_fallthru
          _
      $region40: #{tpu_custom_call.1} parent=5 // pred_fallthru
        _
      %p293 = scmp.le.s32.totalorder 1, %s20
      %p294 = scmp.lt.s32.totalorder %s20, 3
      %p295 = pnand %p293, %p294
      %p296 = pneg %p295
      // Predicated region
      $region45: #{tpu_custom_call.1} parent=5 // pred_check
        _
      $region46: #{tpu_custom_call.1} parent=5 // pred_check_branch
        %298 = sbr.rel (%p295) target = $region48
      $region47: #{tpu_custom_call.1} parent=5 // pred_region
        %s299 = ssub.s32 %s20, 1
        // Predicated region
        $region49: #{tpu_custom_call.1} parent=47 // pred_check
          %p300 = pneg %p41
        $region50: #{tpu_custom_call.1} parent=47 // pred_check_branch
          %302 = sbr.rel (%p300) target = $region52
        $region51: #{tpu_custom_call.1} parent=47 // pred_region
          %303 = dma.done [#allocation5], 16
        $region52: #{tpu_custom_call.1} parent=47 // pred_fallthru
          _
        %s304 = sand.u32 %s54, 1
        %s305 = scalar_lea.sflag [#allocation4], %s304
        %s306 = sand.u32 %s54, 1
        %s307 = smul.addr %s306, 256
        %s308 = scalar_lea.vmem [#allocation6], %s307
        // Predicated region
        $region53: #{tpu_custom_call.1} parent=47 // pred_check
          %p309 = pneg %p67
        $region54: #{tpu_custom_call.1} parent=47 // pred_check_branch
          %311 = sbr.rel (%p309) target = $region56
        $region55: #{tpu_custom_call.1} parent=47 // pred_region
          %312 = dma.done %s305, 4096
        $region56: #{tpu_custom_call.1} parent=47 // pred_fallthru
          _
        // Predicated region
        $region57: #{tpu_custom_call.1} parent=47 // pred_check
          %p313 = pneg %p88
        $region58: #{tpu_custom_call.1} parent=47 // pred_check_branch
          %315 = sbr.rel (%p313) target = $region60
        $region59: #{tpu_custom_call.1} parent=47 // pred_region
          %316 = dma.done [#allocation8], 8192
        $region60: #{tpu_custom_call.1} parent=47 // pred_fallthru
          _
        // Predicated region
        $region61: #{tpu_custom_call.1} parent=47 // pred_check
          %p317 = pneg %p109
        $region62: #{tpu_custom_call.1} parent=47 // pred_check_branch
          %319 = sbr.rel (%p317) target = $region64
        $region63: #{tpu_custom_call.1} parent=47 // pred_region
          %320 = dma.done [#allocation8], 8192
        $region64: #{tpu_custom_call.1} parent=47 // pred_fallthru
          _
        // Predicated region
        $region65: #{tpu_custom_call.1} parent=47 // pred_check
          %p321 = pneg %p130
        $region66: #{tpu_custom_call.1} parent=47 // pred_check_branch
          %323 = sbr.rel (%p321) target = $region68
        $region67: #{tpu_custom_call.1} parent=47 // pred_region
          %324 = dma.done [#allocation11], 256
        $region68: #{tpu_custom_call.1} parent=47 // pred_fallthru
          _
        %325 = sfence
        %p326 = pneg %p41
        %p327 = pneg %p38
        %s328 = sand.u32 %s54, 1
        %s329 = scalar_lea.sflag [#allocation4], %s328
        %s330 = sand.u32 %s54, 1
        %s331 = smul.addr %s330, 256
        %s332 = scalar_lea.vmem [#allocation6], %s331
        %p333 = pneg %p67
        %p334 = pneg %p64
        %p335 = pneg %p88
        %p336 = pneg %p85
        %p337 = pneg %p109
        %p338 = pneg %p106
        %p339 = pneg %p130
        %p340 = pneg %p127
        %p341 = pneg %p151
        %p342 = pneg %p148
        %p343 = pneg %p172
        %p344 = pneg %p169
        %p345 = pneg %p198
        %p346 = pneg %p195
        %s347 = smul.u32 16, %s25
        %p348 = scmp.lt.s32.totalorder %s347, 31
        %s349 = scalar_select %p348, %s347, 31
        %s350 = smul.addr %s349, 8
        %s351 = scalar_lea.vmem %s7, %s350
        %s352 = smul.u32 16, %s25
        %s353 = smul.u32 16, %s25
        %p354 = scmp.lt.s32.totalorder %s353, 31
        %s355 = scalar_select %p354, %s353, 31
        %s356 = smul.addr %s355, 8
        %s357 = scalar_lea.vmem %s7, %s356
        %s358 = smul.u32 16, %s25
        %v359 = vld [vmem:[%s308] sm:$0xff]
        %v360 = vld [vmem:[%s308 + $0x8] sm:$0xff]
        %v361 = vld [vmem:[%s308 + $0x10] sm:$0xff]
        %v362 = vld [vmem:[%s308 + $0x18] sm:$0xff]
        %v363 = vld [vmem:[%s308 + $0x20] sm:$0xff]
        %v364 = vld [vmem:[%s308 + $0x28] sm:$0xff]
        %v365 = vld [vmem:[%s308 + $0x30] sm:$0xff]
        %v366 = vld [vmem:[%s308 + $0x38] sm:$0xff]
        %v367 = vld [vmem:[%s308 + $0x40] sm:$0xff]
        %v368 = vld [vmem:[%s308 + $0x48] sm:$0xff]
        %v369 = vld [vmem:[%s308 + $0x50] sm:$0xff]
        %v370 = vld [vmem:[%s308 + $0x58] sm:$0xff]
        %v371 = vld [vmem:[%s308 + $0x60] sm:$0xff]
        %v372 = vld [vmem:[%s308 + $0x68] sm:$0xff]
        %v373 = vld [vmem:[%s308 + $0x70] sm:$0xff]
        %v374 = vld [vmem:[%s308 + $0x78] sm:$0xff]
        %v375 = vld [vmem:[%s308 + $0x80] sm:$0xff]
        %v376 = vld [vmem:[%s308 + $0x88] sm:$0xff]
        %v377 = vld [vmem:[%s308 + $0x90] sm:$0xff]
        %v378 = vld [vmem:[%s308 + $0x98] sm:$0xff]
        %v379 = vld [vmem:[%s308 + $0xa0] sm:$0xff]
        %v380 = vld [vmem:[%s308 + $0xa8] sm:$0xff]
        %v381 = vld [vmem:[%s308 + $0xb0] sm:$0xff]
        %v382 = vld [vmem:[%s308 + $0xb8] sm:$0xff]
        %v383 = vld [vmem:[%s308 + $0xc0] sm:$0xff]
        %v384 = vld [vmem:[%s308 + $0xc8] sm:$0xff]
        %v385 = vld [vmem:[%s308 + $0xd0] sm:$0xff]
        %v386 = vld [vmem:[%s308 + $0xd8] sm:$0xff]
        %v387 = vld [vmem:[%s308 + $0xe0] sm:$0xff]
        %v388 = vld [vmem:[%s308 + $0xe8] sm:$0xff]
        %v389 = vld [vmem:[%s308 + $0xf0] sm:$0xff]
        %v390 = vld [vmem:[%s308 + $0xf8] sm:$0xff]
        %s391 = sld [smem:[#allocation3]]
        %s392 = sld [smem:[#allocation3 + $0x1]]
        %s393 = sld [smem:[#allocation3 + $0x2]]
        %s394 = sld [smem:[#allocation3 + $0x3]]
        %s395 = sld [smem:[#allocation3 + $0x4]]
        %s396 = sld [smem:[#allocation3 + $0x5]]
        %s397 = sld [smem:[#allocation3 + $0x6]]
        %s398 = sld [smem:[#allocation3 + $0x7]]
        %s399 = sld [smem:[#allocation3 + $0x8]]
        %s400 = sld [smem:[#allocation3 + $0x9]]
        %v401 = vstv %s391
        %v402 = vmul.f32 %v401, %v359
        %v403 = vmul.f32 %v401, %v360
        %v404 = vmul.f32 %v401, %v361
        %v405 = vmul.f32 %v401, %v362
        %v406 = vmul.f32 %v401, %v363
        %v407 = vmul.f32 %v401, %v364
        %v408 = vmul.f32 %v401, %v365
        %v409 = vmul.f32 %v401, %v366
        %v410 = vmul.f32 %v401, %v367
        %v411 = vmul.f32 %v401, %v368
        %v412 = vmul.f32 %v401, %v369
        %v413 = vmul.f32 %v401, %v370
        %v414 = vmul.f32 %v401, %v371
        %v415 = vmul.f32 %v401, %v372
        %v416 = vmul.f32 %v401, %v373
        %v417 = vmul.f32 %v401, %v374
        %v418 = vmul.f32 %v401, %v375
        %v419 = vmul.f32 %v401, %v376
        %v420 = vmul.f32 %v401, %v377
        %v421 = vmul.f32 %v401, %v378
        %v422 = vmul.f32 %v401, %v379
        %v423 = vmul.f32 %v401, %v380
        %v424 = vmul.f32 %v401, %v381
        %v425 = vmul.f32 %v401, %v382
        %v426 = vmul.f32 %v401, %v383
        %v427 = vmul.f32 %v401, %v384
        %v428 = vmul.f32 %v401, %v385
        %v429 = vmul.f32 %v401, %v386
        %v430 = vmul.f32 %v401, %v387
        %v431 = vmul.f32 %v401, %v388
        %v432 = vmul.f32 %v401, %v389
        %v433 = vmul.f32 %v401, %v390
        %v434 = vstv %s392
        %v435 = vadd.f32 %v402, %v434
        %v436 = vadd.f32 %v403, %v434
        %v437 = vadd.f32 %v404, %v434
        %v438 = vadd.f32 %v405, %v434
        %v439 = vadd.f32 %v406, %v434
        %v440 = vadd.f32 %v407, %v434
        %v441 = vadd.f32 %v408, %v434
        %v442 = vadd.f32 %v409, %v434
        %v443 = vadd.f32 %v410, %v434
        %v444 = vadd.f32 %v411, %v434
        %v445 = vadd.f32 %v412, %v434
        %v446 = vadd.f32 %v413, %v434
        %v447 = vadd.f32 %v414, %v434
        %v448 = vadd.f32 %v415, %v434
        %v449 = vadd.f32 %v416, %v434
        %v450 = vadd.f32 %v417, %v434
        %v451 = vadd.f32 %v418, %v434
        %v452 = vadd.f32 %v419, %v434
        %v453 = vadd.f32 %v420, %v434
        %v454 = vadd.f32 %v421, %v434
        %v455 = vadd.f32 %v422, %v434
        %v456 = vadd.f32 %v423, %v434
        %v457 = vadd.f32 %v424, %v434
        %v458 = vadd.f32 %v425, %v434
        %v459 = vadd.f32 %v426, %v434
        %v460 = vadd.f32 %v427, %v434
        %v461 = vadd.f32 %v428, %v434
        %v462 = vadd.f32 %v429, %v434
        %v463 = vadd.f32 %v430, %v434
        %v464 = vadd.f32 %v431, %v434
        %v465 = vadd.f32 %v432, %v434
        %v466 = vadd.f32 %v433, %v434
        %v467 = vmax.f32 %v435, 0.0
        %v468 = vmax.f32 %v436, 0.0
        %v469 = vmax.f32 %v437, 0.0
        %v470 = vmax.f32 %v438, 0.0
        %v471 = vmax.f32 %v439, 0.0
        %v472 = vmax.f32 %v440, 0.0
        %v473 = vmax.f32 %v441, 0.0
        %v474 = vmax.f32 %v442, 0.0
        %v475 = vmax.f32 %v443, 0.0
        %v476 = vmax.f32 %v444, 0.0
        %v477 = vmax.f32 %v445, 0.0
        %v478 = vmax.f32 %v446, 0.0
        %v479 = vmax.f32 %v447, 0.0
        %v480 = vmax.f32 %v448, 0.0
        %v481 = vmax.f32 %v449, 0.0
        %v482 = vmax.f32 %v450, 0.0
        %v483 = vmax.f32 %v451, 0.0
        %v484 = vmax.f32 %v452, 0.0
        %v485 = vmax.f32 %v453, 0.0
        %v486 = vmax.f32 %v454, 0.0
        %v487 = vmax.f32 %v455, 0.0
        %v488 = vmax.f32 %v456, 0.0
        %v489 = vmax.f32 %v457, 0.0
        %v490 = vmax.f32 %v458, 0.0
        %v491 = vmax.f32 %v459, 0.0
        %v492 = vmax.f32 %v460, 0.0
        %v493 = vmax.f32 %v461, 0.0
        %v494 = vmax.f32 %v462, 0.0
        %v495 = vmax.f32 %v463, 0.0
        %v496 = vmax.f32 %v464, 0.0
        %v497 = vmax.f32 %v465, 0.0
        %v498 = vmax.f32 %v466, 0.0
        %v499 = vstv %s393
        %v500 = vmul.f32 %v499, %v359
        %v501 = vmul.f32 %v499, %v360
        %v502 = vmul.f32 %v499, %v361
        %v503 = vmul.f32 %v499, %v362
        %v504 = vmul.f32 %v499, %v363
        %v505 = vmul.f32 %v499, %v364
        %v506 = vmul.f32 %v499, %v365
        %v507 = vmul.f32 %v499, %v366
        %v508 = vmul.f32 %v499, %v367
        %v509 = vmul.f32 %v499, %v368
        %v510 = vmul.f32 %v499, %v369
        %v511 = vmul.f32 %v499, %v370
        %v512 = vmul.f32 %v499, %v371
        %v513 = vmul.f32 %v499, %v372
        %v514 = vmul.f32 %v499, %v373
        %v515 = vmul.f32 %v499, %v374
        %v516 = vmul.f32 %v499, %v375
        %v517 = vmul.f32 %v499, %v376
        %v518 = vmul.f32 %v499, %v377
        %v519 = vmul.f32 %v499, %v378
        %v520 = vmul.f32 %v499, %v379
        %v521 = vmul.f32 %v499, %v380
        %v522 = vmul.f32 %v499, %v381
        %v523 = vmul.f32 %v499, %v382
        %v524 = vmul.f32 %v499, %v383
        %v525 = vmul.f32 %v499, %v384
        %v526 = vmul.f32 %v499, %v385
        %v527 = vmul.f32 %v499, %v386
        %v528 = vmul.f32 %v499, %v387
        %v529 = vmul.f32 %v499, %v388
        %v530 = vmul.f32 %v499, %v389
        %v531 = vmul.f32 %v499, %v390
        %v532 = vstv %s394
        %v533 = vadd.f32 %v500, %v532
        %v534 = vadd.f32 %v501, %v532
        %v535 = vadd.f32 %v502, %v532
        %v536 = vadd.f32 %v503, %v532
        %v537 = vadd.f32 %v504, %v532
        %v538 = vadd.f32 %v505, %v532
        %v539 = vadd.f32 %v506, %v532
        %v540 = vadd.f32 %v507, %v532
        %v541 = vadd.f32 %v508, %v532
        %v542 = vadd.f32 %v509, %v532
        %v543 = vadd.f32 %v510, %v532
        %v544 = vadd.f32 %v511, %v532
        %v545 = vadd.f32 %v512, %v532
        %v546 = vadd.f32 %v513, %v532
        %v547 = vadd.f32 %v514, %v532
        %v548 = vadd.f32 %v515, %v532
        %v549 = vadd.f32 %v516, %v532
        %v550 = vadd.f32 %v517, %v532
        %v551 = vadd.f32 %v518, %v532
        %v552 = vadd.f32 %v519, %v532
        %v553 = vadd.f32 %v520, %v532
        %v554 = vadd.f32 %v521, %v532
        %v555 = vadd.f32 %v522, %v532
        %v556 = vadd.f32 %v523, %v532
        %v557 = vadd.f32 %v524, %v532
        %v558 = vadd.f32 %v525, %v532
        %v559 = vadd.f32 %v526, %v532
        %v560 = vadd.f32 %v527, %v532
        %v561 = vadd.f32 %v528, %v532
        %v562 = vadd.f32 %v529, %v532
        %v563 = vadd.f32 %v530, %v532
        %v564 = vadd.f32 %v531, %v532
        %v565 = vmax.f32 %v533, 0.0
        %v566 = vmax.f32 %v534, 0.0
        %v567 = vmax.f32 %v535, 0.0
        %v568 = vmax.f32 %v536, 0.0
        %v569 = vmax.f32 %v537, 0.0
        %v570 = vmax.f32 %v538, 0.0
        %v571 = vmax.f32 %v539, 0.0
        %v572 = vmax.f32 %v540, 0.0
        %v573 = vmax.f32 %v541, 0.0
        %v574 = vmax.f32 %v542, 0.0
        %v575 = vmax.f32 %v543, 0.0
        %v576 = vmax.f32 %v544, 0.0
        %v577 = vmax.f32 %v545, 0.0
        %v578 = vmax.f32 %v546, 0.0
        %v579 = vmax.f32 %v547, 0.0
        %v580 = vmax.f32 %v548, 0.0
        %v581 = vmax.f32 %v549, 0.0
        %v582 = vmax.f32 %v550, 0.0
        %v583 = vmax.f32 %v551, 0.0
        %v584 = vmax.f32 %v552, 0.0
        %v585 = vmax.f32 %v553, 0.0
        %v586 = vmax.f32 %v554, 0.0
        %v587 = vmax.f32 %v555, 0.0
        %v588 = vmax.f32 %v556, 0.0
        %v589 = vmax.f32 %v557, 0.0
        %v590 = vmax.f32 %v558, 0.0
        %v591 = vmax.f32 %v559, 0.0
        %v592 = vmax.f32 %v560, 0.0
        %v593 = vmax.f32 %v561, 0.0
        %v594 = vmax.f32 %v562, 0.0
        %v595 = vmax.f32 %v563, 0.0
        %v596 = vmax.f32 %v564, 0.0
        %v597 = vld [vmem:[#allocation7] sm:$0xff]
        %v598 = vld [vmem:[#allocation7 + $0x8] sm:$0xff]
        %v599 = vld [vmem:[#allocation7 + $0x10] sm:$0xff]
        %v600 = vld [vmem:[#allocation7 + $0x18] sm:$0xff]
        %v601 = vld [vmem:[#allocation7 + $0x20] sm:$0xff]
        %v602 = vld [vmem:[#allocation7 + $0x28] sm:$0xff]
        %v603 = vld [vmem:[#allocation7 + $0x30] sm:$0xff]
        %v604 = vld [vmem:[#allocation7 + $0x38] sm:$0xff]
        %v605 = vld [vmem:[#allocation7 + $0x40] sm:$0xff]
        %v606 = vld [vmem:[#allocation7 + $0x48] sm:$0xff]
        %v607 = vld [vmem:[#allocation7 + $0x50] sm:$0xff]
        %v608 = vld [vmem:[#allocation7 + $0x58] sm:$0xff]
        %v609 = vld [vmem:[#allocation7 + $0x60] sm:$0xff]
        %v610 = vld [vmem:[#allocation7 + $0x68] sm:$0xff]
        %v611 = vld [vmem:[#allocation7 + $0x70] sm:$0xff]
        %v612 = vld [vmem:[#allocation7 + $0x78] sm:$0xff]
        %v613 = vld [vmem:[#allocation7 + $0x80] sm:$0xff]
        %v614 = vld [vmem:[#allocation7 + $0x88] sm:$0xff]
        %v615 = vld [vmem:[#allocation7 + $0x90] sm:$0xff]
        %v616 = vld [vmem:[#allocation7 + $0x98] sm:$0xff]
        %v617 = vld [vmem:[#allocation7 + $0xa0] sm:$0xff]
        %v618 = vld [vmem:[#allocation7 + $0xa8] sm:$0xff]
        %v619 = vld [vmem:[#allocation7 + $0xb0] sm:$0xff]
        %v620 = vld [vmem:[#allocation7 + $0xb8] sm:$0xff]
        %v621 = vld [vmem:[#allocation7 + $0xc0] sm:$0xff]
        %v622 = vld [vmem:[#allocation7 + $0xc8] sm:$0xff]
        %v623 = vld [vmem:[#allocation7 + $0xd0] sm:$0xff]
        %v624 = vld [vmem:[#allocation7 + $0xd8] sm:$0xff]
        %v625 = vld [vmem:[#allocation7 + $0xe0] sm:$0xff]
        %v626 = vld [vmem:[#allocation7 + $0xe8] sm:$0xff]
        %v627 = vld [vmem:[#allocation7 + $0xf0] sm:$0xff]
        %v628 = vld [vmem:[#allocation7 + $0xf8] sm:$0xff]
        %v629 = vld [vmem:[#allocation7 + $0x100] sm:$0xff]
        %v630 = vld [vmem:[#allocation7 + $0x108] sm:$0xff]
        %v631 = vld [vmem:[#allocation7 + $0x110] sm:$0xff]
        %v632 = vld [vmem:[#allocation7 + $0x118] sm:$0xff]
        %v633 = vld [vmem:[#allocation7 + $0x120] sm:$0xff]
        %v634 = vld [vmem:[#allocation7 + $0x128] sm:$0xff]
        %v635 = vld [vmem:[#allocation7 + $0x130] sm:$0xff]
        %v636 = vld [vmem:[#allocation7 + $0x138] sm:$0xff]
        %v637 = vld [vmem:[#allocation7 + $0x140] sm:$0xff]
        %v638 = vld [vmem:[#allocation7 + $0x148] sm:$0xff]
        %v639 = vld [vmem:[#allocation7 + $0x150] sm:$0xff]
        %v640 = vld [vmem:[#allocation7 + $0x158] sm:$0xff]
        %v641 = vld [vmem:[#allocation7 + $0x160] sm:$0xff]
        %v642 = vld [vmem:[#allocation7 + $0x168] sm:$0xff]
        %v643 = vld [vmem:[#allocation7 + $0x170] sm:$0xff]
        %v644 = vld [vmem:[#allocation7 + $0x178] sm:$0xff]
        %v645 = vld [vmem:[#allocation7 + $0x180] sm:$0xff]
        %v646 = vld [vmem:[#allocation7 + $0x188] sm:$0xff]
        %v647 = vld [vmem:[#allocation7 + $0x190] sm:$0xff]
        %v648 = vld [vmem:[#allocation7 + $0x198] sm:$0xff]
        %v649 = vld [vmem:[#allocation7 + $0x1a0] sm:$0xff]
        %v650 = vld [vmem:[#allocation7 + $0x1a8] sm:$0xff]
        %v651 = vld [vmem:[#allocation7 + $0x1b0] sm:$0xff]
        %v652 = vld [vmem:[#allocation7 + $0x1b8] sm:$0xff]
        %v653 = vld [vmem:[#allocation7 + $0x1c0] sm:$0xff]
        %v654 = vld [vmem:[#allocation7 + $0x1c8] sm:$0xff]
        %v655 = vld [vmem:[#allocation7 + $0x1d0] sm:$0xff]
        %v656 = vld [vmem:[#allocation7 + $0x1d8] sm:$0xff]
        %v657 = vld [vmem:[#allocation7 + $0x1e0] sm:$0xff]
        %v658 = vld [vmem:[#allocation7 + $0x1e8] sm:$0xff]
        %v659 = vld [vmem:[#allocation7 + $0x1f0] sm:$0xff]
        %v660 = vld [vmem:[#allocation7 + $0x1f8] sm:$0xff]
        %v661 = vstv %s395
        %662 = vmatprep.subr.mxu0 %v628
        %663 = vmatpush1.msra.mxu0 %v627
        %664 = vmatprep.subr.mxu0 %v626
        %665 = vmatpush1.msra.mxu0 %v625
        %666 = vmatprep.subr.mxu0 %v624
        %667 = vmatpush1.msra.mxu0 %v623
        %668 = vmatprep.subr.mxu0 %v622
        %669 = vmatpush1.msra.mxu0 %v621
        %670 = vmatprep.subr.mxu0 %v620
        %671 = vmatpush1.msra.mxu0 %v619
        %672 = vmatprep.subr.mxu0 %v618
        %673 = vmatpush1.msra.mxu0 %v617
        %674 = vmatprep.subr.mxu0 %v616
        %675 = vmatpush1.msra.mxu0 %v615
        %676 = vmatprep.subr.mxu0 %v614
        %677 = vmatpush1.msra.mxu0 %v613
        %678 = vmatprep.subr.mxu0 %v612
        %679 = vmatpush1.msra.mxu0 %v611
        %680 = vmatprep.subr.mxu0 %v610
        %681 = vmatpush1.msra.mxu0 %v609
        %682 = vmatprep.subr.mxu0 %v608
        %683 = vmatpush1.msra.mxu0 %v607
        %684 = vmatprep.subr.mxu0 %v606
        %685 = vmatpush1.msra.mxu0 %v605
        %686 = vmatprep.subr.mxu0 %v604
        %687 = vmatpush1.msra.mxu0 %v603
        %688 = vmatprep.subr.mxu0 %v602
        %689 = vmatpush1.msra.mxu0 %v601
        %690 = vmatprep.subr.mxu0 %v600
        %691 = vmatpush1.msra.mxu0 %v599
        %692 = vmatprep.subr.mxu0 %v598
        %693 = vmatpush1.msra.mxu0 %v597
        %694 = vmatprep.subr.mxu0 %v660
        %695 = vmatpush2.msra.mxu0 %v659
        %696 = vmatprep.subr.mxu0 %v658
        %697 = vmatpush2.msra.mxu0 %v657
        %698 = vmatprep.subr.mxu0 %v656
        %699 = vmatpush2.msra.mxu0 %v655
        %700 = vmatprep.subr.mxu0 %v654
        %701 = vmatpush2.msra.mxu0 %v653
        %702 = vmatprep.subr.mxu0 %v652
        %703 = vmatpush2.msra.mxu0 %v651
        %704 = vmatprep.subr.mxu0 %v650
        %705 = vmatpush2.msra.mxu0 %v649
        %706 = vmatprep.subr.mxu0 %v648
        %707 = vmatpush2.msra.mxu0 %v647
        %708 = vmatprep.subr.mxu0 %v646
        %709 = vmatpush2.msra.mxu0 %v645
        %710 = vmatprep.subr.mxu0 %v644
        %711 = vmatpush2.msra.mxu0 %v643
        %712 = vmatprep.subr.mxu0 %v642
        %713 = vmatpush2.msra.mxu0 %v641
        %714 = vmatprep.subr.mxu0 %v640
        %715 = vmatpush2.msra.mxu0 %v639
        %716 = vmatprep.subr.mxu0 %v638
        %717 = vmatpush2.msra.mxu0 %v637
        %718 = vmatprep.subr.mxu0 %v636
        %719 = vmatpush2.msra.mxu0 %v635
        %720 = vmatprep.subr.mxu0 %v634
        %721 = vmatpush2.msra.mxu0 %v633
        %722 = vmatprep.subr.mxu0 %v632
        %723 = vmatpush2.msra.mxu0 %v631
        %724 = vmatprep.subr.mxu0 %v630
        %725 = vmatpush2.msra.mxu0 %v629
        %726 = vmatprep.mubr.f32.mxu0 %v566
        %727 = vmatmul.mubr.f32.gmra.mxu0 %v565
        %v728 = vpop.f32.mrf.mxu0
        %v729 = vadd.f32 %v661, %v728
        %v730 = vpop.f32.mrf.mxu0
        %v731 = vadd.f32 %v661, %v730
        %732 = vmatprep.mubr.f32.mxu0 %v568
        %733 = vmatmul.mubr.f32.gmra.mxu0 %v567
        %v734 = vpop.f32.mrf.mxu0
        %v735 = vadd.f32 %v661, %v734
        %v736 = vpop.f32.mrf.mxu0
        %v737 = vadd.f32 %v661, %v736
        %738 = vmatprep.mubr.f32.mxu0 %v570
        %739 = vmatmul.mubr.f32.gmra.mxu0 %v569
        %v740 = vpop.f32.mrf.mxu0
        %v741 = vadd.f32 %v661, %v740
        %v742 = vpop.f32.mrf.mxu0
        %v743 = vadd.f32 %v661, %v742
        %744 = vmatprep.mubr.f32.mxu0 %v572
        %745 = vmatmul.mubr.f32.gmra.mxu0 %v571
        %v746 = vpop.f32.mrf.mxu0
        %v747 = vadd.f32 %v661, %v746
        %v748 = vpop.f32.mrf.mxu0
        %v749 = vadd.f32 %v661, %v748
        %750 = vmatprep.mubr.f32.mxu0 %v574
        %751 = vmatmul.mubr.f32.gmra.mxu0 %v573
        %v752 = vpop.f32.mrf.mxu0
        %v753 = vadd.f32 %v661, %v752
        %v754 = vpop.f32.mrf.mxu0
        %v755 = vadd.f32 %v661, %v754
        %756 = vmatprep.mubr.f32.mxu0 %v576
        %757 = vmatmul.mubr.f32.gmra.mxu0 %v575
        %v758 = vpop.f32.mrf.mxu0
        %v759 = vadd.f32 %v661, %v758
        %v760 = vpop.f32.mrf.mxu0
        %v761 = vadd.f32 %v661, %v760
        %762 = vmatprep.mubr.f32.mxu0 %v578
        %763 = vmatmul.mubr.f32.gmra.mxu0 %v577
        %v764 = vpop.f32.mrf.mxu0
        %v765 = vadd.f32 %v661, %v764
        %v766 = vpop.f32.mrf.mxu0
        %v767 = vadd.f32 %v661, %v766
        %768 = vmatprep.mubr.f32.mxu0 %v580
        %769 = vmatmul.mubr.f32.gmra.mxu0 %v579
        %v770 = vpop.f32.mrf.mxu0
        %v771 = vadd.f32 %v661, %v770
        %v772 = vpop.f32.mrf.mxu0
        %v773 = vadd.f32 %v661, %v772
        %774 = vmatprep.mubr.f32.mxu0 %v582
        %775 = vmatmul.mubr.f32.gmra.mxu0 %v581
        %v776 = vpop.f32.mrf.mxu0
        %v777 = vadd.f32 %v661, %v776
        %v778 = vpop.f32.mrf.mxu0
        %v779 = vadd.f32 %v661, %v778
        %780 = vmatprep.mubr.f32.mxu0 %v584
        %781 = vmatmul.mubr.f32.gmra.mxu0 %v583
        %v782 = vpop.f32.mrf.mxu0
        %v783 = vadd.f32 %v661, %v782
        %v784 = vpop.f32.mrf.mxu0
        %v785 = vadd.f32 %v661, %v784
        %786 = vmatprep.mubr.f32.mxu0 %v586
        %787 = vmatmul.mubr.f32.gmra.mxu0 %v585
        %v788 = vpop.f32.mrf.mxu0
        %v789 = vadd.f32 %v661, %v788
        %v790 = vpop.f32.mrf.mxu0
        %v791 = vadd.f32 %v661, %v790
        %792 = vmatprep.mubr.f32.mxu0 %v588
        %793 = vmatmul.mubr.f32.gmra.mxu0 %v587
        %v794 = vpop.f32.mrf.mxu0
        %v795 = vadd.f32 %v661, %v794
        %v796 = vpop.f32.mrf.mxu0
        %v797 = vadd.f32 %v661, %v796
        %798 = vmatprep.mubr.f32.mxu0 %v590
        %799 = vmatmul.mubr.f32.gmra.mxu0 %v589
        %v800 = vpop.f32.mrf.mxu0
        %v801 = vadd.f32 %v661, %v800
        %v802 = vpop.f32.mrf.mxu0
        %v803 = vadd.f32 %v661, %v802
        %804 = vmatprep.mubr.f32.mxu0 %v592
        %805 = vmatmul.mubr.f32.gmra.mxu0 %v591
        %v806 = vpop.f32.mrf.mxu0
        %v807 = vadd.f32 %v661, %v806
        %v808 = vpop.f32.mrf.mxu0
        %v809 = vadd.f32 %v661, %v808
        %810 = vmatprep.mubr.f32.mxu0 %v594
        %811 = vmatmul.mubr.f32.gmra.mxu0 %v593
        %v812 = vpop.f32.mrf.mxu0
        %v813 = vadd.f32 %v661, %v812
        %v814 = vpop.f32.mrf.mxu0
        %v815 = vadd.f32 %v661, %v814
        %816 = vmatprep.mubr.f32.mxu0 %v596
        %817 = vmatmul.mubr.f32.gmra.mxu0 %v595
        %v818 = vpop.f32.mrf.mxu0
        %v819 = vadd.f32 %v661, %v818
        %v820 = vpop.f32.mrf.mxu0
        %v821 = vadd.f32 %v661, %v820
        %822 = vdwg.mxu0
        %v823 = vmax.f32 %v729, 0.0
        %v824 = vmax.f32 %v731, 0.0
        %v825 = vmax.f32 %v735, 0.0
        %v826 = vmax.f32 %v737, 0.0
        %v827 = vmax.f32 %v741, 0.0
        %v828 = vmax.f32 %v743, 0.0
        %v829 = vmax.f32 %v747, 0.0
        %v830 = vmax.f32 %v749, 0.0
        %v831 = vmax.f32 %v753, 0.0
        %v832 = vmax.f32 %v755, 0.0
        %v833 = vmax.f32 %v759, 0.0
        %v834 = vmax.f32 %v761, 0.0
        %v835 = vmax.f32 %v765, 0.0
        %v836 = vmax.f32 %v767, 0.0
        %v837 = vmax.f32 %v771, 0.0
        %v838 = vmax.f32 %v773, 0.0
        %v839 = vmax.f32 %v777, 0.0
        %v840 = vmax.f32 %v779, 0.0
        %v841 = vmax.f32 %v783, 0.0
        %v842 = vmax.f32 %v785, 0.0
        %v843 = vmax.f32 %v789, 0.0
        %v844 = vmax.f32 %v791, 0.0
        %v845 = vmax.f32 %v795, 0.0
        %v846 = vmax.f32 %v797, 0.0
        %v847 = vmax.f32 %v801, 0.0
        %v848 = vmax.f32 %v803, 0.0
        %v849 = vmax.f32 %v807, 0.0
        %v850 = vmax.f32 %v809, 0.0
        %v851 = vmax.f32 %v813, 0.0
        %v852 = vmax.f32 %v815, 0.0
        %v853 = vmax.f32 %v819, 0.0
        %v854 = vmax.f32 %v821, 0.0
        %v855 = vstv %s396
        %v856 = vmul.f32 %v855, %v359
        %v857 = vmul.f32 %v855, %v360
        %v858 = vmul.f32 %v855, %v361
        %v859 = vmul.f32 %v855, %v362
        %v860 = vmul.f32 %v855, %v363
        %v861 = vmul.f32 %v855, %v364
        %v862 = vmul.f32 %v855, %v365
        %v863 = vmul.f32 %v855, %v366
        %v864 = vmul.f32 %v855, %v367
        %v865 = vmul.f32 %v855, %v368
        %v866 = vmul.f32 %v855, %v369
        %v867 = vmul.f32 %v855, %v370
        %v868 = vmul.f32 %v855, %v371
        %v869 = vmul.f32 %v855, %v372
        %v870 = vmul.f32 %v855, %v373
        %v871 = vmul.f32 %v855, %v374
        %v872 = vmul.f32 %v855, %v375
        %v873 = vmul.f32 %v855, %v376
        %v874 = vmul.f32 %v855, %v377
        %v875 = vmul.f32 %v855, %v378
        %v876 = vmul.f32 %v855, %v379
        %v877 = vmul.f32 %v855, %v380
        %v878 = vmul.f32 %v855, %v381
        %v879 = vmul.f32 %v855, %v382
        %v880 = vmul.f32 %v855, %v383
        %v881 = vmul.f32 %v855, %v384
        %v882 = vmul.f32 %v855, %v385
        %v883 = vmul.f32 %v855, %v386
        %v884 = vmul.f32 %v855, %v387
        %v885 = vmul.f32 %v855, %v388
        %v886 = vmul.f32 %v855, %v389
        %v887 = vmul.f32 %v855, %v390
        %v888 = vstv %s397
        %v889 = vadd.f32 %v856, %v888
        %v890 = vadd.f32 %v857, %v888
        %v891 = vadd.f32 %v858, %v888
        %v892 = vadd.f32 %v859, %v888
        %v893 = vadd.f32 %v860, %v888
        %v894 = vadd.f32 %v861, %v888
        %v895 = vadd.f32 %v862, %v888
        %v896 = vadd.f32 %v863, %v888
        %v897 = vadd.f32 %v864, %v888
        %v898 = vadd.f32 %v865, %v888
        %v899 = vadd.f32 %v866, %v888
        %v900 = vadd.f32 %v867, %v888
        %v901 = vadd.f32 %v868, %v888
        %v902 = vadd.f32 %v869, %v888
        %v903 = vadd.f32 %v870, %v888
        %v904 = vadd.f32 %v871, %v888
        %v905 = vadd.f32 %v872, %v888
        %v906 = vadd.f32 %v873, %v888
        %v907 = vadd.f32 %v874, %v888
        %v908 = vadd.f32 %v875, %v888
        %v909 = vadd.f32 %v876, %v888
        %v910 = vadd.f32 %v877, %v888
        %v911 = vadd.f32 %v878, %v888
        %v912 = vadd.f32 %v879, %v888
        %v913 = vadd.f32 %v880, %v888
        %v914 = vadd.f32 %v881, %v888
        %v915 = vadd.f32 %v882, %v888
        %v916 = vadd.f32 %v883, %v888
        %v917 = vadd.f32 %v884, %v888
        %v918 = vadd.f32 %v885, %v888
        %v919 = vadd.f32 %v886, %v888
        %v920 = vadd.f32 %v887, %v888
        %v921 = vmax.f32 %v889, 0.0
        %v922 = vmax.f32 %v890, 0.0
        %v923 = vmax.f32 %v891, 0.0
        %v924 = vmax.f32 %v892, 0.0
        %v925 = vmax.f32 %v893, 0.0
        %v926 = vmax.f32 %v894, 0.0
        %v927 = vmax.f32 %v895, 0.0
        %v928 = vmax.f32 %v896, 0.0
        %v929 = vmax.f32 %v897, 0.0
        %v930 = vmax.f32 %v898, 0.0
        %v931 = vmax.f32 %v899, 0.0
        %v932 = vmax.f32 %v900, 0.0
        %v933 = vmax.f32 %v901, 0.0
        %v934 = vmax.f32 %v902, 0.0
        %v935 = vmax.f32 %v903, 0.0
        %v936 = vmax.f32 %v904, 0.0
        %v937 = vmax.f32 %v905, 0.0
        %v938 = vmax.f32 %v906, 0.0
        %v939 = vmax.f32 %v907, 0.0
        %v940 = vmax.f32 %v908, 0.0
        %v941 = vmax.f32 %v909, 0.0
        %v942 = vmax.f32 %v910, 0.0
        %v943 = vmax.f32 %v911, 0.0
        %v944 = vmax.f32 %v912, 0.0
        %v945 = vmax.f32 %v913, 0.0
        %v946 = vmax.f32 %v914, 0.0
        %v947 = vmax.f32 %v915, 0.0
        %v948 = vmax.f32 %v916, 0.0
        %v949 = vmax.f32 %v917, 0.0
        %v950 = vmax.f32 %v918, 0.0
        %v951 = vmax.f32 %v919, 0.0
        %v952 = vmax.f32 %v920, 0.0
        %v953 = vld [vmem:[#allocation9] sm:$0xff]
        %v954 = vld [vmem:[#allocation9 + $0x8] sm:$0xff]
        %v955 = vld [vmem:[#allocation9 + $0x10] sm:$0xff]
        %v956 = vld [vmem:[#allocation9 + $0x18] sm:$0xff]
        %v957 = vld [vmem:[#allocation9 + $0x20] sm:$0xff]
        %v958 = vld [vmem:[#allocation9 + $0x28] sm:$0xff]
        %v959 = vld [vmem:[#allocation9 + $0x30] sm:$0xff]
        %v960 = vld [vmem:[#allocation9 + $0x38] sm:$0xff]
        %v961 = vld [vmem:[#allocation9 + $0x40] sm:$0xff]
        %v962 = vld [vmem:[#allocation9 + $0x48] sm:$0xff]
        %v963 = vld [vmem:[#allocation9 + $0x50] sm:$0xff]
        %v964 = vld [vmem:[#allocation9 + $0x58] sm:$0xff]
        %v965 = vld [vmem:[#allocation9 + $0x60] sm:$0xff]
        %v966 = vld [vmem:[#allocation9 + $0x68] sm:$0xff]
        %v967 = vld [vmem:[#allocation9 + $0x70] sm:$0xff]
        %v968 = vld [vmem:[#allocation9 + $0x78] sm:$0xff]
        %v969 = vld [vmem:[#allocation9 + $0x80] sm:$0xff]
        %v970 = vld [vmem:[#allocation9 + $0x88] sm:$0xff]
        %v971 = vld [vmem:[#allocation9 + $0x90] sm:$0xff]
        %v972 = vld [vmem:[#allocation9 + $0x98] sm:$0xff]
        %v973 = vld [vmem:[#allocation9 + $0xa0] sm:$0xff]
        %v974 = vld [vmem:[#allocation9 + $0xa8] sm:$0xff]
        %v975 = vld [vmem:[#allocation9 + $0xb0] sm:$0xff]
        %v976 = vld [vmem:[#allocation9 + $0xb8] sm:$0xff]
        %v977 = vld [vmem:[#allocation9 + $0xc0] sm:$0xff]
        %v978 = vld [vmem:[#allocation9 + $0xc8] sm:$0xff]
        %v979 = vld [vmem:[#allocation9 + $0xd0] sm:$0xff]
        %v980 = vld [vmem:[#allocation9 + $0xd8] sm:$0xff]
        %v981 = vld [vmem:[#allocation9 + $0xe0] sm:$0xff]
        %v982 = vld [vmem:[#allocation9 + $0xe8] sm:$0xff]
        %v983 = vld [vmem:[#allocation9 + $0xf0] sm:$0xff]
        %v984 = vld [vmem:[#allocation9 + $0xf8] sm:$0xff]
        %v985 = vld [vmem:[#allocation9 + $0x100] sm:$0xff]
        %v986 = vld [vmem:[#allocation9 + $0x108] sm:$0xff]
        %v987 = vld [vmem:[#allocation9 + $0x110] sm:$0xff]
        %v988 = vld [vmem:[#allocation9 + $0x118] sm:$0xff]
        %v989 = vld [vmem:[#allocation9 + $0x120] sm:$0xff]
        %v990 = vld [vmem:[#allocation9 + $0x128] sm:$0xff]
        %v991 = vld [vmem:[#allocation9 + $0x130] sm:$0xff]
        %v992 = vld [vmem:[#allocation9 + $0x138] sm:$0xff]
        %v993 = vld [vmem:[#allocation9 + $0x140] sm:$0xff]
        %v994 = vld [vmem:[#allocation9 + $0x148] sm:$0xff]
        %v995 = vld [vmem:[#allocation9 + $0x150] sm:$0xff]
        %v996 = vld [vmem:[#allocation9 + $0x158] sm:$0xff]
        %v997 = vld [vmem:[#allocation9 + $0x160] sm:$0xff]
        %v998 = vld [vmem:[#allocation9 + $0x168] sm:$0xff]
        %v999 = vld [vmem:[#allocation9 + $0x170] sm:$0xff]
        %v1000 = vld [vmem:[#allocation9 + $0x178] sm:$0xff]
        %v1001 = vld [vmem:[#allocation9 + $0x180] sm:$0xff]
        %v1002 = vld [vmem:[#allocation9 + $0x188] sm:$0xff]
        %v1003 = vld [vmem:[#allocation9 + $0x190] sm:$0xff]
        %v1004 = vld [vmem:[#allocation9 + $0x198] sm:$0xff]
        %v1005 = vld [vmem:[#allocation9 + $0x1a0] sm:$0xff]
        %v1006 = vld [vmem:[#allocation9 + $0x1a8] sm:$0xff]
        %v1007 = vld [vmem:[#allocation9 + $0x1b0] sm:$0xff]
        %v1008 = vld [vmem:[#allocation9 + $0x1b8] sm:$0xff]
        %v1009 = vld [vmem:[#allocation9 + $0x1c0] sm:$0xff]
        %v1010 = vld [vmem:[#allocation9 + $0x1c8] sm:$0xff]
        %v1011 = vld [vmem:[#allocation9 + $0x1d0] sm:$0xff]
        %v1012 = vld [vmem:[#allocation9 + $0x1d8] sm:$0xff]
        %v1013 = vld [vmem:[#allocation9 + $0x1e0] sm:$0xff]
        %v1014 = vld [vmem:[#allocation9 + $0x1e8] sm:$0xff]
        %v1015 = vld [vmem:[#allocation9 + $0x1f0] sm:$0xff]
        %v1016 = vld [vmem:[#allocation9 + $0x1f8] sm:$0xff]
        %v1017 = vstv %s398
        %1018 = vmatprep.subr.mxu0 %v984
        %1019 = vmatpush1.msra.mxu0 %v983
        %1020 = vmatprep.subr.mxu0 %v982
        %1021 = vmatpush1.msra.mxu0 %v981
        %1022 = vmatprep.subr.mxu0 %v980
        %1023 = vmatpush1.msra.mxu0 %v979
        %1024 = vmatprep.subr.mxu0 %v978
        %1025 = vmatpush1.msra.mxu0 %v977
        %1026 = vmatprep.subr.mxu0 %v976
        %1027 = vmatpush1.msra.mxu0 %v975
        %1028 = vmatprep.subr.mxu0 %v974
        %1029 = vmatpush1.msra.mxu0 %v973
        %1030 = vmatprep.subr.mxu0 %v972
        %1031 = vmatpush1.msra.mxu0 %v971
        %1032 = vmatprep.subr.mxu0 %v970
        %1033 = vmatpush1.msra.mxu0 %v969
        %1034 = vmatprep.subr.mxu0 %v968
        %1035 = vmatpush1.msra.mxu0 %v967
        %1036 = vmatprep.subr.mxu0 %v966
        %1037 = vmatpush1.msra.mxu0 %v965
        %1038 = vmatprep.subr.mxu0 %v964
        %1039 = vmatpush1.msra.mxu0 %v963
        %1040 = vmatprep.subr.mxu0 %v962
        %1041 = vmatpush1.msra.mxu0 %v961
        %1042 = vmatprep.subr.mxu0 %v960
        %1043 = vmatpush1.msra.mxu0 %v959
        %1044 = vmatprep.subr.mxu0 %v958
        %1045 = vmatpush1.msra.mxu0 %v957
        %1046 = vmatprep.subr.mxu0 %v956
        %1047 = vmatpush1.msra.mxu0 %v955
        %1048 = vmatprep.subr.mxu0 %v954
        %1049 = vmatpush1.msra.mxu0 %v953
        %1050 = vmatprep.subr.mxu0 %v1016
        %1051 = vmatpush2.msra.mxu0 %v1015
        %1052 = vmatprep.subr.mxu0 %v1014
        %1053 = vmatpush2.msra.mxu0 %v1013
        %1054 = vmatprep.subr.mxu0 %v1012
        %1055 = vmatpush2.msra.mxu0 %v1011
        %1056 = vmatprep.subr.mxu0 %v1010
        %1057 = vmatpush2.msra.mxu0 %v1009
        %1058 = vmatprep.subr.mxu0 %v1008
        %1059 = vmatpush2.msra.mxu0 %v1007
        %1060 = vmatprep.subr.mxu0 %v1006
        %1061 = vmatpush2.msra.mxu0 %v1005
        %1062 = vmatprep.subr.mxu0 %v1004
        %1063 = vmatpush2.msra.mxu0 %v1003
        %1064 = vmatprep.subr.mxu0 %v1002
        %1065 = vmatpush2.msra.mxu0 %v1001
        %1066 = vmatprep.subr.mxu0 %v1000
        %1067 = vmatpush2.msra.mxu0 %v999
        %1068 = vmatprep.subr.mxu0 %v998
        %1069 = vmatpush2.msra.mxu0 %v997
        %1070 = vmatprep.subr.mxu0 %v996
        %1071 = vmatpush2.msra.mxu0 %v995
        %1072 = vmatprep.subr.mxu0 %v994
        %1073 = vmatpush2.msra.mxu0 %v993
        %1074 = vmatprep.subr.mxu0 %v992
        %1075 = vmatpush2.msra.mxu0 %v991
        %1076 = vmatprep.subr.mxu0 %v990
        %1077 = vmatpush2.msra.mxu0 %v989
        %1078 = vmatprep.subr.mxu0 %v988
        %1079 = vmatpush2.msra.mxu0 %v987
        %1080 = vmatprep.subr.mxu0 %v986
        %1081 = vmatpush2.msra.mxu0 %v985
        %1082 = vmatprep.mubr.f32.mxu0 %v922
        %1083 = vmatmul.mubr.f32.gmra.mxu0 %v921
        %v1084 = vpop.f32.mrf.mxu0
        %v1085 = vadd.f32 %v1017, %v1084
        %v1086 = vpop.f32.mrf.mxu0
        %v1087 = vadd.f32 %v1017, %v1086
        %1088 = vmatprep.mubr.f32.mxu0 %v924
        %1089 = vmatmul.mubr.f32.gmra.mxu0 %v923
        %v1090 = vpop.f32.mrf.mxu0
        %v1091 = vadd.f32 %v1017, %v1090
        %v1092 = vpop.f32.mrf.mxu0
        %v1093 = vadd.f32 %v1017, %v1092
        %1094 = vmatprep.mubr.f32.mxu0 %v926
        %1095 = vmatmul.mubr.f32.gmra.mxu0 %v925
        %v1096 = vpop.f32.mrf.mxu0
        %v1097 = vadd.f32 %v1017, %v1096
        %v1098 = vpop.f32.mrf.mxu0
        %v1099 = vadd.f32 %v1017, %v1098
        %1100 = vmatprep.mubr.f32.mxu0 %v928
        %1101 = vmatmul.mubr.f32.gmra.mxu0 %v927
        %v1102 = vpop.f32.mrf.mxu0
        %v1103 = vadd.f32 %v1017, %v1102
        %v1104 = vpop.f32.mrf.mxu0
        %v1105 = vadd.f32 %v1017, %v1104
        %1106 = vmatprep.mubr.f32.mxu0 %v930
        %1107 = vmatmul.mubr.f32.gmra.mxu0 %v929
        %v1108 = vpop.f32.mrf.mxu0
        %v1109 = vadd.f32 %v1017, %v1108
        %v1110 = vpop.f32.mrf.mxu0
        %v1111 = vadd.f32 %v1017, %v1110
        %1112 = vmatprep.mubr.f32.mxu0 %v932
        %1113 = vmatmul.mubr.f32.gmra.mxu0 %v931
        %v1114 = vpop.f32.mrf.mxu0
        %v1115 = vadd.f32 %v1017, %v1114
        %v1116 = vpop.f32.mrf.mxu0
        %v1117 = vadd.f32 %v1017, %v1116
        %1118 = vmatprep.mubr.f32.mxu0 %v934
        %1119 = vmatmul.mubr.f32.gmra.mxu0 %v933
        %v1120 = vpop.f32.mrf.mxu0
        %v1121 = vadd.f32 %v1017, %v1120
        %v1122 = vpop.f32.mrf.mxu0
        %v1123 = vadd.f32 %v1017, %v1122
        %1124 = vmatprep.mubr.f32.mxu0 %v936
        %1125 = vmatmul.mubr.f32.gmra.mxu0 %v935
        %v1126 = vpop.f32.mrf.mxu0
        %v1127 = vadd.f32 %v1017, %v1126
        %v1128 = vpop.f32.mrf.mxu0
        %v1129 = vadd.f32 %v1017, %v1128
        %1130 = vmatprep.mubr.f32.mxu0 %v938
        %1131 = vmatmul.mubr.f32.gmra.mxu0 %v937
        %v1132 = vpop.f32.mrf.mxu0
        %v1133 = vadd.f32 %v1017, %v1132
        %v1134 = vpop.f32.mrf.mxu0
        %v1135 = vadd.f32 %v1017, %v1134
        %1136 = vmatprep.mubr.f32.mxu0 %v940
        %1137 = vmatmul.mubr.f32.gmra.mxu0 %v939
        %v1138 = vpop.f32.mrf.mxu0
        %v1139 = vadd.f32 %v1017, %v1138
        %v1140 = vpop.f32.mrf.mxu0
        %v1141 = vadd.f32 %v1017, %v1140
        %1142 = vmatprep.mubr.f32.mxu0 %v942
        %1143 = vmatmul.mubr.f32.gmra.mxu0 %v941
        %v1144 = vpop.f32.mrf.mxu0
        %v1145 = vadd.f32 %v1017, %v1144
        %v1146 = vpop.f32.mrf.mxu0
        %v1147 = vadd.f32 %v1017, %v1146
        %1148 = vmatprep.mubr.f32.mxu0 %v944
        %1149 = vmatmul.mubr.f32.gmra.mxu0 %v943
        %v1150 = vpop.f32.mrf.mxu0
        %v1151 = vadd.f32 %v1017, %v1150
        %v1152 = vpop.f32.mrf.mxu0
        %v1153 = vadd.f32 %v1017, %v1152
        %1154 = vmatprep.mubr.f32.mxu0 %v946
        %1155 = vmatmul.mubr.f32.gmra.mxu0 %v945
        %v1156 = vpop.f32.mrf.mxu0
        %v1157 = vadd.f32 %v1017, %v1156
        %v1158 = vpop.f32.mrf.mxu0
        %v1159 = vadd.f32 %v1017, %v1158
        %1160 = vmatprep.mubr.f32.mxu0 %v948
        %1161 = vmatmul.mubr.f32.gmra.mxu0 %v947
        %v1162 = vpop.f32.mrf.mxu0
        %v1163 = vadd.f32 %v1017, %v1162
        %v1164 = vpop.f32.mrf.mxu0
        %v1165 = vadd.f32 %v1017, %v1164
        %1166 = vmatprep.mubr.f32.mxu0 %v950
        %1167 = vmatmul.mubr.f32.gmra.mxu0 %v949
        %v1168 = vpop.f32.mrf.mxu0
        %v1169 = vadd.f32 %v1017, %v1168
        %v1170 = vpop.f32.mrf.mxu0
        %v1171 = vadd.f32 %v1017, %v1170
        %1172 = vmatprep.mubr.f32.mxu0 %v952
        %1173 = vmatmul.mubr.f32.gmra.mxu0 %v951
        %v1174 = vpop.f32.mrf.mxu0
        %v1175 = vadd.f32 %v1017, %v1174
        %v1176 = vpop.f32.mrf.mxu0
        %v1177 = vadd.f32 %v1017, %v1176
        %1178 = vdwg.mxu0
        %v1179 = vmax.f32 %v1085, 0.0
        %v1180 = vmax.f32 %v1087, 0.0
        %v1181 = vmax.f32 %v1091, 0.0
        %v1182 = vmax.f32 %v1093, 0.0
        %v1183 = vmax.f32 %v1097, 0.0
        %v1184 = vmax.f32 %v1099, 0.0
        %v1185 = vmax.f32 %v1103, 0.0
        %v1186 = vmax.f32 %v1105, 0.0
        %v1187 = vmax.f32 %v1109, 0.0
        %v1188 = vmax.f32 %v1111, 0.0
        %v1189 = vmax.f32 %v1115, 0.0
        %v1190 = vmax.f32 %v1117, 0.0
        %v1191 = vmax.f32 %v1121, 0.0
        %v1192 = vmax.f32 %v1123, 0.0
        %v1193 = vmax.f32 %v1127, 0.0
        %v1194 = vmax.f32 %v1129, 0.0
        %v1195 = vmax.f32 %v1133, 0.0
        %v1196 = vmax.f32 %v1135, 0.0
        %v1197 = vmax.f32 %v1139, 0.0
        %v1198 = vmax.f32 %v1141, 0.0
        %v1199 = vmax.f32 %v1145, 0.0
        %v1200 = vmax.f32 %v1147, 0.0
        %v1201 = vmax.f32 %v1151, 0.0
        %v1202 = vmax.f32 %v1153, 0.0
        %v1203 = vmax.f32 %v1157, 0.0
        %v1204 = vmax.f32 %v1159, 0.0
        %v1205 = vmax.f32 %v1163, 0.0
        %v1206 = vmax.f32 %v1165, 0.0
        %v1207 = vmax.f32 %v1169, 0.0
        %v1208 = vmax.f32 %v1171, 0.0
        %v1209 = vmax.f32 %v1175, 0.0
        %v1210 = vmax.f32 %v1177, 0.0
        %1211 = vrot.lane.b32.xlu0 %v359, 17
        %v1212 = vpop.permute.xlu0 %1211
        %1213 = vrot.lane.b32.xlu0 %v361, 17
        %v1214 = vpop.permute.xlu0 %1213
        %1215 = vrot.lane.b32.xlu0 %v363, 17
        %v1216 = vpop.permute.xlu0 %1215
        %1217 = vrot.lane.b32.xlu0 %v365, 17
        %v1218 = vpop.permute.xlu0 %1217
        %1219 = vrot.lane.b32.xlu0 %v367, 17
        %v1220 = vpop.permute.xlu0 %1219
        %1221 = vrot.lane.b32.xlu0 %v369, 17
        %v1222 = vpop.permute.xlu0 %1221
        %1223 = vrot.lane.b32.xlu0 %v371, 17
        %v1224 = vpop.permute.xlu0 %1223
        %1225 = vrot.lane.b32.xlu0 %v373, 17
        %v1226 = vpop.permute.xlu0 %1225
        %1227 = vrot.lane.b32.xlu0 %v375, 17
        %v1228 = vpop.permute.xlu0 %1227
        %1229 = vrot.lane.b32.xlu0 %v377, 17
        %v1230 = vpop.permute.xlu0 %1229
        %1231 = vrot.lane.b32.xlu0 %v379, 17
        %v1232 = vpop.permute.xlu0 %1231
        %1233 = vrot.lane.b32.xlu0 %v381, 17
        %v1234 = vpop.permute.xlu0 %1233
        %1235 = vrot.lane.b32.xlu0 %v383, 17
        %v1236 = vpop.permute.xlu0 %1235
        %1237 = vrot.lane.b32.xlu0 %v385, 17
        %v1238 = vpop.permute.xlu0 %1237
        %1239 = vrot.lane.b32.xlu0 %v387, 17
        %v1240 = vpop.permute.xlu0 %1239
        %1241 = vrot.lane.b32.xlu0 %v389, 17
        %v1242 = vpop.permute.xlu0 %1241
        %1243 = vrot.lane.b32.xlu0 %v360, 17
        %v1244 = vpop.permute.xlu0 %1243
        %1245 = vrot.lane.b32.xlu0 %v362, 17
        %v1246 = vpop.permute.xlu0 %1245
        %1247 = vrot.lane.b32.xlu0 %v364, 17
        %v1248 = vpop.permute.xlu0 %1247
        %1249 = vrot.lane.b32.xlu0 %v366, 17
        %v1250 = vpop.permute.xlu0 %1249
        %1251 = vrot.lane.b32.xlu0 %v368, 17
        %v1252 = vpop.permute.xlu0 %1251
        %1253 = vrot.lane.b32.xlu0 %v370, 17
        %v1254 = vpop.permute.xlu0 %1253
        %1255 = vrot.lane.b32.xlu0 %v372, 17
        %v1256 = vpop.permute.xlu0 %1255
        %1257 = vrot.lane.b32.xlu0 %v374, 17
        %v1258 = vpop.permute.xlu0 %1257
        %1259 = vrot.lane.b32.xlu0 %v376, 17
        %v1260 = vpop.permute.xlu0 %1259
        %1261 = vrot.lane.b32.xlu0 %v378, 17
        %v1262 = vpop.permute.xlu0 %1261
        %1263 = vrot.lane.b32.xlu0 %v380, 17
        %v1264 = vpop.permute.xlu0 %1263
        %1265 = vrot.lane.b32.xlu0 %v382, 17
        %v1266 = vpop.permute.xlu0 %1265
        %1267 = vrot.lane.b32.xlu0 %v384, 17
        %v1268 = vpop.permute.xlu0 %1267
        %1269 = vrot.lane.b32.xlu0 %v386, 17
        %v1270 = vpop.permute.xlu0 %1269
        %1271 = vrot.lane.b32.xlu0 %v388, 17
        %v1272 = vpop.permute.xlu0 %1271
        %1273 = vrot.lane.b32.xlu0 %v390, 17
        %v1274 = vpop.permute.xlu0 %1273
        %v1275 = vlaneseq
        %v1276 = vand.u32 %v1275, 127
        %vm1277 = vcmp.lt.s32.totalorder %v1276, 17
        %v1278 = vsel %vm1277, %v1212, %v1244
        %v1279 = vsel %vm1277, %v1214, %v1246
        %v1280 = vsel %vm1277, %v1216, %v1248
        %v1281 = vsel %vm1277, %v1218, %v1250
        %v1282 = vsel %vm1277, %v1220, %v1252
        %v1283 = vsel %vm1277, %v1222, %v1254
        %v1284 = vsel %vm1277, %v1224, %v1256
        %v1285 = vsel %vm1277, %v1226, %v1258
        %v1286 = vsel %vm1277, %v1228, %v1260
        %v1287 = vsel %vm1277, %v1230, %v1262
        %v1288 = vsel %vm1277, %v1232, %v1264
        %v1289 = vsel %vm1277, %v1234, %v1266
        %v1290 = vsel %vm1277, %v1236, %v1268
        %v1291 = vsel %vm1277, %v1238, %v1270
        %v1292 = vsel %vm1277, %v1240, %v1272
        %v1293 = vsel %vm1277, %v1242, %v1274
        %v1294 = vsel %vm1277, %v1244, %v1212
        %v1295 = vsel %vm1277, %v1246, %v1214
        %v1296 = vsel %vm1277, %v1248, %v1216
        %v1297 = vsel %vm1277, %v1250, %v1218
        %v1298 = vsel %vm1277, %v1252, %v1220
        %v1299 = vsel %vm1277, %v1254, %v1222
        %v1300 = vsel %vm1277, %v1256, %v1224
        %v1301 = vsel %vm1277, %v1258, %v1226
        %v1302 = vsel %vm1277, %v1260, %v1228
        %v1303 = vsel %vm1277, %v1262, %v1230
        %v1304 = vsel %vm1277, %v1264, %v1232
        %v1305 = vsel %vm1277, %v1266, %v1234
        %v1306 = vsel %vm1277, %v1268, %v1236
        %v1307 = vsel %vm1277, %v1270, %v1238
        %v1308 = vsel %vm1277, %v1272, %v1240
        %v1309 = vsel %vm1277, %v1274, %v1242
        %v1310 = vld [vmem:[#allocation10] ss:$8 sm:$0x3]
        %v1312 = vlaneseq
        %v1313 = vshrl.u32 %v1312, 7
        %v1314 = vsub.s32 0, %v1313
        %v1315 = vrot.slane %v1310, %v1314
        %v1316 = vlaneseq
        %v1317 = vshrl.u32 %v1316, 7
        %v1318 = vsub.s32 1, %v1317
        %v1319 = vrot.slane %v1310, %v1318
        %v1322 = vadd.f32 %v1294, %v1315
        %v1323 = vadd.f32 %v1278, %v1319
        %v1324 = vadd.f32 %v1295, %v1315
        %v1325 = vadd.f32 %v1279, %v1319
        %v1326 = vadd.f32 %v1296, %v1315
        %v1327 = vadd.f32 %v1280, %v1319
        %v1328 = vadd.f32 %v1297, %v1315
        %v1329 = vadd.f32 %v1281, %v1319
        %v1330 = vadd.f32 %v1298, %v1315
        %v1331 = vadd.f32 %v1282, %v1319
        %v1332 = vadd.f32 %v1299, %v1315
        %v1333 = vadd.f32 %v1283, %v1319
        %v1334 = vadd.f32 %v1300, %v1315
        %v1335 = vadd.f32 %v1284, %v1319
        %v1336 = vadd.f32 %v1301, %v1315
        %v1337 = vadd.f32 %v1285, %v1319
        %v1338 = vadd.f32 %v1302, %v1315
        %v1339 = vadd.f32 %v1286, %v1319
        %v1340 = vadd.f32 %v1303, %v1315
        %v1341 = vadd.f32 %v1287, %v1319
        %v1342 = vadd.f32 %v1304, %v1315
        %v1343 = vadd.f32 %v1288, %v1319
        %v1344 = vadd.f32 %v1305, %v1315
        %v1345 = vadd.f32 %v1289, %v1319
        %v1346 = vadd.f32 %v1306, %v1315
        %v1347 = vadd.f32 %v1290, %v1319
        %v1348 = vadd.f32 %v1307, %v1315
        %v1349 = vadd.f32 %v1291, %v1319
        %v1350 = vadd.f32 %v1308, %v1315
        %v1351 = vadd.f32 %v1292, %v1319
        %v1352 = vadd.f32 %v1309, %v1315
        %v1353 = vadd.f32 %v1293, %v1319
        %v1354 = vmax.f32 %v359, %v1322
        %v1355 = vmax.f32 %v360, %v1323
        %v1356 = vmax.f32 %v361, %v1324
        %v1357 = vmax.f32 %v362, %v1325
        %v1358 = vmax.f32 %v363, %v1326
        %v1359 = vmax.f32 %v364, %v1327
        %v1360 = vmax.f32 %v365, %v1328
        %v1361 = vmax.f32 %v366, %v1329
        %v1362 = vmax.f32 %v367, %v1330
        %v1363 = vmax.f32 %v368, %v1331
        %v1364 = vmax.f32 %v369, %v1332
        %v1365 = vmax.f32 %v370, %v1333
        %v1366 = vmax.f32 %v371, %v1334
        %v1367 = vmax.f32 %v372, %v1335
        %v1368 = vmax.f32 %v373, %v1336
        %v1369 = vmax.f32 %v374, %v1337
        %v1370 = vmax.f32 %v375, %v1338
        %v1371 = vmax.f32 %v376, %v1339
        %v1372 = vmax.f32 %v377, %v1340
        %v1373 = vmax.f32 %v378, %v1341
        %v1374 = vmax.f32 %v379, %v1342
        %v1375 = vmax.f32 %v380, %v1343
        %v1376 = vmax.f32 %v381, %v1344
        %v1377 = vmax.f32 %v382, %v1345
        %v1378 = vmax.f32 %v383, %v1346
        %v1379 = vmax.f32 %v384, %v1347
        %v1380 = vmax.f32 %v385, %v1348
        %v1381 = vmax.f32 %v386, %v1349
        %v1382 = vmax.f32 %v387, %v1350
        %v1383 = vmax.f32 %v388, %v1351
        %v1384 = vmax.f32 %v389, %v1352
        %v1385 = vmax.f32 %v390, %v1353
        %1386 = vrot.lane.b32.xlu0 %v359, 16
        %v1387 = vpop.permute.xlu0 %1386
        %1388 = vrot.lane.b32.xlu0 %v361, 16
        %v1389 = vpop.permute.xlu0 %1388
        %1390 = vrot.lane.b32.xlu0 %v363, 16
        %v1391 = vpop.permute.xlu0 %1390
        %1392 = vrot.lane.b32.xlu0 %v365, 16
        %v1393 = vpop.permute.xlu0 %1392
        %1394 = vrot.lane.b32.xlu0 %v367, 16
        %v1395 = vpop.permute.xlu0 %1394
        %1396 = vrot.lane.b32.xlu0 %v369, 16
        %v1397 = vpop.permute.xlu0 %1396
        %1398 = vrot.lane.b32.xlu0 %v371, 16
        %v1399 = vpop.permute.xlu0 %1398
        %1400 = vrot.lane.b32.xlu0 %v373, 16
        %v1401 = vpop.permute.xlu0 %1400
        %1402 = vrot.lane.b32.xlu0 %v375, 16
        %v1403 = vpop.permute.xlu0 %1402
        %1404 = vrot.lane.b32.xlu0 %v377, 16
        %v1405 = vpop.permute.xlu0 %1404
        %1406 = vrot.lane.b32.xlu0 %v379, 16
        %v1407 = vpop.permute.xlu0 %1406
        %1408 = vrot.lane.b32.xlu0 %v381, 16
        %v1409 = vpop.permute.xlu0 %1408
        %1410 = vrot.lane.b32.xlu0 %v383, 16
        %v1411 = vpop.permute.xlu0 %1410
        %1412 = vrot.lane.b32.xlu0 %v385, 16
        %v1413 = vpop.permute.xlu0 %1412
        %1414 = vrot.lane.b32.xlu0 %v387, 16
        %v1415 = vpop.permute.xlu0 %1414
        %1416 = vrot.lane.b32.xlu0 %v389, 16
        %v1417 = vpop.permute.xlu0 %1416
        %1418 = vrot.lane.b32.xlu0 %v360, 16
        %v1419 = vpop.permute.xlu0 %1418
        %1420 = vrot.lane.b32.xlu0 %v362, 16
        %v1421 = vpop.permute.xlu0 %1420
        %1422 = vrot.lane.b32.xlu0 %v364, 16
        %v1423 = vpop.permute.xlu0 %1422
        %1424 = vrot.lane.b32.xlu0 %v366, 16
        %v1425 = vpop.permute.xlu0 %1424
        %1426 = vrot.lane.b32.xlu0 %v368, 16
        %v1427 = vpop.permute.xlu0 %1426
        %1428 = vrot.lane.b32.xlu0 %v370, 16
        %v1429 = vpop.permute.xlu0 %1428
        %1430 = vrot.lane.b32.xlu0 %v372, 16
        %v1431 = vpop.permute.xlu0 %1430
        %1432 = vrot.lane.b32.xlu0 %v374, 16
        %v1433 = vpop.permute.xlu0 %1432
        %1434 = vrot.lane.b32.xlu0 %v376, 16
        %v1435 = vpop.permute.xlu0 %1434
        %1436 = vrot.lane.b32.xlu0 %v378, 16
        %v1437 = vpop.permute.xlu0 %1436
        %1438 = vrot.lane.b32.xlu0 %v380, 16
        %v1439 = vpop.permute.xlu0 %1438
        %1440 = vrot.lane.b32.xlu0 %v382, 16
        %v1441 = vpop.permute.xlu0 %1440
        %1442 = vrot.lane.b32.xlu0 %v384, 16
        %v1443 = vpop.permute.xlu0 %1442
        %1444 = vrot.lane.b32.xlu0 %v386, 16
        %v1445 = vpop.permute.xlu0 %1444
        %1446 = vrot.lane.b32.xlu0 %v388, 16
        %v1447 = vpop.permute.xlu0 %1446
        %1448 = vrot.lane.b32.xlu0 %v390, 16
        %v1449 = vpop.permute.xlu0 %1448
        %vm1450 = vcmp.lt.s32.totalorder %v1276, 16
        %v1451 = vsel %vm1450, %v1387, %v1419
        %v1452 = vsel %vm1450, %v1389, %v1421
        %v1453 = vsel %vm1450, %v1391, %v1423
        %v1454 = vsel %vm1450, %v1393, %v1425
        %v1455 = vsel %vm1450, %v1395, %v1427
        %v1456 = vsel %vm1450, %v1397, %v1429
        %v1457 = vsel %vm1450, %v1399, %v1431
        %v1458 = vsel %vm1450, %v1401, %v1433
        %v1459 = vsel %vm1450, %v1403, %v1435
        %v1460 = vsel %vm1450, %v1405, %v1437
        %v1461 = vsel %vm1450, %v1407, %v1439
        %v1462 = vsel %vm1450, %v1409, %v1441
        %v1463 = vsel %vm1450, %v1411, %v1443
        %v1464 = vsel %vm1450, %v1413, %v1445
        %v1465 = vsel %vm1450, %v1415, %v1447
        %v1466 = vsel %vm1450, %v1417, %v1449
        %v1467 = vsel %vm1450, %v1419, %v1387
        %v1468 = vsel %vm1450, %v1421, %v1389
        %v1469 = vsel %vm1450, %v1423, %v1391
        %v1470 = vsel %vm1450, %v1425, %v1393
        %v1471 = vsel %vm1450, %v1427, %v1395
        %v1472 = vsel %vm1450, %v1429, %v1397
        %v1473 = vsel %vm1450, %v1431, %v1399
        %v1474 = vsel %vm1450, %v1433, %v1401
        %v1475 = vsel %vm1450, %v1435, %v1403
        %v1476 = vsel %vm1450, %v1437, %v1405
        %v1477 = vsel %vm1450, %v1439, %v1407
        %v1478 = vsel %vm1450, %v1441, %v1409
        %v1479 = vsel %vm1450, %v1443, %v1411
        %v1480 = vsel %vm1450, %v1445, %v1413
        %v1481 = vsel %vm1450, %v1447, %v1415
        %v1482 = vsel %vm1450, %v1449, %v1417
        %s1483 = scalar_lea.vmem [#allocation10], 1
        %v1484 = vld [vmem:[%s1483] ss:$8 sm:$0x3]
        %v1486 = vlaneseq
        %v1487 = vshrl.u32 %v1486, 7
        %v1488 = vsub.s32 0, %v1487
        %v1489 = vrot.slane %v1484, %v1488
        %v1490 = vlaneseq
        %v1491 = vshrl.u32 %v1490, 7
        %v1492 = vsub.s32 1, %v1491
        %v1493 = vrot.slane %v1484, %v1492
        %v1496 = vadd.f32 %v1467, %v1489
        %v1497 = vadd.f32 %v1451, %v1493
        %v1498 = vadd.f32 %v1468, %v1489
        %v1499 = vadd.f32 %v1452, %v1493
        %v1500 = vadd.f32 %v1469, %v1489
        %v1501 = vadd.f32 %v1453, %v1493
        %v1502 = vadd.f32 %v1470, %v1489
        %v1503 = vadd.f32 %v1454, %v1493
        %v1504 = vadd.f32 %v1471, %v1489
        %v1505 = vadd.f32 %v1455, %v1493
        %v1506 = vadd.f32 %v1472, %v1489
        %v1507 = vadd.f32 %v1456, %v1493
        %v1508 = vadd.f32 %v1473, %v1489
        %v1509 = vadd.f32 %v1457, %v1493
        %v1510 = vadd.f32 %v1474, %v1489
        %v1511 = vadd.f32 %v1458, %v1493
        %v1512 = vadd.f32 %v1475, %v1489
        %v1513 = vadd.f32 %v1459, %v1493
        %v1514 = vadd.f32 %v1476, %v1489
        %v1515 = vadd.f32 %v1460, %v1493
        %v1516 = vadd.f32 %v1477, %v1489
        %v1517 = vadd.f32 %v1461, %v1493
        %v1518 = vadd.f32 %v1478, %v1489
        %v1519 = vadd.f32 %v1462, %v1493
        %v1520 = vadd.f32 %v1479, %v1489
        %v1521 = vadd.f32 %v1463, %v1493
        %v1522 = vadd.f32 %v1480, %v1489
        %v1523 = vadd.f32 %v1464, %v1493
        %v1524 = vadd.f32 %v1481, %v1489
        %v1525 = vadd.f32 %v1465, %v1493
        %v1526 = vadd.f32 %v1482, %v1489
        %v1527 = vadd.f32 %v1466, %v1493
        %v1528 = vmax.f32 %v1354, %v1496
        %v1529 = vmax.f32 %v1355, %v1497
        %v1530 = vmax.f32 %v1356, %v1498
        %v1531 = vmax.f32 %v1357, %v1499
        %v1532 = vmax.f32 %v1358, %v1500
        %v1533 = vmax.f32 %v1359, %v1501
        %v1534 = vmax.f32 %v1360, %v1502
        %v1535 = vmax.f32 %v1361, %v1503
        %v1536 = vmax.f32 %v1362, %v1504
        %v1537 = vmax.f32 %v1363, %v1505
        %v1538 = vmax.f32 %v1364, %v1506
        %v1539 = vmax.f32 %v1365, %v1507
        %v1540 = vmax.f32 %v1366, %v1508
        %v1541 = vmax.f32 %v1367, %v1509
        %v1542 = vmax.f32 %v1368, %v1510
        %v1543 = vmax.f32 %v1369, %v1511
        %v1544 = vmax.f32 %v1370, %v1512
        %v1545 = vmax.f32 %v1371, %v1513
        %v1546 = vmax.f32 %v1372, %v1514
        %v1547 = vmax.f32 %v1373, %v1515
        %v1548 = vmax.f32 %v1374, %v1516
        %v1549 = vmax.f32 %v1375, %v1517
        %v1550 = vmax.f32 %v1376, %v1518
        %v1551 = vmax.f32 %v1377, %v1519
        %v1552 = vmax.f32 %v1378, %v1520
        %v1553 = vmax.f32 %v1379, %v1521
        %v1554 = vmax.f32 %v1380, %v1522
        %v1555 = vmax.f32 %v1381, %v1523
        %v1556 = vmax.f32 %v1382, %v1524
        %v1557 = vmax.f32 %v1383, %v1525
        %v1558 = vmax.f32 %v1384, %v1526
        %v1559 = vmax.f32 %v1385, %v1527
        %1560 = vrot.lane.b32.xlu0 %v359, 15
        %v1561 = vpop.permute.xlu0 %1560
        %1562 = vrot.lane.b32.xlu0 %v361, 15
        %v1563 = vpop.permute.xlu0 %1562
        %1564 = vrot.lane.b32.xlu0 %v363, 15
        %v1565 = vpop.permute.xlu0 %1564
        %1566 = vrot.lane.b32.xlu0 %v365, 15
        %v1567 = vpop.permute.xlu0 %1566
        %1568 = vrot.lane.b32.xlu0 %v367, 15
        %v1569 = vpop.permute.xlu0 %1568
        %1570 = vrot.lane.b32.xlu0 %v369, 15
        %v1571 = vpop.permute.xlu0 %1570
        %1572 = vrot.lane.b32.xlu0 %v371, 15
        %v1573 = vpop.permute.xlu0 %1572
        %1574 = vrot.lane.b32.xlu0 %v373, 15
        %v1575 = vpop.permute.xlu0 %1574
        %1576 = vrot.lane.b32.xlu0 %v375, 15
        %v1577 = vpop.permute.xlu0 %1576
        %1578 = vrot.lane.b32.xlu0 %v377, 15
        %v1579 = vpop.permute.xlu0 %1578
        %1580 = vrot.lane.b32.xlu0 %v379, 15
        %v1581 = vpop.permute.xlu0 %1580
        %1582 = vrot.lane.b32.xlu0 %v381, 15
        %v1583 = vpop.permute.xlu0 %1582
        %1584 = vrot.lane.b32.xlu0 %v383, 15
        %v1585 = vpop.permute.xlu0 %1584
        %1586 = vrot.lane.b32.xlu0 %v385, 15
        %v1587 = vpop.permute.xlu0 %1586
        %1588 = vrot.lane.b32.xlu0 %v387, 15
        %v1589 = vpop.permute.xlu0 %1588
        %1590 = vrot.lane.b32.xlu0 %v389, 15
        %v1591 = vpop.permute.xlu0 %1590
        %1592 = vrot.lane.b32.xlu0 %v360, 15
        %v1593 = vpop.permute.xlu0 %1592
        %1594 = vrot.lane.b32.xlu0 %v362, 15
        %v1595 = vpop.permute.xlu0 %1594
        %1596 = vrot.lane.b32.xlu0 %v364, 15
        %v1597 = vpop.permute.xlu0 %1596
        %1598 = vrot.lane.b32.xlu0 %v366, 15
        %v1599 = vpop.permute.xlu0 %1598
        %1600 = vrot.lane.b32.xlu0 %v368, 15
        %v1601 = vpop.permute.xlu0 %1600
        %1602 = vrot.lane.b32.xlu0 %v370, 15
        %v1603 = vpop.permute.xlu0 %1602
        %1604 = vrot.lane.b32.xlu0 %v372, 15
        %v1605 = vpop.permute.xlu0 %1604
        %1606 = vrot.lane.b32.xlu0 %v374, 15
        %v1607 = vpop.permute.xlu0 %1606
        %1608 = vrot.lane.b32.xlu0 %v376, 15
        %v1609 = vpop.permute.xlu0 %1608
        %1610 = vrot.lane.b32.xlu0 %v378, 15
        %v1611 = vpop.permute.xlu0 %1610
        %1612 = vrot.lane.b32.xlu0 %v380, 15
        %v1613 = vpop.permute.xlu0 %1612
        %1614 = vrot.lane.b32.xlu0 %v382, 15
        %v1615 = vpop.permute.xlu0 %1614
        %1616 = vrot.lane.b32.xlu0 %v384, 15
        %v1617 = vpop.permute.xlu0 %1616
        %1618 = vrot.lane.b32.xlu0 %v386, 15
        %v1619 = vpop.permute.xlu0 %1618
        %1620 = vrot.lane.b32.xlu0 %v388, 15
        %v1621 = vpop.permute.xlu0 %1620
        %1622 = vrot.lane.b32.xlu0 %v390, 15
        %v1623 = vpop.permute.xlu0 %1622
        %vm1624 = vcmp.lt.s32.totalorder %v1276, 15
        %v1625 = vsel %vm1624, %v1561, %v1593
        %v1626 = vsel %vm1624, %v1563, %v1595
        %v1627 = vsel %vm1624, %v1565, %v1597
        %v1628 = vsel %vm1624, %v1567, %v1599
        %v1629 = vsel %vm1624, %v1569, %v1601
        %v1630 = vsel %vm1624, %v1571, %v1603
        %v1631 = vsel %vm1624, %v1573, %v1605
        %v1632 = vsel %vm1624, %v1575, %v1607
        %v1633 = vsel %vm1624, %v1577, %v1609
        %v1634 = vsel %vm1624, %v1579, %v1611
        %v1635 = vsel %vm1624, %v1581, %v1613
        %v1636 = vsel %vm1624, %v1583, %v1615
        %v1637 = vsel %vm1624, %v1585, %v1617
        %v1638 = vsel %vm1624, %v1587, %v1619
        %v1639 = vsel %vm1624, %v1589, %v1621
        %v1640 = vsel %vm1624, %v1591, %v1623
        %v1641 = vsel %vm1624, %v1593, %v1561
        %v1642 = vsel %vm1624, %v1595, %v1563
        %v1643 = vsel %vm1624, %v1597, %v1565
        %v1644 = vsel %vm1624, %v1599, %v1567
        %v1645 = vsel %vm1624, %v1601, %v1569
        %v1646 = vsel %vm1624, %v1603, %v1571
        %v1647 = vsel %vm1624, %v1605, %v1573
        %v1648 = vsel %vm1624, %v1607, %v1575
        %v1649 = vsel %vm1624, %v1609, %v1577
        %v1650 = vsel %vm1624, %v1611, %v1579
        %v1651 = vsel %vm1624, %v1613, %v1581
        %v1652 = vsel %vm1624, %v1615, %v1583
        %v1653 = vsel %vm1624, %v1617, %v1585
        %v1654 = vsel %vm1624, %v1619, %v1587
        %v1655 = vsel %vm1624, %v1621, %v1589
        %v1656 = vsel %vm1624, %v1623, %v1591
        %s1657 = scalar_lea.vmem [#allocation10], 2
        %v1658 = vld [vmem:[%s1657] ss:$8 sm:$0x3]
        %v1660 = vlaneseq
        %v1661 = vshrl.u32 %v1660, 7
        %v1662 = vsub.s32 0, %v1661
        %v1663 = vrot.slane %v1658, %v1662
        %v1664 = vlaneseq
        %v1665 = vshrl.u32 %v1664, 7
        %v1666 = vsub.s32 1, %v1665
        %v1667 = vrot.slane %v1658, %v1666
        %v1670 = vadd.f32 %v1641, %v1663
        %v1671 = vadd.f32 %v1625, %v1667
        %v1672 = vadd.f32 %v1642, %v1663
        %v1673 = vadd.f32 %v1626, %v1667
        %v1674 = vadd.f32 %v1643, %v1663
        %v1675 = vadd.f32 %v1627, %v1667
        %v1676 = vadd.f32 %v1644, %v1663
        %v1677 = vadd.f32 %v1628, %v1667
        %v1678 = vadd.f32 %v1645, %v1663
        %v1679 = vadd.f32 %v1629, %v1667
        %v1680 = vadd.f32 %v1646, %v1663
        %v1681 = vadd.f32 %v1630, %v1667
        %v1682 = vadd.f32 %v1647, %v1663
        %v1683 = vadd.f32 %v1631, %v1667
        %v1684 = vadd.f32 %v1648, %v1663
        %v1685 = vadd.f32 %v1632, %v1667
        %v1686 = vadd.f32 %v1649, %v1663
        %v1687 = vadd.f32 %v1633, %v1667
        %v1688 = vadd.f32 %v1650, %v1663
        %v1689 = vadd.f32 %v1634, %v1667
        %v1690 = vadd.f32 %v1651, %v1663
        %v1691 = vadd.f32 %v1635, %v1667
        %v1692 = vadd.f32 %v1652, %v1663
        %v1693 = vadd.f32 %v1636, %v1667
        %v1694 = vadd.f32 %v1653, %v1663
        %v1695 = vadd.f32 %v1637, %v1667
        %v1696 = vadd.f32 %v1654, %v1663
        %v1697 = vadd.f32 %v1638, %v1667
        %v1698 = vadd.f32 %v1655, %v1663
        %v1699 = vadd.f32 %v1639, %v1667
        %v1700 = vadd.f32 %v1656, %v1663
        %v1701 = vadd.f32 %v1640, %v1667
        %v1702 = vmax.f32 %v1528, %v1670
        %v1703 = vmax.f32 %v1529, %v1671
        %v1704 = vmax.f32 %v1530, %v1672
        %v1705 = vmax.f32 %v1531, %v1673
        %v1706 = vmax.f32 %v1532, %v1674
        %v1707 = vmax.f32 %v1533, %v1675
        %v1708 = vmax.f32 %v1534, %v1676
        %v1709 = vmax.f32 %v1535, %v1677
        %v1710 = vmax.f32 %v1536, %v1678
        %v1711 = vmax.f32 %v1537, %v1679
        %v1712 = vmax.f32 %v1538, %v1680
        %v1713 = vmax.f32 %v1539, %v1681
        %v1714 = vmax.f32 %v1540, %v1682
        %v1715 = vmax.f32 %v1541, %v1683
        %v1716 = vmax.f32 %v1542, %v1684
        %v1717 = vmax.f32 %v1543, %v1685
        %v1718 = vmax.f32 %v1544, %v1686
        %v1719 = vmax.f32 %v1545, %v1687
        %v1720 = vmax.f32 %v1546, %v1688
        %v1721 = vmax.f32 %v1547, %v1689
        %v1722 = vmax.f32 %v1548, %v1690
        %v1723 = vmax.f32 %v1549, %v1691
        %v1724 = vmax.f32 %v1550, %v1692
        %v1725 = vmax.f32 %v1551, %v1693
        %v1726 = vmax.f32 %v1552, %v1694
        %v1727 = vmax.f32 %v1553, %v1695
        %v1728 = vmax.f32 %v1554, %v1696
        %v1729 = vmax.f32 %v1555, %v1697
        %v1730 = vmax.f32 %v1556, %v1698
        %v1731 = vmax.f32 %v1557, %v1699
        %v1732 = vmax.f32 %v1558, %v1700
        %v1733 = vmax.f32 %v1559, %v1701
        %1734 = vrot.lane.b32.xlu0 %v359, 1
        %v1735 = vpop.permute.xlu0 %1734
        %1736 = vrot.lane.b32.xlu0 %v361, 1
        %v1737 = vpop.permute.xlu0 %1736
        %1738 = vrot.lane.b32.xlu0 %v363, 1
        %v1739 = vpop.permute.xlu0 %1738
        %1740 = vrot.lane.b32.xlu0 %v365, 1
        %v1741 = vpop.permute.xlu0 %1740
        %1742 = vrot.lane.b32.xlu0 %v367, 1
        %v1743 = vpop.permute.xlu0 %1742
        %1744 = vrot.lane.b32.xlu0 %v369, 1
        %v1745 = vpop.permute.xlu0 %1744
        %1746 = vrot.lane.b32.xlu0 %v371, 1
        %v1747 = vpop.permute.xlu0 %1746
        %1748 = vrot.lane.b32.xlu0 %v373, 1
        %v1749 = vpop.permute.xlu0 %1748
        %1750 = vrot.lane.b32.xlu0 %v375, 1
        %v1751 = vpop.permute.xlu0 %1750
        %1752 = vrot.lane.b32.xlu0 %v377, 1
        %v1753 = vpop.permute.xlu0 %1752
        %1754 = vrot.lane.b32.xlu0 %v379, 1
        %v1755 = vpop.permute.xlu0 %1754
        %1756 = vrot.lane.b32.xlu0 %v381, 1
        %v1757 = vpop.permute.xlu0 %1756
        %1758 = vrot.lane.b32.xlu0 %v383, 1
        %v1759 = vpop.permute.xlu0 %1758
        %1760 = vrot.lane.b32.xlu0 %v385, 1
        %v1761 = vpop.permute.xlu0 %1760
        %1762 = vrot.lane.b32.xlu0 %v387, 1
        %v1763 = vpop.permute.xlu0 %1762
        %1764 = vrot.lane.b32.xlu0 %v389, 1
        %v1765 = vpop.permute.xlu0 %1764
        %1766 = vrot.lane.b32.xlu0 %v360, 1
        %v1767 = vpop.permute.xlu0 %1766
        %1768 = vrot.lane.b32.xlu0 %v362, 1
        %v1769 = vpop.permute.xlu0 %1768
        %1770 = vrot.lane.b32.xlu0 %v364, 1
        %v1771 = vpop.permute.xlu0 %1770
        %1772 = vrot.lane.b32.xlu0 %v366, 1
        %v1773 = vpop.permute.xlu0 %1772
        %1774 = vrot.lane.b32.xlu0 %v368, 1
        %v1775 = vpop.permute.xlu0 %1774
        %1776 = vrot.lane.b32.xlu0 %v370, 1
        %v1777 = vpop.permute.xlu0 %1776
        %1778 = vrot.lane.b32.xlu0 %v372, 1
        %v1779 = vpop.permute.xlu0 %1778
        %1780 = vrot.lane.b32.xlu0 %v374, 1
        %v1781 = vpop.permute.xlu0 %1780
        %1782 = vrot.lane.b32.xlu0 %v376, 1
        %v1783 = vpop.permute.xlu0 %1782
        %1784 = vrot.lane.b32.xlu0 %v378, 1
        %v1785 = vpop.permute.xlu0 %1784
        %1786 = vrot.lane.b32.xlu0 %v380, 1
        %v1787 = vpop.permute.xlu0 %1786
        %1788 = vrot.lane.b32.xlu0 %v382, 1
        %v1789 = vpop.permute.xlu0 %1788
        %1790 = vrot.lane.b32.xlu0 %v384, 1
        %v1791 = vpop.permute.xlu0 %1790
        %1792 = vrot.lane.b32.xlu0 %v386, 1
        %v1793 = vpop.permute.xlu0 %1792
        %1794 = vrot.lane.b32.xlu0 %v388, 1
        %v1795 = vpop.permute.xlu0 %1794
        %1796 = vrot.lane.b32.xlu0 %v390, 1
        %v1797 = vpop.permute.xlu0 %1796
        %vm1798 = vcmp.lt.s32.totalorder %v1276, 1
        %v1799 = vsel %vm1798, %v1735, %v1767
        %v1800 = vsel %vm1798, %v1737, %v1769
        %v1801 = vsel %vm1798, %v1739, %v1771
        %v1802 = vsel %vm1798, %v1741, %v1773
        %v1803 = vsel %vm1798, %v1743, %v1775
        %v1804 = vsel %vm1798, %v1745, %v1777
        %v1805 = vsel %vm1798, %v1747, %v1779
        %v1806 = vsel %vm1798, %v1749, %v1781
        %v1807 = vsel %vm1798, %v1751, %v1783
        %v1808 = vsel %vm1798, %v1753, %v1785
        %v1809 = vsel %vm1798, %v1755, %v1787
        %v1810 = vsel %vm1798, %v1757, %v1789
        %v1811 = vsel %vm1798, %v1759, %v1791
        %v1812 = vsel %vm1798, %v1761, %v1793
        %v1813 = vsel %vm1798, %v1763, %v1795
        %v1814 = vsel %vm1798, %v1765, %v1797
        %v1815 = vsel %vm1798, %v1767, %v1735
        %v1816 = vsel %vm1798, %v1769, %v1737
        %v1817 = vsel %vm1798, %v1771, %v1739
        %v1818 = vsel %vm1798, %v1773, %v1741
        %v1819 = vsel %vm1798, %v1775, %v1743
        %v1820 = vsel %vm1798, %v1777, %v1745
        %v1821 = vsel %vm1798, %v1779, %v1747
        %v1822 = vsel %vm1798, %v1781, %v1749
        %v1823 = vsel %vm1798, %v1783, %v1751
        %v1824 = vsel %vm1798, %v1785, %v1753
        %v1825 = vsel %vm1798, %v1787, %v1755
        %v1826 = vsel %vm1798, %v1789, %v1757
        %v1827 = vsel %vm1798, %v1791, %v1759
        %v1828 = vsel %vm1798, %v1793, %v1761
        %v1829 = vsel %vm1798, %v1795, %v1763
        %v1830 = vsel %vm1798, %v1797, %v1765
        %s1831 = scalar_lea.vmem [#allocation10], 3
        %v1832 = vld [vmem:[%s1831] ss:$8 sm:$0x3]
        %v1834 = vlaneseq
        %v1835 = vshrl.u32 %v1834, 7
        %v1836 = vsub.s32 0, %v1835
        %v1837 = vrot.slane %v1832, %v1836
        %v1838 = vlaneseq
        %v1839 = vshrl.u32 %v1838, 7
        %v1840 = vsub.s32 1, %v1839
        %v1841 = vrot.slane %v1832, %v1840
        %v1844 = vadd.f32 %v1815, %v1837
        %v1845 = vadd.f32 %v1799, %v1841
        %v1846 = vadd.f32 %v1816, %v1837
        %v1847 = vadd.f32 %v1800, %v1841
        %v1848 = vadd.f32 %v1817, %v1837
        %v1849 = vadd.f32 %v1801, %v1841
        %v1850 = vadd.f32 %v1818, %v1837
        %v1851 = vadd.f32 %v1802, %v1841
        %v1852 = vadd.f32 %v1819, %v1837
        %v1853 = vadd.f32 %v1803, %v1841
        %v1854 = vadd.f32 %v1820, %v1837
        %v1855 = vadd.f32 %v1804, %v1841
        %v1856 = vadd.f32 %v1821, %v1837
        %v1857 = vadd.f32 %v1805, %v1841
        %v1858 = vadd.f32 %v1822, %v1837
        %v1859 = vadd.f32 %v1806, %v1841
        %v1860 = vadd.f32 %v1823, %v1837
        %v1861 = vadd.f32 %v1807, %v1841
        %v1862 = vadd.f32 %v1824, %v1837
        %v1863 = vadd.f32 %v1808, %v1841
        %v1864 = vadd.f32 %v1825, %v1837
        %v1865 = vadd.f32 %v1809, %v1841
        %v1866 = vadd.f32 %v1826, %v1837
        %v1867 = vadd.f32 %v1810, %v1841
        %v1868 = vadd.f32 %v1827, %v1837
        %v1869 = vadd.f32 %v1811, %v1841
        %v1870 = vadd.f32 %v1828, %v1837
        %v1871 = vadd.f32 %v1812, %v1841
        %v1872 = vadd.f32 %v1829, %v1837
        %v1873 = vadd.f32 %v1813, %v1841
        %v1874 = vadd.f32 %v1830, %v1837
        %v1875 = vadd.f32 %v1814, %v1841
        %v1876 = vmax.f32 %v1702, %v1844
        %v1877 = vmax.f32 %v1703, %v1845
        %v1878 = vmax.f32 %v1704, %v1846
        %v1879 = vmax.f32 %v1705, %v1847
        %v1880 = vmax.f32 %v1706, %v1848
        %v1881 = vmax.f32 %v1707, %v1849
        %v1882 = vmax.f32 %v1708, %v1850
        %v1883 = vmax.f32 %v1709, %v1851
        %v1884 = vmax.f32 %v1710, %v1852
        %v1885 = vmax.f32 %v1711, %v1853
        %v1886 = vmax.f32 %v1712, %v1854
        %v1887 = vmax.f32 %v1713, %v1855
        %v1888 = vmax.f32 %v1714, %v1856
        %v1889 = vmax.f32 %v1715, %v1857
        %v1890 = vmax.f32 %v1716, %v1858
        %v1891 = vmax.f32 %v1717, %v1859
        %v1892 = vmax.f32 %v1718, %v1860
        %v1893 = vmax.f32 %v1719, %v1861
        %v1894 = vmax.f32 %v1720, %v1862
        %v1895 = vmax.f32 %v1721, %v1863
        %v1896 = vmax.f32 %v1722, %v1864
        %v1897 = vmax.f32 %v1723, %v1865
        %v1898 = vmax.f32 %v1724, %v1866
        %v1899 = vmax.f32 %v1725, %v1867
        %v1900 = vmax.f32 %v1726, %v1868
        %v1901 = vmax.f32 %v1727, %v1869
        %v1902 = vmax.f32 %v1728, %v1870
        %v1903 = vmax.f32 %v1729, %v1871
        %v1904 = vmax.f32 %v1730, %v1872
        %v1905 = vmax.f32 %v1731, %v1873
        %v1906 = vmax.f32 %v1732, %v1874
        %v1907 = vmax.f32 %v1733, %v1875
        %1908 = vrot.lane.b32.xlu0 %v359, 127
        %v1909 = vpop.permute.xlu0 %1908
        %1910 = vrot.lane.b32.xlu0 %v361, 127
        %v1911 = vpop.permute.xlu0 %1910
        %1912 = vrot.lane.b32.xlu0 %v363, 127
        %v1913 = vpop.permute.xlu0 %1912
        %1914 = vrot.lane.b32.xlu0 %v365, 127
        %v1915 = vpop.permute.xlu0 %1914
        %1916 = vrot.lane.b32.xlu0 %v367, 127
        %v1917 = vpop.permute.xlu0 %1916
        %1918 = vrot.lane.b32.xlu0 %v369, 127
        %v1919 = vpop.permute.xlu0 %1918
        %1920 = vrot.lane.b32.xlu0 %v371, 127
        %v1921 = vpop.permute.xlu0 %1920
        %1922 = vrot.lane.b32.xlu0 %v373, 127
        %v1923 = vpop.permute.xlu0 %1922
        %1924 = vrot.lane.b32.xlu0 %v375, 127
        %v1925 = vpop.permute.xlu0 %1924
        %1926 = vrot.lane.b32.xlu0 %v377, 127
        %v1927 = vpop.permute.xlu0 %1926
        %1928 = vrot.lane.b32.xlu0 %v379, 127
        %v1929 = vpop.permute.xlu0 %1928
        %1930 = vrot.lane.b32.xlu0 %v381, 127
        %v1931 = vpop.permute.xlu0 %1930
        %1932 = vrot.lane.b32.xlu0 %v383, 127
        %v1933 = vpop.permute.xlu0 %1932
        %1934 = vrot.lane.b32.xlu0 %v385, 127
        %v1935 = vpop.permute.xlu0 %1934
        %1936 = vrot.lane.b32.xlu0 %v387, 127
        %v1937 = vpop.permute.xlu0 %1936
        %1938 = vrot.lane.b32.xlu0 %v389, 127
        %v1939 = vpop.permute.xlu0 %1938
        %1940 = vrot.lane.b32.xlu0 %v360, 127
        %v1941 = vpop.permute.xlu0 %1940
        %1942 = vrot.lane.b32.xlu0 %v362, 127
        %v1943 = vpop.permute.xlu0 %1942
        %1944 = vrot.lane.b32.xlu0 %v364, 127
        %v1945 = vpop.permute.xlu0 %1944
        %1946 = vrot.lane.b32.xlu0 %v366, 127
        %v1947 = vpop.permute.xlu0 %1946
        %1948 = vrot.lane.b32.xlu0 %v368, 127
        %v1949 = vpop.permute.xlu0 %1948
        %1950 = vrot.lane.b32.xlu0 %v370, 127
        %v1951 = vpop.permute.xlu0 %1950
        %1952 = vrot.lane.b32.xlu0 %v372, 127
        %v1953 = vpop.permute.xlu0 %1952
        %1954 = vrot.lane.b32.xlu0 %v374, 127
        %v1955 = vpop.permute.xlu0 %1954
        %1956 = vrot.lane.b32.xlu0 %v376, 127
        %v1957 = vpop.permute.xlu0 %1956
        %1958 = vrot.lane.b32.xlu0 %v378, 127
        %v1959 = vpop.permute.xlu0 %1958
        %1960 = vrot.lane.b32.xlu0 %v380, 127
        %v1961 = vpop.permute.xlu0 %1960
        %1962 = vrot.lane.b32.xlu0 %v382, 127
        %v1963 = vpop.permute.xlu0 %1962
        %1964 = vrot.lane.b32.xlu0 %v384, 127
        %v1965 = vpop.permute.xlu0 %1964
        %1966 = vrot.lane.b32.xlu0 %v386, 127
        %v1967 = vpop.permute.xlu0 %1966
        %1968 = vrot.lane.b32.xlu0 %v388, 127
        %v1969 = vpop.permute.xlu0 %1968
        %1970 = vrot.lane.b32.xlu0 %v390, 127
        %v1971 = vpop.permute.xlu0 %1970
        %vm1972 = vcmp.lt.s32.totalorder %v1276, 127
        %v1973 = vsel %vm1972, %v1909, %v1941
        %v1974 = vsel %vm1972, %v1911, %v1943
        %v1975 = vsel %vm1972, %v1913, %v1945
        %v1976 = vsel %vm1972, %v1915, %v1947
        %v1977 = vsel %vm1972, %v1917, %v1949
        %v1978 = vsel %vm1972, %v1919, %v1951
        %v1979 = vsel %vm1972, %v1921, %v1953
        %v1980 = vsel %vm1972, %v1923, %v1955
        %v1981 = vsel %vm1972, %v1925, %v1957
        %v1982 = vsel %vm1972, %v1927, %v1959
        %v1983 = vsel %vm1972, %v1929, %v1961
        %v1984 = vsel %vm1972, %v1931, %v1963
        %v1985 = vsel %vm1972, %v1933, %v1965
        %v1986 = vsel %vm1972, %v1935, %v1967
        %v1987 = vsel %vm1972, %v1937, %v1969
        %v1988 = vsel %vm1972, %v1939, %v1971
        %v1989 = vsel %vm1972, %v1941, %v1909
        %v1990 = vsel %vm1972, %v1943, %v1911
        %v1991 = vsel %vm1972, %v1945, %v1913
        %v1992 = vsel %vm1972, %v1947, %v1915
        %v1993 = vsel %vm1972, %v1949, %v1917
        %v1994 = vsel %vm1972, %v1951, %v1919
        %v1995 = vsel %vm1972, %v1953, %v1921
        %v1996 = vsel %vm1972, %v1955, %v1923
        %v1997 = vsel %vm1972, %v1957, %v1925
        %v1998 = vsel %vm1972, %v1959, %v1927
        %v1999 = vsel %vm1972, %v1961, %v1929
        %v2000 = vsel %vm1972, %v1963, %v1931
        %v2001 = vsel %vm1972, %v1965, %v1933
        %v2002 = vsel %vm1972, %v1967, %v1935
        %v2003 = vsel %vm1972, %v1969, %v1937
        %v2004 = vsel %vm1972, %v1971, %v1939
        %s2005 = scalar_lea.vmem [#allocation10], 4
        %v2006 = vld [vmem:[%s2005] ss:$8 sm:$0x3]
        %v2008 = vlaneseq
        %v2009 = vshrl.u32 %v2008, 7
        %v2010 = vsub.s32 0, %v2009
        %v2011 = vrot.slane %v2006, %v2010
        %v2012 = vlaneseq
        %v2013 = vshrl.u32 %v2012, 7
        %v2014 = vsub.s32 1, %v2013
        %v2015 = vrot.slane %v2006, %v2014
        %v2018 = vadd.f32 %v1973, %v2011
        %v2019 = vadd.f32 %v1989, %v2015
        %v2020 = vadd.f32 %v1974, %v2011
        %v2021 = vadd.f32 %v1990, %v2015
        %v2022 = vadd.f32 %v1975, %v2011
        %v2023 = vadd.f32 %v1991, %v2015
        %v2024 = vadd.f32 %v1976, %v2011
        %v2025 = vadd.f32 %v1992, %v2015
        %v2026 = vadd.f32 %v1977, %v2011
        %v2027 = vadd.f32 %v1993, %v2015
        %v2028 = vadd.f32 %v1978, %v2011
        %v2029 = vadd.f32 %v1994, %v2015
        %v2030 = vadd.f32 %v1979, %v2011
        %v2031 = vadd.f32 %v1995, %v2015
        %v2032 = vadd.f32 %v1980, %v2011
        %v2033 = vadd.f32 %v1996, %v2015
        %v2034 = vadd.f32 %v1981, %v2011
        %v2035 = vadd.f32 %v1997, %v2015
        %v2036 = vadd.f32 %v1982, %v2011
        %v2037 = vadd.f32 %v1998, %v2015
        %v2038 = vadd.f32 %v1983, %v2011
        %v2039 = vadd.f32 %v1999, %v2015
        %v2040 = vadd.f32 %v1984, %v2011
        %v2041 = vadd.f32 %v2000, %v2015
        %v2042 = vadd.f32 %v1985, %v2011
        %v2043 = vadd.f32 %v2001, %v2015
        %v2044 = vadd.f32 %v1986, %v2011
        %v2045 = vadd.f32 %v2002, %v2015
        %v2046 = vadd.f32 %v1987, %v2011
        %v2047 = vadd.f32 %v2003, %v2015
        %v2048 = vadd.f32 %v1988, %v2011
        %v2049 = vadd.f32 %v2004, %v2015
        %v2050 = vmax.f32 %v1876, %v2018
        %v2051 = vmax.f32 %v1877, %v2019
        %v2052 = vmax.f32 %v1878, %v2020
        %v2053 = vmax.f32 %v1879, %v2021
        %v2054 = vmax.f32 %v1880, %v2022
        %v2055 = vmax.f32 %v1881, %v2023
        %v2056 = vmax.f32 %v1882, %v2024
        %v2057 = vmax.f32 %v1883, %v2025
        %v2058 = vmax.f32 %v1884, %v2026
        %v2059 = vmax.f32 %v1885, %v2027
        %v2060 = vmax.f32 %v1886, %v2028
        %v2061 = vmax.f32 %v1887, %v2029
        %v2062 = vmax.f32 %v1888, %v2030
        %v2063 = vmax.f32 %v1889, %v2031
        %v2064 = vmax.f32 %v1890, %v2032
        %v2065 = vmax.f32 %v1891, %v2033
        %v2066 = vmax.f32 %v1892, %v2034
        %v2067 = vmax.f32 %v1893, %v2035
        %v2068 = vmax.f32 %v1894, %v2036
        %v2069 = vmax.f32 %v1895, %v2037
        %v2070 = vmax.f32 %v1896, %v2038
        %v2071 = vmax.f32 %v1897, %v2039
        %v2072 = vmax.f32 %v1898, %v2040
        %v2073 = vmax.f32 %v1899, %v2041
        %v2074 = vmax.f32 %v1900, %v2042
        %v2075 = vmax.f32 %v1901, %v2043
        %v2076 = vmax.f32 %v1902, %v2044
        %v2077 = vmax.f32 %v1903, %v2045
        %v2078 = vmax.f32 %v1904, %v2046
        %v2079 = vmax.f32 %v1905, %v2047
        %v2080 = vmax.f32 %v1906, %v2048
        %v2081 = vmax.f32 %v1907, %v2049
        %2082 = vrot.lane.b32.xlu0 %v359, 113
        %v2083 = vpop.permute.xlu0 %2082
        %2084 = vrot.lane.b32.xlu0 %v361, 113
        %v2085 = vpop.permute.xlu0 %2084
        %2086 = vrot.lane.b32.xlu0 %v363, 113
        %v2087 = vpop.permute.xlu0 %2086
        %2088 = vrot.lane.b32.xlu0 %v365, 113
        %v2089 = vpop.permute.xlu0 %2088
        %2090 = vrot.lane.b32.xlu0 %v367, 113
        %v2091 = vpop.permute.xlu0 %2090
        %2092 = vrot.lane.b32.xlu0 %v369, 113
        %v2093 = vpop.permute.xlu0 %2092
        %2094 = vrot.lane.b32.xlu0 %v371, 113
        %v2095 = vpop.permute.xlu0 %2094
        %2096 = vrot.lane.b32.xlu0 %v373, 113
        %v2097 = vpop.permute.xlu0 %2096
        %2098 = vrot.lane.b32.xlu0 %v375, 113
        %v2099 = vpop.permute.xlu0 %2098
        %2100 = vrot.lane.b32.xlu0 %v377, 113
        %v2101 = vpop.permute.xlu0 %2100
        %2102 = vrot.lane.b32.xlu0 %v379, 113
        %v2103 = vpop.permute.xlu0 %2102
        %2104 = vrot.lane.b32.xlu0 %v381, 113
        %v2105 = vpop.permute.xlu0 %2104
        %2106 = vrot.lane.b32.xlu0 %v383, 113
        %v2107 = vpop.permute.xlu0 %2106
        %2108 = vrot.lane.b32.xlu0 %v385, 113
        %v2109 = vpop.permute.xlu0 %2108
        %2110 = vrot.lane.b32.xlu0 %v387, 113
        %v2111 = vpop.permute.xlu0 %2110
        %2112 = vrot.lane.b32.xlu0 %v389, 113
        %v2113 = vpop.permute.xlu0 %2112
        %2114 = vrot.lane.b32.xlu0 %v360, 113
        %v2115 = vpop.permute.xlu0 %2114
        %2116 = vrot.lane.b32.xlu0 %v362, 113
        %v2117 = vpop.permute.xlu0 %2116
        %2118 = vrot.lane.b32.xlu0 %v364, 113
        %v2119 = vpop.permute.xlu0 %2118
        %2120 = vrot.lane.b32.xlu0 %v366, 113
        %v2121 = vpop.permute.xlu0 %2120
        %2122 = vrot.lane.b32.xlu0 %v368, 113
        %v2123 = vpop.permute.xlu0 %2122
        %2124 = vrot.lane.b32.xlu0 %v370, 113
        %v2125 = vpop.permute.xlu0 %2124
        %2126 = vrot.lane.b32.xlu0 %v372, 113
        %v2127 = vpop.permute.xlu0 %2126
        %2128 = vrot.lane.b32.xlu0 %v374, 113
        %v2129 = vpop.permute.xlu0 %2128
        %2130 = vrot.lane.b32.xlu0 %v376, 113
        %v2131 = vpop.permute.xlu0 %2130
        %2132 = vrot.lane.b32.xlu0 %v378, 113
        %v2133 = vpop.permute.xlu0 %2132
        %2134 = vrot.lane.b32.xlu0 %v380, 113
        %v2135 = vpop.permute.xlu0 %2134
        %2136 = vrot.lane.b32.xlu0 %v382, 113
        %v2137 = vpop.permute.xlu0 %2136
        %2138 = vrot.lane.b32.xlu0 %v384, 113
        %v2139 = vpop.permute.xlu0 %2138
        %2140 = vrot.lane.b32.xlu0 %v386, 113
        %v2141 = vpop.permute.xlu0 %2140
        %2142 = vrot.lane.b32.xlu0 %v388, 113
        %v2143 = vpop.permute.xlu0 %2142
        %2144 = vrot.lane.b32.xlu0 %v390, 113
        %v2145 = vpop.permute.xlu0 %2144
        %vm2146 = vcmp.lt.s32.totalorder %v1276, 113
        %v2147 = vsel %vm2146, %v2083, %v2115
        %v2148 = vsel %vm2146, %v2085, %v2117
        %v2149 = vsel %vm2146, %v2087, %v2119
        %v2150 = vsel %vm2146, %v2089, %v2121
        %v2151 = vsel %vm2146, %v2091, %v2123
        %v2152 = vsel %vm2146, %v2093, %v2125
        %v2153 = vsel %vm2146, %v2095, %v2127
        %v2154 = vsel %vm2146, %v2097, %v2129
        %v2155 = vsel %vm2146, %v2099, %v2131
        %v2156 = vsel %vm2146, %v2101, %v2133
        %v2157 = vsel %vm2146, %v2103, %v2135
        %v2158 = vsel %vm2146, %v2105, %v2137
        %v2159 = vsel %vm2146, %v2107, %v2139
        %v2160 = vsel %vm2146, %v2109, %v2141
        %v2161 = vsel %vm2146, %v2111, %v2143
        %v2162 = vsel %vm2146, %v2113, %v2145
        %v2163 = vsel %vm2146, %v2115, %v2083
        %v2164 = vsel %vm2146, %v2117, %v2085
        %v2165 = vsel %vm2146, %v2119, %v2087
        %v2166 = vsel %vm2146, %v2121, %v2089
        %v2167 = vsel %vm2146, %v2123, %v2091
        %v2168 = vsel %vm2146, %v2125, %v2093
        %v2169 = vsel %vm2146, %v2127, %v2095
        %v2170 = vsel %vm2146, %v2129, %v2097
        %v2171 = vsel %vm2146, %v2131, %v2099
        %v2172 = vsel %vm2146, %v2133, %v2101
        %v2173 = vsel %vm2146, %v2135, %v2103
        %v2174 = vsel %vm2146, %v2137, %v2105
        %v2175 = vsel %vm2146, %v2139, %v2107
        %v2176 = vsel %vm2146, %v2141, %v2109
        %v2177 = vsel %vm2146, %v2143, %v2111
        %v2178 = vsel %vm2146, %v2145, %v2113
        %s2179 = scalar_lea.vmem [#allocation10], 5
        %v2180 = vld [vmem:[%s2179] ss:$8 sm:$0x3]
        %v2182 = vlaneseq
        %v2183 = vshrl.u32 %v2182, 7
        %v2184 = vsub.s32 0, %v2183
        %v2185 = vrot.slane %v2180, %v2184
        %v2186 = vlaneseq
        %v2187 = vshrl.u32 %v2186, 7
        %v2188 = vsub.s32 1, %v2187
        %v2189 = vrot.slane %v2180, %v2188
        %v2192 = vadd.f32 %v2147, %v2185
        %v2193 = vadd.f32 %v2163, %v2189
        %v2194 = vadd.f32 %v2148, %v2185
        %v2195 = vadd.f32 %v2164, %v2189
        %v2196 = vadd.f32 %v2149, %v2185
        %v2197 = vadd.f32 %v2165, %v2189
        %v2198 = vadd.f32 %v2150, %v2185
        %v2199 = vadd.f32 %v2166, %v2189
        %v2200 = vadd.f32 %v2151, %v2185
        %v2201 = vadd.f32 %v2167, %v2189
        %v2202 = vadd.f32 %v2152, %v2185
        %v2203 = vadd.f32 %v2168, %v2189
        %v2204 = vadd.f32 %v2153, %v2185
        %v2205 = vadd.f32 %v2169, %v2189
        %v2206 = vadd.f32 %v2154, %v2185
        %v2207 = vadd.f32 %v2170, %v2189
        %v2208 = vadd.f32 %v2155, %v2185
        %v2209 = vadd.f32 %v2171, %v2189
        %v2210 = vadd.f32 %v2156, %v2185
        %v2211 = vadd.f32 %v2172, %v2189
        %v2212 = vadd.f32 %v2157, %v2185
        %v2213 = vadd.f32 %v2173, %v2189
        %v2214 = vadd.f32 %v2158, %v2185
        %v2215 = vadd.f32 %v2174, %v2189
        %v2216 = vadd.f32 %v2159, %v2185
        %v2217 = vadd.f32 %v2175, %v2189
        %v2218 = vadd.f32 %v2160, %v2185
        %v2219 = vadd.f32 %v2176, %v2189
        %v2220 = vadd.f32 %v2161, %v2185
        %v2221 = vadd.f32 %v2177, %v2189
        %v2222 = vadd.f32 %v2162, %v2185
        %v2223 = vadd.f32 %v2178, %v2189
        %v2224 = vmax.f32 %v2050, %v2192
        %v2225 = vmax.f32 %v2051, %v2193
        %v2226 = vmax.f32 %v2052, %v2194
        %v2227 = vmax.f32 %v2053, %v2195
        %v2228 = vmax.f32 %v2054, %v2196
        %v2229 = vmax.f32 %v2055, %v2197
        %v2230 = vmax.f32 %v2056, %v2198
        %v2231 = vmax.f32 %v2057, %v2199
        %v2232 = vmax.f32 %v2058, %v2200
        %v2233 = vmax.f32 %v2059, %v2201
        %v2234 = vmax.f32 %v2060, %v2202
        %v2235 = vmax.f32 %v2061, %v2203
        %v2236 = vmax.f32 %v2062, %v2204
        %v2237 = vmax.f32 %v2063, %v2205
        %v2238 = vmax.f32 %v2064, %v2206
        %v2239 = vmax.f32 %v2065, %v2207
        %v2240 = vmax.f32 %v2066, %v2208
        %v2241 = vmax.f32 %v2067, %v2209
        %v2242 = vmax.f32 %v2068, %v2210
        %v2243 = vmax.f32 %v2069, %v2211
        %v2244 = vmax.f32 %v2070, %v2212
        %v2245 = vmax.f32 %v2071, %v2213
        %v2246 = vmax.f32 %v2072, %v2214
        %v2247 = vmax.f32 %v2073, %v2215
        %v2248 = vmax.f32 %v2074, %v2216
        %v2249 = vmax.f32 %v2075, %v2217
        %v2250 = vmax.f32 %v2076, %v2218
        %v2251 = vmax.f32 %v2077, %v2219
        %v2252 = vmax.f32 %v2078, %v2220
        %v2253 = vmax.f32 %v2079, %v2221
        %v2254 = vmax.f32 %v2080, %v2222
        %v2255 = vmax.f32 %v2081, %v2223
        %2256 = vrot.lane.b32.xlu0 %v359, 112
        %v2257 = vpop.permute.xlu0 %2256
        %2258 = vrot.lane.b32.xlu0 %v361, 112
        %v2259 = vpop.permute.xlu0 %2258
        %2260 = vrot.lane.b32.xlu0 %v363, 112
        %v2261 = vpop.permute.xlu0 %2260
        %2262 = vrot.lane.b32.xlu0 %v365, 112
        %v2263 = vpop.permute.xlu0 %2262
        %2264 = vrot.lane.b32.xlu0 %v367, 112
        %v2265 = vpop.permute.xlu0 %2264
        %2266 = vrot.lane.b32.xlu0 %v369, 112
        %v2267 = vpop.permute.xlu0 %2266
        %2268 = vrot.lane.b32.xlu0 %v371, 112
        %v2269 = vpop.permute.xlu0 %2268
        %2270 = vrot.lane.b32.xlu0 %v373, 112
        %v2271 = vpop.permute.xlu0 %2270
        %2272 = vrot.lane.b32.xlu0 %v375, 112
        %v2273 = vpop.permute.xlu0 %2272
        %2274 = vrot.lane.b32.xlu0 %v377, 112
        %v2275 = vpop.permute.xlu0 %2274
        %2276 = vrot.lane.b32.xlu0 %v379, 112
        %v2277 = vpop.permute.xlu0 %2276
        %2278 = vrot.lane.b32.xlu0 %v381, 112
        %v2279 = vpop.permute.xlu0 %2278
        %2280 = vrot.lane.b32.xlu0 %v383, 112
        %v2281 = vpop.permute.xlu0 %2280
        %2282 = vrot.lane.b32.xlu0 %v385, 112
        %v2283 = vpop.permute.xlu0 %2282
        %2284 = vrot.lane.b32.xlu0 %v387, 112
        %v2285 = vpop.permute.xlu0 %2284
        %2286 = vrot.lane.b32.xlu0 %v389, 112
        %v2287 = vpop.permute.xlu0 %2286
        %2288 = vrot.lane.b32.xlu0 %v360, 112
        %v2289 = vpop.permute.xlu0 %2288
        %2290 = vrot.lane.b32.xlu0 %v362, 112
        %v2291 = vpop.permute.xlu0 %2290
        %2292 = vrot.lane.b32.xlu0 %v364, 112
        %v2293 = vpop.permute.xlu0 %2292
        %2294 = vrot.lane.b32.xlu0 %v366, 112
        %v2295 = vpop.permute.xlu0 %2294
        %2296 = vrot.lane.b32.xlu0 %v368, 112
        %v2297 = vpop.permute.xlu0 %2296
        %2298 = vrot.lane.b32.xlu0 %v370, 112
        %v2299 = vpop.permute.xlu0 %2298
        %2300 = vrot.lane.b32.xlu0 %v372, 112
        %v2301 = vpop.permute.xlu0 %2300
        %2302 = vrot.lane.b32.xlu0 %v374, 112
        %v2303 = vpop.permute.xlu0 %2302
        %2304 = vrot.lane.b32.xlu0 %v376, 112
        %v2305 = vpop.permute.xlu0 %2304
        %2306 = vrot.lane.b32.xlu0 %v378, 112
        %v2307 = vpop.permute.xlu0 %2306
        %2308 = vrot.lane.b32.xlu0 %v380, 112
        %v2309 = vpop.permute.xlu0 %2308
        %2310 = vrot.lane.b32.xlu0 %v382, 112
        %v2311 = vpop.permute.xlu0 %2310
        %2312 = vrot.lane.b32.xlu0 %v384, 112
        %v2313 = vpop.permute.xlu0 %2312
        %2314 = vrot.lane.b32.xlu0 %v386, 112
        %v2315 = vpop.permute.xlu0 %2314
        %2316 = vrot.lane.b32.xlu0 %v388, 112
        %v2317 = vpop.permute.xlu0 %2316
        %2318 = vrot.lane.b32.xlu0 %v390, 112
        %v2319 = vpop.permute.xlu0 %2318
        %vm2320 = vcmp.lt.s32.totalorder %v1276, 112
        %v2321 = vsel %vm2320, %v2257, %v2289
        %v2322 = vsel %vm2320, %v2259, %v2291
        %v2323 = vsel %vm2320, %v2261, %v2293
        %v2324 = vsel %vm2320, %v2263, %v2295
        %v2325 = vsel %vm2320, %v2265, %v2297
        %v2326 = vsel %vm2320, %v2267, %v2299
        %v2327 = vsel %vm2320, %v2269, %v2301
        %v2328 = vsel %vm2320, %v2271, %v2303
        %v2329 = vsel %vm2320, %v2273, %v2305
        %v2330 = vsel %vm2320, %v2275, %v2307
        %v2331 = vsel %vm2320, %v2277, %v2309
        %v2332 = vsel %vm2320, %v2279, %v2311
        %v2333 = vsel %vm2320, %v2281, %v2313
        %v2334 = vsel %vm2320, %v2283, %v2315
        %v2335 = vsel %vm2320, %v2285, %v2317
        %v2336 = vsel %vm2320, %v2287, %v2319
        %v2337 = vsel %vm2320, %v2289, %v2257
        %v2338 = vsel %vm2320, %v2291, %v2259
        %v2339 = vsel %vm2320, %v2293, %v2261
        %v2340 = vsel %vm2320, %v2295, %v2263
        %v2341 = vsel %vm2320, %v2297, %v2265
        %v2342 = vsel %vm2320, %v2299, %v2267
        %v2343 = vsel %vm2320, %v2301, %v2269
        %v2344 = vsel %vm2320, %v2303, %v2271
        %v2345 = vsel %vm2320, %v2305, %v2273
        %v2346 = vsel %vm2320, %v2307, %v2275
        %v2347 = vsel %vm2320, %v2309, %v2277
        %v2348 = vsel %vm2320, %v2311, %v2279
        %v2349 = vsel %vm2320, %v2313, %v2281
        %v2350 = vsel %vm2320, %v2315, %v2283
        %v2351 = vsel %vm2320, %v2317, %v2285
        %v2352 = vsel %vm2320, %v2319, %v2287
        %s2353 = scalar_lea.vmem [#allocation10], 6
        %v2354 = vld [vmem:[%s2353] ss:$8 sm:$0x3]
        %v2356 = vlaneseq
        %v2357 = vshrl.u32 %v2356, 7
        %v2358 = vsub.s32 0, %v2357
        %v2359 = vrot.slane %v2354, %v2358
        %v2360 = vlaneseq
        %v2361 = vshrl.u32 %v2360, 7
        %v2362 = vsub.s32 1, %v2361
        %v2363 = vrot.slane %v2354, %v2362
        %v2366 = vadd.f32 %v2321, %v2359
        %v2367 = vadd.f32 %v2337, %v2363
        %v2368 = vadd.f32 %v2322, %v2359
        %v2369 = vadd.f32 %v2338, %v2363
        %v2370 = vadd.f32 %v2323, %v2359
        %v2371 = vadd.f32 %v2339, %v2363
        %v2372 = vadd.f32 %v2324, %v2359
        %v2373 = vadd.f32 %v2340, %v2363
        %v2374 = vadd.f32 %v2325, %v2359
        %v2375 = vadd.f32 %v2341, %v2363
        %v2376 = vadd.f32 %v2326, %v2359
        %v2377 = vadd.f32 %v2342, %v2363
        %v2378 = vadd.f32 %v2327, %v2359
        %v2379 = vadd.f32 %v2343, %v2363
        %v2380 = vadd.f32 %v2328, %v2359
        %v2381 = vadd.f32 %v2344, %v2363
        %v2382 = vadd.f32 %v2329, %v2359
        %v2383 = vadd.f32 %v2345, %v2363
        %v2384 = vadd.f32 %v2330, %v2359
        %v2385 = vadd.f32 %v2346, %v2363
        %v2386 = vadd.f32 %v2331, %v2359
        %v2387 = vadd.f32 %v2347, %v2363
        %v2388 = vadd.f32 %v2332, %v2359
        %v2389 = vadd.f32 %v2348, %v2363
        %v2390 = vadd.f32 %v2333, %v2359
        %v2391 = vadd.f32 %v2349, %v2363
        %v2392 = vadd.f32 %v2334, %v2359
        %v2393 = vadd.f32 %v2350, %v2363
        %v2394 = vadd.f32 %v2335, %v2359
        %v2395 = vadd.f32 %v2351, %v2363
        %v2396 = vadd.f32 %v2336, %v2359
        %v2397 = vadd.f32 %v2352, %v2363
        %v2398 = vmax.f32 %v2224, %v2366
        %v2399 = vmax.f32 %v2225, %v2367
        %v2400 = vmax.f32 %v2226, %v2368
        %v2401 = vmax.f32 %v2227, %v2369
        %v2402 = vmax.f32 %v2228, %v2370
        %v2403 = vmax.f32 %v2229, %v2371
        %v2404 = vmax.f32 %v2230, %v2372
        %v2405 = vmax.f32 %v2231, %v2373
        %v2406 = vmax.f32 %v2232, %v2374
        %v2407 = vmax.f32 %v2233, %v2375
        %v2408 = vmax.f32 %v2234, %v2376
        %v2409 = vmax.f32 %v2235, %v2377
        %v2410 = vmax.f32 %v2236, %v2378
        %v2411 = vmax.f32 %v2237, %v2379
        %v2412 = vmax.f32 %v2238, %v2380
        %v2413 = vmax.f32 %v2239, %v2381
        %v2414 = vmax.f32 %v2240, %v2382
        %v2415 = vmax.f32 %v2241, %v2383
        %v2416 = vmax.f32 %v2242, %v2384
        %v2417 = vmax.f32 %v2243, %v2385
        %v2418 = vmax.f32 %v2244, %v2386
        %v2419 = vmax.f32 %v2245, %v2387
        %v2420 = vmax.f32 %v2246, %v2388
        %v2421 = vmax.f32 %v2247, %v2389
        %v2422 = vmax.f32 %v2248, %v2390
        %v2423 = vmax.f32 %v2249, %v2391
        %v2424 = vmax.f32 %v2250, %v2392
        %v2425 = vmax.f32 %v2251, %v2393
        %v2426 = vmax.f32 %v2252, %v2394
        %v2427 = vmax.f32 %v2253, %v2395
        %v2428 = vmax.f32 %v2254, %v2396
        %v2429 = vmax.f32 %v2255, %v2397
        %2430 = vrot.lane.b32.xlu0 %v359, 111
        %v2431 = vpop.permute.xlu0 %2430
        %2432 = vrot.lane.b32.xlu0 %v361, 111
        %v2433 = vpop.permute.xlu0 %2432
        %2434 = vrot.lane.b32.xlu0 %v363, 111
        %v2435 = vpop.permute.xlu0 %2434
        %2436 = vrot.lane.b32.xlu0 %v365, 111
        %v2437 = vpop.permute.xlu0 %2436
        %2438 = vrot.lane.b32.xlu0 %v367, 111
        %v2439 = vpop.permute.xlu0 %2438
        %2440 = vrot.lane.b32.xlu0 %v369, 111
        %v2441 = vpop.permute.xlu0 %2440
        %2442 = vrot.lane.b32.xlu0 %v371, 111
        %v2443 = vpop.permute.xlu0 %2442
        %2444 = vrot.lane.b32.xlu0 %v373, 111
        %v2445 = vpop.permute.xlu0 %2444
        %2446 = vrot.lane.b32.xlu0 %v375, 111
        %v2447 = vpop.permute.xlu0 %2446
        %2448 = vrot.lane.b32.xlu0 %v377, 111
        %v2449 = vpop.permute.xlu0 %2448
        %2450 = vrot.lane.b32.xlu0 %v379, 111
        %v2451 = vpop.permute.xlu0 %2450
        %2452 = vrot.lane.b32.xlu0 %v381, 111
        %v2453 = vpop.permute.xlu0 %2452
        %2454 = vrot.lane.b32.xlu0 %v383, 111
        %v2455 = vpop.permute.xlu0 %2454
        %2456 = vrot.lane.b32.xlu0 %v385, 111
        %v2457 = vpop.permute.xlu0 %2456
        %2458 = vrot.lane.b32.xlu0 %v387, 111
        %v2459 = vpop.permute.xlu0 %2458
        %2460 = vrot.lane.b32.xlu0 %v389, 111
        %v2461 = vpop.permute.xlu0 %2460
        %2462 = vrot.lane.b32.xlu0 %v360, 111
        %v2463 = vpop.permute.xlu0 %2462
        %2464 = vrot.lane.b32.xlu0 %v362, 111
        %v2465 = vpop.permute.xlu0 %2464
        %2466 = vrot.lane.b32.xlu0 %v364, 111
        %v2467 = vpop.permute.xlu0 %2466
        %2468 = vrot.lane.b32.xlu0 %v366, 111
        %v2469 = vpop.permute.xlu0 %2468
        %2470 = vrot.lane.b32.xlu0 %v368, 111
        %v2471 = vpop.permute.xlu0 %2470
        %2472 = vrot.lane.b32.xlu0 %v370, 111
        %v2473 = vpop.permute.xlu0 %2472
        %2474 = vrot.lane.b32.xlu0 %v372, 111
        %v2475 = vpop.permute.xlu0 %2474
        %2476 = vrot.lane.b32.xlu0 %v374, 111
        %v2477 = vpop.permute.xlu0 %2476
        %2478 = vrot.lane.b32.xlu0 %v376, 111
        %v2479 = vpop.permute.xlu0 %2478
        %2480 = vrot.lane.b32.xlu0 %v378, 111
        %v2481 = vpop.permute.xlu0 %2480
        %2482 = vrot.lane.b32.xlu0 %v380, 111
        %v2483 = vpop.permute.xlu0 %2482
        %2484 = vrot.lane.b32.xlu0 %v382, 111
        %v2485 = vpop.permute.xlu0 %2484
        %2486 = vrot.lane.b32.xlu0 %v384, 111
        %v2487 = vpop.permute.xlu0 %2486
        %2488 = vrot.lane.b32.xlu0 %v386, 111
        %v2489 = vpop.permute.xlu0 %2488
        %2490 = vrot.lane.b32.xlu0 %v388, 111
        %v2491 = vpop.permute.xlu0 %2490
        %2492 = vrot.lane.b32.xlu0 %v390, 111
        %v2493 = vpop.permute.xlu0 %2492
        %vm2494 = vcmp.lt.s32.totalorder %v1276, 111
        %v2495 = vsel %vm2494, %v2431, %v2463
        %v2496 = vsel %vm2494, %v2433, %v2465
        %v2497 = vsel %vm2494, %v2435, %v2467
        %v2498 = vsel %vm2494, %v2437, %v2469
        %v2499 = vsel %vm2494, %v2439, %v2471
        %v2500 = vsel %vm2494, %v2441, %v2473
        %v2501 = vsel %vm2494, %v2443, %v2475
        %v2502 = vsel %vm2494, %v2445, %v2477
        %v2503 = vsel %vm2494, %v2447, %v2479
        %v2504 = vsel %vm2494, %v2449, %v2481
        %v2505 = vsel %vm2494, %v2451, %v2483
        %v2506 = vsel %vm2494, %v2453, %v2485
        %v2507 = vsel %vm2494, %v2455, %v2487
        %v2508 = vsel %vm2494, %v2457, %v2489
        %v2509 = vsel %vm2494, %v2459, %v2491
        %v2510 = vsel %vm2494, %v2461, %v2493
        %v2511 = vsel %vm2494, %v2463, %v2431
        %v2512 = vsel %vm2494, %v2465, %v2433
        %v2513 = vsel %vm2494, %v2467, %v2435
        %v2514 = vsel %vm2494, %v2469, %v2437
        %v2515 = vsel %vm2494, %v2471, %v2439
        %v2516 = vsel %vm2494, %v2473, %v2441
        %v2517 = vsel %vm2494, %v2475, %v2443
        %v2518 = vsel %vm2494, %v2477, %v2445
        %v2519 = vsel %vm2494, %v2479, %v2447
        %v2520 = vsel %vm2494, %v2481, %v2449
        %v2521 = vsel %vm2494, %v2483, %v2451
        %v2522 = vsel %vm2494, %v2485, %v2453
        %v2523 = vsel %vm2494, %v2487, %v2455
        %v2524 = vsel %vm2494, %v2489, %v2457
        %v2525 = vsel %vm2494, %v2491, %v2459
        %v2526 = vsel %vm2494, %v2493, %v2461
        %s2527 = scalar_lea.vmem [#allocation10], 7
        %v2528 = vld [vmem:[%s2527] ss:$8 sm:$0x3]
        %v2530 = vlaneseq
        %v2531 = vshrl.u32 %v2530, 7
        %v2532 = vsub.s32 0, %v2531
        %v2533 = vrot.slane %v2528, %v2532
        %v2534 = vlaneseq
        %v2535 = vshrl.u32 %v2534, 7
        %v2536 = vsub.s32 1, %v2535
        %v2537 = vrot.slane %v2528, %v2536
        %v2540 = vadd.f32 %v2495, %v2533
        %v2541 = vadd.f32 %v2511, %v2537
        %v2542 = vadd.f32 %v2496, %v2533
        %v2543 = vadd.f32 %v2512, %v2537
        %v2544 = vadd.f32 %v2497, %v2533
        %v2545 = vadd.f32 %v2513, %v2537
        %v2546 = vadd.f32 %v2498, %v2533
        %v2547 = vadd.f32 %v2514, %v2537
        %v2548 = vadd.f32 %v2499, %v2533
        %v2549 = vadd.f32 %v2515, %v2537
        %v2550 = vadd.f32 %v2500, %v2533
        %v2551 = vadd.f32 %v2516, %v2537
        %v2552 = vadd.f32 %v2501, %v2533
        %v2553 = vadd.f32 %v2517, %v2537
        %v2554 = vadd.f32 %v2502, %v2533
        %v2555 = vadd.f32 %v2518, %v2537
        %v2556 = vadd.f32 %v2503, %v2533
        %v2557 = vadd.f32 %v2519, %v2537
        %v2558 = vadd.f32 %v2504, %v2533
        %v2559 = vadd.f32 %v2520, %v2537
        %v2560 = vadd.f32 %v2505, %v2533
        %v2561 = vadd.f32 %v2521, %v2537
        %v2562 = vadd.f32 %v2506, %v2533
        %v2563 = vadd.f32 %v2522, %v2537
        %v2564 = vadd.f32 %v2507, %v2533
        %v2565 = vadd.f32 %v2523, %v2537
        %v2566 = vadd.f32 %v2508, %v2533
        %v2567 = vadd.f32 %v2524, %v2537
        %v2568 = vadd.f32 %v2509, %v2533
        %v2569 = vadd.f32 %v2525, %v2537
        %v2570 = vadd.f32 %v2510, %v2533
        %v2571 = vadd.f32 %v2526, %v2537
        %v2572 = vmax.f32 %v2398, %v2540
        %v2573 = vmax.f32 %v2399, %v2541
        %v2574 = vmax.f32 %v2400, %v2542
        %v2575 = vmax.f32 %v2401, %v2543
        %v2576 = vmax.f32 %v2402, %v2544
        %v2577 = vmax.f32 %v2403, %v2545
        %v2578 = vmax.f32 %v2404, %v2546
        %v2579 = vmax.f32 %v2405, %v2547
        %v2580 = vmax.f32 %v2406, %v2548
        %v2581 = vmax.f32 %v2407, %v2549
        %v2582 = vmax.f32 %v2408, %v2550
        %v2583 = vmax.f32 %v2409, %v2551
        %v2584 = vmax.f32 %v2410, %v2552
        %v2585 = vmax.f32 %v2411, %v2553
        %v2586 = vmax.f32 %v2412, %v2554
        %v2587 = vmax.f32 %v2413, %v2555
        %v2588 = vmax.f32 %v2414, %v2556
        %v2589 = vmax.f32 %v2415, %v2557
        %v2590 = vmax.f32 %v2416, %v2558
        %v2591 = vmax.f32 %v2417, %v2559
        %v2592 = vmax.f32 %v2418, %v2560
        %v2593 = vmax.f32 %v2419, %v2561
        %v2594 = vmax.f32 %v2420, %v2562
        %v2595 = vmax.f32 %v2421, %v2563
        %v2596 = vmax.f32 %v2422, %v2564
        %v2597 = vmax.f32 %v2423, %v2565
        %v2598 = vmax.f32 %v2424, %v2566
        %v2599 = vmax.f32 %v2425, %v2567
        %v2600 = vmax.f32 %v2426, %v2568
        %v2601 = vmax.f32 %v2427, %v2569
        %v2602 = vmax.f32 %v2428, %v2570
        %v2603 = vmax.f32 %v2429, %v2571
        %v2604 = vstv %s399
        %v2605 = vmul.f32 %v2604, %v2572
        %v2606 = vmul.f32 %v2604, %v2573
        %v2607 = vmul.f32 %v2604, %v2574
        %v2608 = vmul.f32 %v2604, %v2575
        %v2609 = vmul.f32 %v2604, %v2576
        %v2610 = vmul.f32 %v2604, %v2577
        %v2611 = vmul.f32 %v2604, %v2578
        %v2612 = vmul.f32 %v2604, %v2579
        %v2613 = vmul.f32 %v2604, %v2580
        %v2614 = vmul.f32 %v2604, %v2581
        %v2615 = vmul.f32 %v2604, %v2582
        %v2616 = vmul.f32 %v2604, %v2583
        %v2617 = vmul.f32 %v2604, %v2584
        %v2618 = vmul.f32 %v2604, %v2585
        %v2619 = vmul.f32 %v2604, %v2586
        %v2620 = vmul.f32 %v2604, %v2587
        %v2621 = vmul.f32 %v2604, %v2588
        %v2622 = vmul.f32 %v2604, %v2589
        %v2623 = vmul.f32 %v2604, %v2590
        %v2624 = vmul.f32 %v2604, %v2591
        %v2625 = vmul.f32 %v2604, %v2592
        %v2626 = vmul.f32 %v2604, %v2593
        %v2627 = vmul.f32 %v2604, %v2594
        %v2628 = vmul.f32 %v2604, %v2595
        %v2629 = vmul.f32 %v2604, %v2596
        %v2630 = vmul.f32 %v2604, %v2597
        %v2631 = vmul.f32 %v2604, %v2598
        %v2632 = vmul.f32 %v2604, %v2599
        %v2633 = vmul.f32 %v2604, %v2600
        %v2634 = vmul.f32 %v2604, %v2601
        %v2635 = vmul.f32 %v2604, %v2602
        %v2636 = vmul.f32 %v2604, %v2603
        %v2637 = vstv %s400
        %v2638 = vadd.f32 %v2605, %v2637
        %v2639 = vadd.f32 %v2606, %v2637
        %v2640 = vadd.f32 %v2607, %v2637
        %v2641 = vadd.f32 %v2608, %v2637
        %v2642 = vadd.f32 %v2609, %v2637
        %v2643 = vadd.f32 %v2610, %v2637
        %v2644 = vadd.f32 %v2611, %v2637
        %v2645 = vadd.f32 %v2612, %v2637
        %v2646 = vadd.f32 %v2613, %v2637
        %v2647 = vadd.f32 %v2614, %v2637
        %v2648 = vadd.f32 %v2615, %v2637
        %v2649 = vadd.f32 %v2616, %v2637
        %v2650 = vadd.f32 %v2617, %v2637
        %v2651 = vadd.f32 %v2618, %v2637
        %v2652 = vadd.f32 %v2619, %v2637
        %v2653 = vadd.f32 %v2620, %v2637
        %v2654 = vadd.f32 %v2621, %v2637
        %v2655 = vadd.f32 %v2622, %v2637
        %v2656 = vadd.f32 %v2623, %v2637
        %v2657 = vadd.f32 %v2624, %v2637
        %v2658 = vadd.f32 %v2625, %v2637
        %v2659 = vadd.f32 %v2626, %v2637
        %v2660 = vadd.f32 %v2627, %v2637
        %v2661 = vadd.f32 %v2628, %v2637
        %v2662 = vadd.f32 %v2629, %v2637
        %v2663 = vadd.f32 %v2630, %v2637
        %v2664 = vadd.f32 %v2631, %v2637
        %v2665 = vadd.f32 %v2632, %v2637
        %v2666 = vadd.f32 %v2633, %v2637
        %v2667 = vadd.f32 %v2634, %v2637
        %v2668 = vadd.f32 %v2635, %v2637
        %v2669 = vadd.f32 %v2636, %v2637
        %v2670 = vmax.f32 %v2638, 0.0
        %v2671 = vmax.f32 %v2639, 0.0
        %v2672 = vmax.f32 %v2640, 0.0
        %v2673 = vmax.f32 %v2641, 0.0
        %v2674 = vmax.f32 %v2642, 0.0
        %v2675 = vmax.f32 %v2643, 0.0
        %v2676 = vmax.f32 %v2644, 0.0
        %v2677 = vmax.f32 %v2645, 0.0
        %v2678 = vmax.f32 %v2646, 0.0
        %v2679 = vmax.f32 %v2647, 0.0
        %v2680 = vmax.f32 %v2648, 0.0
        %v2681 = vmax.f32 %v2649, 0.0
        %v2682 = vmax.f32 %v2650, 0.0
        %v2683 = vmax.f32 %v2651, 0.0
        %v2684 = vmax.f32 %v2652, 0.0
        %v2685 = vmax.f32 %v2653, 0.0
        %v2686 = vmax.f32 %v2654, 0.0
        %v2687 = vmax.f32 %v2655, 0.0
        %v2688 = vmax.f32 %v2656, 0.0
        %v2689 = vmax.f32 %v2657, 0.0
        %v2690 = vmax.f32 %v2658, 0.0
        %v2691 = vmax.f32 %v2659, 0.0
        %v2692 = vmax.f32 %v2660, 0.0
        %v2693 = vmax.f32 %v2661, 0.0
        %v2694 = vmax.f32 %v2662, 0.0
        %v2695 = vmax.f32 %v2663, 0.0
        %v2696 = vmax.f32 %v2664, 0.0
        %v2697 = vmax.f32 %v2665, 0.0
        %v2698 = vmax.f32 %v2666, 0.0
        %v2699 = vmax.f32 %v2667, 0.0
        %v2700 = vmax.f32 %v2668, 0.0
        %v2701 = vmax.f32 %v2669, 0.0
        %v2702 = vld [vmem:[%s5] ss:$4 sm:$0x3]
        %v2704 = vlaneseq
        %v2705 = vshrl.u32 %v2704, 7
        %v2706 = vsub.s32 0, %v2705
        %v2707 = vrot.slane %v2702, %v2706
        %v2708 = vlaneseq
        %v2709 = vshrl.u32 %v2708, 7
        %v2710 = vsub.s32 1, %v2709
        %v2711 = vrot.slane %v2702, %v2710
        %v2714 = vmul.f32 %v467, %v2707
        %v2715 = vmul.f32 %v468, %v2711
        %v2716 = vmul.f32 %v469, %v2707
        %v2717 = vmul.f32 %v470, %v2711
        %v2718 = vmul.f32 %v471, %v2707
        %v2719 = vmul.f32 %v472, %v2711
        %v2720 = vmul.f32 %v473, %v2707
        %v2721 = vmul.f32 %v474, %v2711
        %v2722 = vmul.f32 %v475, %v2707
        %v2723 = vmul.f32 %v476, %v2711
        %v2724 = vmul.f32 %v477, %v2707
        %v2725 = vmul.f32 %v478, %v2711
        %v2726 = vmul.f32 %v479, %v2707
        %v2727 = vmul.f32 %v480, %v2711
        %v2728 = vmul.f32 %v481, %v2707
        %v2729 = vmul.f32 %v482, %v2711
        %v2730 = vmul.f32 %v483, %v2707
        %v2731 = vmul.f32 %v484, %v2711
        %v2732 = vmul.f32 %v485, %v2707
        %v2733 = vmul.f32 %v486, %v2711
        %v2734 = vmul.f32 %v487, %v2707
        %v2735 = vmul.f32 %v488, %v2711
        %v2736 = vmul.f32 %v489, %v2707
        %v2737 = vmul.f32 %v490, %v2711
        %v2738 = vmul.f32 %v491, %v2707
        %v2739 = vmul.f32 %v492, %v2711
        %v2740 = vmul.f32 %v493, %v2707
        %v2741 = vmul.f32 %v494, %v2711
        %v2742 = vmul.f32 %v495, %v2707
        %v2743 = vmul.f32 %v496, %v2711
        %v2744 = vmul.f32 %v497, %v2707
        %v2745 = vmul.f32 %v498, %v2711
        %s2746 = scalar_lea.vmem %s5, 1
        %v2747 = vld [vmem:[%s2746] ss:$4 sm:$0x3]
        %v2749 = vlaneseq
        %v2750 = vshrl.u32 %v2749, 7
        %v2751 = vsub.s32 0, %v2750
        %v2752 = vrot.slane %v2747, %v2751
        %v2753 = vlaneseq
        %v2754 = vshrl.u32 %v2753, 7
        %v2755 = vsub.s32 1, %v2754
        %v2756 = vrot.slane %v2747, %v2755
        %v2759 = vmul.f32 %v823, %v2752
        %v2760 = vmul.f32 %v824, %v2756
        %v2761 = vmul.f32 %v825, %v2752
        %v2762 = vmul.f32 %v826, %v2756
        %v2763 = vmul.f32 %v827, %v2752
        %v2764 = vmul.f32 %v828, %v2756
        %v2765 = vmul.f32 %v829, %v2752
        %v2766 = vmul.f32 %v830, %v2756
        %v2767 = vmul.f32 %v831, %v2752
        %v2768 = vmul.f32 %v832, %v2756
        %v2769 = vmul.f32 %v833, %v2752
        %v2770 = vmul.f32 %v834, %v2756
        %v2771 = vmul.f32 %v835, %v2752
        %v2772 = vmul.f32 %v836, %v2756
        %v2773 = vmul.f32 %v837, %v2752
        %v2774 = vmul.f32 %v838, %v2756
        %v2775 = vmul.f32 %v839, %v2752
        %v2776 = vmul.f32 %v840, %v2756
        %v2777 = vmul.f32 %v841, %v2752
        %v2778 = vmul.f32 %v842, %v2756
        %v2779 = vmul.f32 %v843, %v2752
        %v2780 = vmul.f32 %v844, %v2756
        %v2781 = vmul.f32 %v845, %v2752
        %v2782 = vmul.f32 %v846, %v2756
        %v2783 = vmul.f32 %v847, %v2752
        %v2784 = vmul.f32 %v848, %v2756
        %v2785 = vmul.f32 %v849, %v2752
        %v2786 = vmul.f32 %v850, %v2756
        %v2787 = vmul.f32 %v851, %v2752
        %v2788 = vmul.f32 %v852, %v2756
        %v2789 = vmul.f32 %v853, %v2752
        %v2790 = vmul.f32 %v854, %v2756
        %v2791 = vadd.f32 %v2714, %v2759
        %v2792 = vadd.f32 %v2715, %v2760
        %v2793 = vadd.f32 %v2716, %v2761
        %v2794 = vadd.f32 %v2717, %v2762
        %v2795 = vadd.f32 %v2718, %v2763
        %v2796 = vadd.f32 %v2719, %v2764
        %v2797 = vadd.f32 %v2720, %v2765
        %v2798 = vadd.f32 %v2721, %v2766
        %v2799 = vadd.f32 %v2722, %v2767
        %v2800 = vadd.f32 %v2723, %v2768
        %v2801 = vadd.f32 %v2724, %v2769
        %v2802 = vadd.f32 %v2725, %v2770
        %v2803 = vadd.f32 %v2726, %v2771
        %v2804 = vadd.f32 %v2727, %v2772
        %v2805 = vadd.f32 %v2728, %v2773
        %v2806 = vadd.f32 %v2729, %v2774
        %v2807 = vadd.f32 %v2730, %v2775
        %v2808 = vadd.f32 %v2731, %v2776
        %v2809 = vadd.f32 %v2732, %v2777
        %v2810 = vadd.f32 %v2733, %v2778
        %v2811 = vadd.f32 %v2734, %v2779
        %v2812 = vadd.f32 %v2735, %v2780
        %v2813 = vadd.f32 %v2736, %v2781
        %v2814 = vadd.f32 %v2737, %v2782
        %v2815 = vadd.f32 %v2738, %v2783
        %v2816 = vadd.f32 %v2739, %v2784
        %v2817 = vadd.f32 %v2740, %v2785
        %v2818 = vadd.f32 %v2741, %v2786
        %v2819 = vadd.f32 %v2742, %v2787
        %v2820 = vadd.f32 %v2743, %v2788
        %v2821 = vadd.f32 %v2744, %v2789
        %v2822 = vadd.f32 %v2745, %v2790
        %s2823 = scalar_lea.vmem %s5, 2
        %v2824 = vld [vmem:[%s2823] ss:$4 sm:$0x3]
        %v2826 = vlaneseq
        %v2827 = vshrl.u32 %v2826, 7
        %v2828 = vsub.s32 0, %v2827
        %v2829 = vrot.slane %v2824, %v2828
        %v2830 = vlaneseq
        %v2831 = vshrl.u32 %v2830, 7
        %v2832 = vsub.s32 1, %v2831
        %v2833 = vrot.slane %v2824, %v2832
        %v2836 = vmul.f32 %v1179, %v2829
        %v2837 = vmul.f32 %v1180, %v2833
        %v2838 = vmul.f32 %v1181, %v2829
        %v2839 = vmul.f32 %v1182, %v2833
        %v2840 = vmul.f32 %v1183, %v2829
        %v2841 = vmul.f32 %v1184, %v2833
        %v2842 = vmul.f32 %v1185, %v2829
        %v2843 = vmul.f32 %v1186, %v2833
        %v2844 = vmul.f32 %v1187, %v2829
        %v2845 = vmul.f32 %v1188, %v2833
        %v2846 = vmul.f32 %v1189, %v2829
        %v2847 = vmul.f32 %v1190, %v2833
        %v2848 = vmul.f32 %v1191, %v2829
        %v2849 = vmul.f32 %v1192, %v2833
        %v2850 = vmul.f32 %v1193, %v2829
        %v2851 = vmul.f32 %v1194, %v2833
        %v2852 = vmul.f32 %v1195, %v2829
        %v2853 = vmul.f32 %v1196, %v2833
        %v2854 = vmul.f32 %v1197, %v2829
        %v2855 = vmul.f32 %v1198, %v2833
        %v2856 = vmul.f32 %v1199, %v2829
        %v2857 = vmul.f32 %v1200, %v2833
        %v2858 = vmul.f32 %v1201, %v2829
        %v2859 = vmul.f32 %v1202, %v2833
        %v2860 = vmul.f32 %v1203, %v2829
        %v2861 = vmul.f32 %v1204, %v2833
        %v2862 = vmul.f32 %v1205, %v2829
        %v2863 = vmul.f32 %v1206, %v2833
        %v2864 = vmul.f32 %v1207, %v2829
        %v2865 = vmul.f32 %v1208, %v2833
        %v2866 = vmul.f32 %v1209, %v2829
        %v2867 = vmul.f32 %v1210, %v2833
        %v2868 = vadd.f32 %v2791, %v2836
        %v2869 = vadd.f32 %v2792, %v2837
        %v2870 = vadd.f32 %v2793, %v2838
        %v2871 = vadd.f32 %v2794, %v2839
        %v2872 = vadd.f32 %v2795, %v2840
        %v2873 = vadd.f32 %v2796, %v2841
        %v2874 = vadd.f32 %v2797, %v2842
        %v2875 = vadd.f32 %v2798, %v2843
        %v2876 = vadd.f32 %v2799, %v2844
        %v2877 = vadd.f32 %v2800, %v2845
        %v2878 = vadd.f32 %v2801, %v2846
        %v2879 = vadd.f32 %v2802, %v2847
        %v2880 = vadd.f32 %v2803, %v2848
        %v2881 = vadd.f32 %v2804, %v2849
        %v2882 = vadd.f32 %v2805, %v2850
        %v2883 = vadd.f32 %v2806, %v2851
        %v2884 = vadd.f32 %v2807, %v2852
        %v2885 = vadd.f32 %v2808, %v2853
        %v2886 = vadd.f32 %v2809, %v2854
        %v2887 = vadd.f32 %v2810, %v2855
        %v2888 = vadd.f32 %v2811, %v2856
        %v2889 = vadd.f32 %v2812, %v2857
        %v2890 = vadd.f32 %v2813, %v2858
        %v2891 = vadd.f32 %v2814, %v2859
        %v2892 = vadd.f32 %v2815, %v2860
        %v2893 = vadd.f32 %v2816, %v2861
        %v2894 = vadd.f32 %v2817, %v2862
        %v2895 = vadd.f32 %v2818, %v2863
        %v2896 = vadd.f32 %v2819, %v2864
        %v2897 = vadd.f32 %v2820, %v2865
        %v2898 = vadd.f32 %v2821, %v2866
        %v2899 = vadd.f32 %v2822, %v2867
        %s2900 = scalar_lea.vmem %s5, 3
        %v2901 = vld [vmem:[%s2900] ss:$4 sm:$0x3]
        %v2903 = vlaneseq
        %v2904 = vshrl.u32 %v2903, 7
        %v2905 = vsub.s32 0, %v2904
        %v2906 = vrot.slane %v2901, %v2905
        %v2907 = vlaneseq
        %v2908 = vshrl.u32 %v2907, 7
        %v2909 = vsub.s32 1, %v2908
        %v2910 = vrot.slane %v2901, %v2909
        %v2913 = vmul.f32 %v2670, %v2906
        %v2914 = vmul.f32 %v2671, %v2910
        %v2915 = vmul.f32 %v2672, %v2906
        %v2916 = vmul.f32 %v2673, %v2910
        %v2917 = vmul.f32 %v2674, %v2906
        %v2918 = vmul.f32 %v2675, %v2910
        %v2919 = vmul.f32 %v2676, %v2906
        %v2920 = vmul.f32 %v2677, %v2910
        %v2921 = vmul.f32 %v2678, %v2906
        %v2922 = vmul.f32 %v2679, %v2910
        %v2923 = vmul.f32 %v2680, %v2906
        %v2924 = vmul.f32 %v2681, %v2910
        %v2925 = vmul.f32 %v2682, %v2906
        %v2926 = vmul.f32 %v2683, %v2910
        %v2927 = vmul.f32 %v2684, %v2906
        %v2928 = vmul.f32 %v2685, %v2910
        %v2929 = vmul.f32 %v2686, %v2906
        %v2930 = vmul.f32 %v2687, %v2910
        %v2931 = vmul.f32 %v2688, %v2906
        %v2932 = vmul.f32 %v2689, %v2910
        %v2933 = vmul.f32 %v2690, %v2906
        %v2934 = vmul.f32 %v2691, %v2910
        %v2935 = vmul.f32 %v2692, %v2906
        %v2936 = vmul.f32 %v2693, %v2910
        %v2937 = vmul.f32 %v2694, %v2906
        %v2938 = vmul.f32 %v2695, %v2910
        %v2939 = vmul.f32 %v2696, %v2906
        %v2940 = vmul.f32 %v2697, %v2910
        %v2941 = vmul.f32 %v2698, %v2906
        %v2942 = vmul.f32 %v2699, %v2910
        %v2943 = vmul.f32 %v2700, %v2906
        %v2944 = vmul.f32 %v2701, %v2910
        %v2945 = vadd.f32 %v2868, %v2913
        %v2946 = vadd.f32 %v2869, %v2914
        %v2947 = vadd.f32 %v2870, %v2915
        %v2948 = vadd.f32 %v2871, %v2916
        %v2949 = vadd.f32 %v2872, %v2917
        %v2950 = vadd.f32 %v2873, %v2918
        %v2951 = vadd.f32 %v2874, %v2919
        %v2952 = vadd.f32 %v2875, %v2920
        %v2953 = vadd.f32 %v2876, %v2921
        %v2954 = vadd.f32 %v2877, %v2922
        %v2955 = vadd.f32 %v2878, %v2923
        %v2956 = vadd.f32 %v2879, %v2924
        %v2957 = vadd.f32 %v2880, %v2925
        %v2958 = vadd.f32 %v2881, %v2926
        %v2959 = vadd.f32 %v2882, %v2927
        %v2960 = vadd.f32 %v2883, %v2928
        %v2961 = vadd.f32 %v2884, %v2929
        %v2962 = vadd.f32 %v2885, %v2930
        %v2963 = vadd.f32 %v2886, %v2931
        %v2964 = vadd.f32 %v2887, %v2932
        %v2965 = vadd.f32 %v2888, %v2933
        %v2966 = vadd.f32 %v2889, %v2934
        %v2967 = vadd.f32 %v2890, %v2935
        %v2968 = vadd.f32 %v2891, %v2936
        %v2969 = vadd.f32 %v2892, %v2937
        %v2970 = vadd.f32 %v2893, %v2938
        %v2971 = vadd.f32 %v2894, %v2939
        %v2972 = vadd.f32 %v2895, %v2940
        %v2973 = vadd.f32 %v2896, %v2941
        %v2974 = vadd.f32 %v2897, %v2942
        %v2975 = vadd.f32 %v2898, %v2943
        %v2976 = vadd.f32 %v2899, %v2944
        %v2977 = vadd.f32 %v2945, %v2946
        %2978 = vadd.xlane.f32.xlu0 %v2977
        %v2979 = vpop.xlane.xlu0 %2978
        %v2980 = vadd.f32 %v2947, %v2948
        %2981 = vadd.xlane.f32.xlu0 %v2980
        %v2982 = vpop.xlane.xlu0 %2981
        %v2983 = vadd.f32 %v2949, %v2950
        %2984 = vadd.xlane.f32.xlu0 %v2983
        %v2985 = vpop.xlane.xlu0 %2984
        %v2986 = vadd.f32 %v2951, %v2952
        %2987 = vadd.xlane.f32.xlu0 %v2986
        %v2988 = vpop.xlane.xlu0 %2987
        %v2989 = vadd.f32 %v2953, %v2954
        %2990 = vadd.xlane.f32.xlu0 %v2989
        %v2991 = vpop.xlane.xlu0 %2990
        %v2992 = vadd.f32 %v2955, %v2956
        %2993 = vadd.xlane.f32.xlu0 %v2992
        %v2994 = vpop.xlane.xlu0 %2993
        %v2995 = vadd.f32 %v2957, %v2958
        %2996 = vadd.xlane.f32.xlu0 %v2995
        %v2997 = vpop.xlane.xlu0 %2996
        %v2998 = vadd.f32 %v2959, %v2960
        %2999 = vadd.xlane.f32.xlu0 %v2998
        %v3000 = vpop.xlane.xlu0 %2999
        %v3001 = vadd.f32 %v2961, %v2962
        %3002 = vadd.xlane.f32.xlu0 %v3001
        %v3003 = vpop.xlane.xlu0 %3002
        %v3004 = vadd.f32 %v2963, %v2964
        %3005 = vadd.xlane.f32.xlu0 %v3004
        %v3006 = vpop.xlane.xlu0 %3005
        %v3007 = vadd.f32 %v2965, %v2966
        %3008 = vadd.xlane.f32.xlu0 %v3007
        %v3009 = vpop.xlane.xlu0 %3008
        %v3010 = vadd.f32 %v2967, %v2968
        %3011 = vadd.xlane.f32.xlu0 %v3010
        %v3012 = vpop.xlane.xlu0 %3011
        %v3013 = vadd.f32 %v2969, %v2970
        %3014 = vadd.xlane.f32.xlu0 %v3013
        %v3015 = vpop.xlane.xlu0 %3014
        %v3016 = vadd.f32 %v2971, %v2972
        %3017 = vadd.xlane.f32.xlu0 %v3016
        %v3018 = vpop.xlane.xlu0 %3017
        %v3019 = vadd.f32 %v2973, %v2974
        %3020 = vadd.xlane.f32.xlu0 %v3019
        %v3021 = vpop.xlane.xlu0 %3020
        %v3022 = vadd.f32 %v2975, %v2976
        %3023 = vadd.xlane.f32.xlu0 %v3022
        %v3024 = vpop.xlane.xlu0 %3023
        %s3025 = sld [smem:[#allocation2]]
        %v3026 = vstv %s3025
        %v3027 = vadd.f32 %v2979, %v3026
        %v3028 = vadd.f32 %v2982, %v3026
        %v3029 = vadd.f32 %v2985, %v3026
        %v3030 = vadd.f32 %v2988, %v3026
        %v3031 = vadd.f32 %v2991, %v3026
        %v3032 = vadd.f32 %v2994, %v3026
        %v3033 = vadd.f32 %v2997, %v3026
        %v3034 = vadd.f32 %v3000, %v3026
        %v3035 = vadd.f32 %v3003, %v3026
        %v3036 = vadd.f32 %v3006, %v3026
        %v3037 = vadd.f32 %v3009, %v3026
        %v3038 = vadd.f32 %v3012, %v3026
        %v3039 = vadd.f32 %v3015, %v3026
        %v3040 = vadd.f32 %v3018, %v3026
        %v3041 = vadd.f32 %v3021, %v3026
        %v3042 = vadd.f32 %v3024, %v3026
        %v3043 = vand.u32 2147483647, %v3027
        %v3044 = vand.u32 2147483647, %v3028
        %v3045 = vand.u32 2147483647, %v3029
        %v3046 = vand.u32 2147483647, %v3030
        %v3047 = vand.u32 2147483647, %v3031
        %v3048 = vand.u32 2147483647, %v3032
        %v3049 = vand.u32 2147483647, %v3033
        %v3050 = vand.u32 2147483647, %v3034
        %v3051 = vand.u32 2147483647, %v3035
        %v3052 = vand.u32 2147483647, %v3036
        %v3053 = vand.u32 2147483647, %v3037
        %v3054 = vand.u32 2147483647, %v3038
        %v3055 = vand.u32 2147483647, %v3039
        %v3056 = vand.u32 2147483647, %v3040
        %v3057 = vand.u32 2147483647, %v3041
        %v3058 = vand.u32 2147483647, %v3042
        %v3059 = vsub.f32 0.0, %v3043
        %v3060 = vsub.f32 0.0, %v3044
        %v3061 = vsub.f32 0.0, %v3045
        %v3062 = vsub.f32 0.0, %v3046
        %v3063 = vsub.f32 0.0, %v3047
        %v3064 = vsub.f32 0.0, %v3048
        %v3065 = vsub.f32 0.0, %v3049
        %v3066 = vsub.f32 0.0, %v3050
        %v3067 = vsub.f32 0.0, %v3051
        %v3068 = vsub.f32 0.0, %v3052
        %v3069 = vsub.f32 0.0, %v3053
        %v3070 = vsub.f32 0.0, %v3054
        %v3071 = vsub.f32 0.0, %v3055
        %v3072 = vsub.f32 0.0, %v3056
        %v3073 = vsub.f32 0.0, %v3057
        %v3074 = vsub.f32 0.0, %v3058
        %v3075 = vmul.f32 %v3059, 1.442695
        %v3076 = vpow.pop %v3075
        %v3077 = vmul.f32 %v3060, 1.442695
        %v3078 = vpow.pop %v3077
        %v3079 = vmul.f32 %v3061, 1.442695
        %v3080 = vpow.pop %v3079
        %v3081 = vmul.f32 %v3062, 1.442695
        %v3082 = vpow.pop %v3081
        %v3083 = vmul.f32 %v3063, 1.442695
        %v3084 = vpow.pop %v3083
        %v3085 = vmul.f32 %v3064, 1.442695
        %v3086 = vpow.pop %v3085
        %v3087 = vmul.f32 %v3065, 1.442695
        %v3088 = vpow.pop %v3087
        %v3089 = vmul.f32 %v3066, 1.442695
        %v3090 = vpow.pop %v3089
        %v3091 = vmul.f32 %v3067, 1.442695
        %v3092 = vpow.pop %v3091
        %v3093 = vmul.f32 %v3068, 1.442695
        %v3094 = vpow.pop %v3093
        %v3095 = vmul.f32 %v3069, 1.442695
        %v3096 = vpow.pop %v3095
        %v3097 = vmul.f32 %v3070, 1.442695
        %v3098 = vpow.pop %v3097
        %v3099 = vmul.f32 %v3071, 1.442695
        %v3100 = vpow.pop %v3099
        %v3101 = vmul.f32 %v3072, 1.442695
        %v3102 = vpow.pop %v3101
        %v3103 = vmul.f32 %v3073, 1.442695
        %v3104 = vpow.pop %v3103
        %v3105 = vmul.f32 %v3074, 1.442695
        %v3106 = vpow.pop %v3105
        %vm3107 = vcmp.ge.f32.partialorder %v3027, 0.0
        %vm3108 = vcmp.ge.f32.partialorder %v3028, 0.0
        %vm3109 = vcmp.ge.f32.partialorder %v3029, 0.0
        %vm3110 = vcmp.ge.f32.partialorder %v3030, 0.0
        %vm3111 = vcmp.ge.f32.partialorder %v3031, 0.0
        %vm3112 = vcmp.ge.f32.partialorder %v3032, 0.0
        %vm3113 = vcmp.ge.f32.partialorder %v3033, 0.0
        %vm3114 = vcmp.ge.f32.partialorder %v3034, 0.0
        %vm3115 = vcmp.ge.f32.partialorder %v3035, 0.0
        %vm3116 = vcmp.ge.f32.partialorder %v3036, 0.0
        %vm3117 = vcmp.ge.f32.partialorder %v3037, 0.0
        %vm3118 = vcmp.ge.f32.partialorder %v3038, 0.0
        %vm3119 = vcmp.ge.f32.partialorder %v3039, 0.0
        %vm3120 = vcmp.ge.f32.partialorder %v3040, 0.0
        %vm3121 = vcmp.ge.f32.partialorder %v3041, 0.0
        %vm3122 = vcmp.ge.f32.partialorder %v3042, 0.0
        %v3123 = vadd.f32 %v3076, 1.0
        %v3124 = vadd.f32 %v3078, 1.0
        %v3125 = vadd.f32 %v3080, 1.0
        %v3126 = vadd.f32 %v3082, 1.0
        %v3127 = vadd.f32 %v3084, 1.0
        %v3128 = vadd.f32 %v3086, 1.0
        %v3129 = vadd.f32 %v3088, 1.0
        %v3130 = vadd.f32 %v3090, 1.0
        %v3131 = vadd.f32 %v3092, 1.0
        %v3132 = vadd.f32 %v3094, 1.0
        %v3133 = vadd.f32 %v3096, 1.0
        %v3134 = vadd.f32 %v3098, 1.0
        %v3135 = vadd.f32 %v3100, 1.0
        %v3136 = vadd.f32 %v3102, 1.0
        %v3137 = vadd.f32 %v3104, 1.0
        %v3138 = vadd.f32 %v3106, 1.0
        %v3139 = vrcp.pop %v3123
        %v3140 = vmul.f32 1.0, %v3139
        %v3141 = vrcp.pop %v3124
        %v3142 = vmul.f32 1.0, %v3141
        %v3143 = vrcp.pop %v3125
        %v3144 = vmul.f32 1.0, %v3143
        %v3145 = vrcp.pop %v3126
        %v3146 = vmul.f32 1.0, %v3145
        %v3147 = vrcp.pop %v3127
        %v3148 = vmul.f32 1.0, %v3147
        %v3149 = vrcp.pop %v3128
        %v3150 = vmul.f32 1.0, %v3149
        %v3151 = vrcp.pop %v3129
        %v3152 = vmul.f32 1.0, %v3151
        %v3153 = vrcp.pop %v3130
        %v3154 = vmul.f32 1.0, %v3153
        %v3155 = vrcp.pop %v3131
        %v3156 = vmul.f32 1.0, %v3155
        %v3157 = vrcp.pop %v3132
        %v3158 = vmul.f32 1.0, %v3157
        %v3159 = vrcp.pop %v3133
        %v3160 = vmul.f32 1.0, %v3159
        %v3161 = vrcp.pop %v3134
        %v3162 = vmul.f32 1.0, %v3161
        %v3163 = vrcp.pop %v3135
        %v3164 = vmul.f32 1.0, %v3163
        %v3165 = vrcp.pop %v3136
        %v3166 = vmul.f32 1.0, %v3165
        %v3167 = vrcp.pop %v3137
        %v3168 = vmul.f32 1.0, %v3167
        %v3169 = vrcp.pop %v3138
        %v3170 = vmul.f32 1.0, %v3169
        %v3171 = vmul.f32 %v3076, %v3139
        %v3172 = vmul.f32 %v3078, %v3141
        %v3173 = vmul.f32 %v3080, %v3143
        %v3174 = vmul.f32 %v3082, %v3145
        %v3175 = vmul.f32 %v3084, %v3147
        %v3176 = vmul.f32 %v3086, %v3149
        %v3177 = vmul.f32 %v3088, %v3151
        %v3178 = vmul.f32 %v3090, %v3153
        %v3179 = vmul.f32 %v3092, %v3155
        %v3180 = vmul.f32 %v3094, %v3157
        %v3181 = vmul.f32 %v3096, %v3159
        %v3182 = vmul.f32 %v3098, %v3161
        %v3183 = vmul.f32 %v3100, %v3163
        %v3184 = vmul.f32 %v3102, %v3165
        %v3185 = vmul.f32 %v3104, %v3167
        %v3186 = vmul.f32 %v3106, %v3169
        %v3187 = vsel %vm3107, %v3140, %v3171
        %v3188 = vsel %vm3108, %v3142, %v3172
        %v3189 = vsel %vm3109, %v3144, %v3173
        %v3190 = vsel %vm3110, %v3146, %v3174
        %v3191 = vsel %vm3111, %v3148, %v3175
        %v3192 = vsel %vm3112, %v3150, %v3176
        %v3193 = vsel %vm3113, %v3152, %v3177
        %v3194 = vsel %vm3114, %v3154, %v3178
        %v3195 = vsel %vm3115, %v3156, %v3179
        %v3196 = vsel %vm3116, %v3158, %v3180
        %v3197 = vsel %vm3117, %v3160, %v3181
        %v3198 = vsel %vm3118, %v3162, %v3182
        %v3199 = vsel %vm3119, %v3164, %v3183
        %v3200 = vsel %vm3120, %v3166, %v3184
        %v3201 = vsel %vm3121, %v3168, %v3185
        %v3202 = vsel %vm3122, %v3170, %v3186
        %vm3203 = vcmask 7168
        %3204 = vst.msk [vmem:[%s357] sm:$0xff] %vm3203, %v3187
        %3205 = vst.msk [vmem:[%s357 + $0x8] sm:$0xff] %vm3203, %v3188
        %3206 = vst.msk [vmem:[%s357 + $0x10] sm:$0xff] %vm3203, %v3189
        %3207 = vst.msk [vmem:[%s357 + $0x18] sm:$0xff] %vm3203, %v3190
        %3208 = vst.msk [vmem:[%s357 + $0x20] sm:$0xff] %vm3203, %v3191
        %3209 = vst.msk [vmem:[%s357 + $0x28] sm:$0xff] %vm3203, %v3192
        %3210 = vst.msk [vmem:[%s357 + $0x30] sm:$0xff] %vm3203, %v3193
        %3211 = vst.msk [vmem:[%s357 + $0x38] sm:$0xff] %vm3203, %v3194
        %3212 = vst.msk [vmem:[%s357 + $0x40] sm:$0xff] %vm3203, %v3195
        %3213 = vst.msk [vmem:[%s357 + $0x48] sm:$0xff] %vm3203, %v3196
        %3214 = vst.msk [vmem:[%s357 + $0x50] sm:$0xff] %vm3203, %v3197
        %3215 = vst.msk [vmem:[%s357 + $0x58] sm:$0xff] %vm3203, %v3198
        %3216 = vst.msk [vmem:[%s357 + $0x60] sm:$0xff] %vm3203, %v3199
        %3217 = vst.msk [vmem:[%s357 + $0x68] sm:$0xff] %vm3203, %v3200
        %3218 = vst.msk [vmem:[%s357 + $0x70] sm:$0xff] %vm3203, %v3201
        %3219 = vst.msk [vmem:[%s357 + $0x78] sm:$0xff] %vm3203, %v3202
        %s3220 = smul.u32 16, %s25
        %p3221 = scmp.lt.s32.totalorder %s3220, 31
        %s3222 = scalar_select %p3221, %s3220, 31
        %s3223 = smul.addr %s3222, 8
        %s3224 = scalar_lea.vmem %s7, %s3223
        // Predicated region
        $region69: #{tpu_custom_call.1} parent=47 // pred_check
          %p3225 = pneg %p195
        $region70: #{tpu_custom_call.1} parent=47 // pred_check_branch
          %3227 = sbr.rel (%p3225) target = $region72
        $region71: #{tpu_custom_call.1} parent=47 // pred_region
          %s3228 = smul.u32 16, %s25
        $region72: #{tpu_custom_call.1} parent=47 // pred_fallthru
          _
      $region48: #{tpu_custom_call.1} parent=5 // pred_fallthru
        _
      %p3229 = scmp.le.s32.totalorder 2, %s20
      // Predicated region
      $region73: #{tpu_custom_call.1} parent=5 // pred_check
        %p3230 = pneg %p3229
      $region74: #{tpu_custom_call.1} parent=5 // pred_check_branch
        %3232 = sbr.rel (%p3230) target = $region76
      $region75: #{tpu_custom_call.1} parent=5 // pred_region
        %s3233 = ssub.s32 %s20, 2
        // Predicated region
        $region77: #{tpu_custom_call.1} parent=75 // pred_check
          %p3234 = pneg %p201
        $region78: #{tpu_custom_call.1} parent=75 // pred_check_branch
          %3236 = sbr.rel (%p3234) target = $region80
        $region79: #{tpu_custom_call.1} parent=75 // pred_region
          %s3237 = smul.u32 16, %s26
          %p3238 = scmp.lt.s32.totalorder %s3237, 31
          %s3239 = scalar_select %p3238, %s3237, 31
          %s3240 = smul.addr %s3239, 8
          %s3241 = scalar_lea.vmem %s7, %s3240
        $region80: #{tpu_custom_call.1} parent=75 // pred_fallthru
          _
      $region76: #{tpu_custom_call.1} parent=5 // pred_fallthru
        _
    $region6: #{tpu_custom_call.1} parent=1 // loop_footer
      %s24 = sadd.s32 1, %s20
    $region7: #{tpu_custom_call.1} parent=1 // loop_footer_branch
      %19 = sbr.rel target = $region3
    $region8: #{tpu_custom_call.1} parent=1 // loop_exit
      _
    %3242 = vsyncpa [#allocation4], 1
    %s3243 = scalar_lea.sflag [#allocation4], 1
    %3244 = vsyncpa %s3243, 1
    %3245 = vsyncpa [#allocation8], 1
    %3246 = vsyncpa [#allocation11], 1
    %3247 = vsyncpa [#allocation5], 1
    %s3248 = scalar_lea.sflag [#allocation5], 1
    %3249 = vsyncpa %s3248, 1

</llo_original>
